<compile_context>
chip_gen: v7x
topology: tpu7x:2x2x1
jax: 0.10.0
libtpu: 0.0.40
codegen_flags: <defaults>
</compile_context>

<pallas_src>
import functools

import numpy as np
import jax
import jax.numpy as jnp
from jax.experimental import pallas as pl
from jax.experimental.pallas import tpu as pltpu

_PAD = 4  # max dilation -> one zero ring that covers all three convs


# ----------------------------- Pallas kernel -------------------------------

def _dblock_kernel(x_ref, mask_ref, w1_ref, b1_ref, w2_ref, b2_ref,
                   w3_ref, b3_ref, o_ref, buf_ref, taps_ref,
                   *, C, H, W, Wp, L, M):
    P = _PAD

    # Zero the scratch (margins + padding ring must read as zeros). A few KB
    # of vst per grid step; negligible.
    buf_ref[...] = jnp.zeros(buf_ref.shape, buf_ref.dtype)

    # Embed the UNPADDED image into the flat padded buffer (static slices:
    # valid pixels live at rows/cols [P, P+H) x [P, P+W) of the (Hp, Wp) grid).
    for r in range(H):
        dst = M + (P + r) * Wp + P
        buf_ref[:, dst:dst + W] = x_ref[0, :, r * W:(r + 1) * W]

    mask = mask_ref[...]  # (1, L): 1.0 at valid pixels, 0.0 on the ring

    def conv_relu(w_ref, b_ref, dil, apply_mask):
        # Gather the 9 dilated taps as static lane-shifted slices of the flat
        # buffer and stack them along the channel (sublane) axis -> (9*C, L).
        for t in range(9):
            ky, kx = t // 3, t % 3
            off = (ky - 1) * dil * Wp + (kx - 1) * dil
            taps_ref[t * C:(t + 1) * C, :] = buf_ref[:, M + off:M + off + L]
        # Single MXU contraction per conv: (C, 9C) @ (9C, L) -> (C, L).
        acc = jnp.dot(w_ref[...], taps_ref[...],
                      preferred_element_type=jnp.float32)
        act = jnp.maximum(acc + b_ref[...], 0.0)
        if apply_mask:
            # Zero the padding ring so the next conv sees correct zero padding.
            act = act * mask
        return act

    d1 = conv_relu(w1_ref, b1_ref, 1, True)
    buf_ref[:, M:M + L] = d1
    out_acc = d1

    d2 = conv_relu(w2_ref, b2_ref, 2, True)
    buf_ref[:, M:M + L] = d2
    out_acc = out_acc + d2

    # d3's ring values are never re-used -> no mask needed.
    out_acc = out_acc + conv_relu(w3_ref, b3_ref, 4, False)

    # Extract the valid HxW region into the lane-dense (C, H*W) output block.
    for r in range(H):
        src = (P + r) * Wp + P
        o_ref[0, :, r * W:(r + 1) * W] = out_acc[:, src:src + W].astype(o_ref.dtype)


# ------------------------------ JAX wrapper ---------------------------------

def _lane_dense_wp(hp, wp_min):
    """Smallest padded width >= wp_min with hp*wp a multiple of 128 lanes."""
    wp = wp_min
    while (hp * wp) % 128 != 0:
        wp += 1
    return wp


def _prep_weight(w):
    """Torch OIHW (Cout, Cin, 3, 3) -> (Cout, 9*Cin); col = (ky*3+kx)*Cin+ci."""
    cout, cin = w.shape[0], w.shape[1]
    return jnp.transpose(w, (0, 2, 3, 1)).reshape(cout, 9 * cin).astype(jnp.float32)


@jax.jit
def dblock_forward(x_nchw, w1, b1, w2, b2, w3, b3):
    """Pallas implementation of Dblock.forward. x_nchw: (B, C, H, W)."""
    B, C, H, W = x_nchw.shape
    P = _PAD
    Hp = H + 2 * P
    Wp = _lane_dense_wp(Hp, W + 2 * P)      # lane-dense flat length
    L = Hp * Wp
    M = P * Wp + P                          # flat margin for the shift trick
    HW = H * W

    # Free reshape only: no pad, no extra HBM pass.
    x_flat = x_nchw.reshape(B, C, HW).astype(jnp.float32)

    # Valid-pixel mask over flat padded positions (compile-time constant).
    mask_np = np.zeros((Hp, Wp), np.float32)
    mask_np[P:P + H, P:P + W] = 1.0
    mask = jnp.asarray(mask_np.reshape(1, L))

    w1k, w2k, w3k = _prep_weight(w1), _prep_weight(w2), _prep_weight(w3)
    b1k = b1.reshape(C, 1).astype(jnp.float32)
    b2k = b2.reshape(C, 1).astype(jnp.float32)
    b3k = b3.reshape(C, 1).astype(jnp.float32)

    kernel = functools.partial(_dblock_kernel, C=C, H=H, W=W, Wp=Wp, L=L, M=M)

    rep2 = lambda b: (0, 0)

    out_flat = pl.pallas_call(
        kernel,
        out_shape=jax.ShapeDtypeStruct((B, C, HW), jnp.float32),
        grid=(B,),
        in_specs=[
            pl.BlockSpec((1, C, HW), lambda b: (b, 0, 0)),   # unpadded input
            pl.BlockSpec((1, L), rep2),                      # valid-pixel mask
            pl.BlockSpec((C, 9 * C), rep2), pl.BlockSpec((C, 1), rep2),
            pl.BlockSpec((C, 9 * C), rep2), pl.BlockSpec((C, 1), rep2),
            pl.BlockSpec((C, 9 * C), rep2), pl.BlockSpec((C, 1), rep2),
        ],
        out_specs=pl.BlockSpec((1, C, HW), lambda b: (b, 0, 0)),
        scratch_shapes=[
            pltpu.VMEM((C, L + 2 * M), jnp.float32),   # padded flat image
            pltpu.VMEM((9 * C, L), jnp.float32),       # stacked taps for MXU
        ],
        compiler_params=pltpu.CompilerParams(
            dimension_semantics=("parallel",)),
    )(x_flat, mask, w1k, b1k, w2k, b2k, w3k, b3k)

    # Free reshape back to NCHW.
    return out_flat.reshape(B, C, H, W)


# ------------------------- pure-JAX reference -------------------------------

def _ref_conv(x_nchw, w, b, dilation):
    y = jax.lax.conv_general_dilated(
        x_nchw, w, window_strides=(1, 1),
        padding=((dilation, dilation), (dilation, dilation)),
        rhs_dilation=(dilation, dilation),
        dimension_numbers=("NCHW", "OIHW", "NCHW"))
    return jnp.maximum(y + b.reshape(1, -1, 1, 1), 0.0)


def dblock_reference(x_nchw, w1, b1, w2, b2, w3, b3):
    d1 = _ref_conv(x_nchw, w1, b1, 1)
    d2 = _ref_conv(d1, w2, b2, 2)
    d3 = _ref_conv(d2, w3, b3, 4)
    return d1 + d2 + d3


# --------------------------------- main --------------------------------------

if __name__ == "__main__":
    B, C, H, W = 2, 4, 16, 16

    key = jax.random.PRNGKey(0)
    kx, k1, k2, k3 = jax.random.split(key, 4)

    x = jax.random.normal(kx, (B, C, H, W), dtype=jnp.float32)

    # Deterministic synthetic weights (PyTorch Conv2d OIHW layout); biases are
    # zeroed in Dblock.__init__, so zeros here as well.
    w1 = 0.1 * jax.random.normal(k1, (C, C, 3, 3), dtype=jnp.float32)
    w2 = 0.1 * jax.random.normal(k2, (C, C, 3, 3), dtype=jnp.float32)
    w3 = 0.1 * jax.random.normal(k3, (C, C, 3, 3), dtype=jnp.float32)
    b1 = jnp.zeros((C,), jnp.float32)
    b2 = jnp.zeros((C,), jnp.float32)
    b3 = jnp.zeros((C,), jnp.float32)

    out = jax.block_until_ready(dblock_forward(x, w1, b1, w2, b2, w3, b3))
    assert out.shape == (B, C, H, W), out.shape

    ref = jax.block_until_ready(dblock_reference(x, w1, b1, w2, b2, w3, b3))
    assert jnp.allclose(out, ref, rtol=1e-3, atol=1e-3), float(
        jnp.max(jnp.abs(out - ref)))

    print("KERNEL_OK")
</pallas_src>

<mosaic_0001>
module attributes {stable_mosaic.version = 11 : i64} {
  func.func @_dblock_kernel(%arg0: i32, %arg1: memref<1x4x256xf32, #tpu.memory_space<vmem>>, %arg2: memref<1x768xf32, #tpu.memory_space<vmem>>, %arg3: memref<4x36xf32, #tpu.memory_space<vmem>>, %arg4: memref<4x1xf32, #tpu.memory_space<vmem>>, %arg5: memref<4x36xf32, #tpu.memory_space<vmem>>, %arg6: memref<4x1xf32, #tpu.memory_space<vmem>>, %arg7: memref<4x36xf32, #tpu.memory_space<vmem>>, %arg8: memref<4x1xf32, #tpu.memory_space<vmem>>, %arg9: memref<1x4x256xf32, #tpu.memory_space<vmem>>, %arg10: memref<4x1032xf32, #tpu.memory_space<vmem>>, %arg11: memref<36x768xf32, #tpu.memory_space<vmem>>) attributes {dimension_semantics = [#tpu.dimension_semantics<parallel>], iteration_bounds = array<i64: 2>, scalar_prefetch = 0 : i64, scratch_operands = 2 : i64, tpu.core_type = #tpu.core_type<tc>, window_params = [{transform_indices = @transform_0, window_bounds = array<i64: 1, 4, 256>}, {pipeline_mode = #tpu.pipeline_mode<synchronous>, transform_indices = @transform_1, window_bounds = array<i64: 1, 768>}, {pipeline_mode = #tpu.pipeline_mode<synchronous>, transform_indices = @transform_2, window_bounds = array<i64: 4, 36>}, {pipeline_mode = #tpu.pipeline_mode<synchronous>, transform_indices = @transform_3, window_bounds = array<i64: 4, 1>}, {pipeline_mode = #tpu.pipeline_mode<synchronous>, transform_indices = @transform_4, window_bounds = array<i64: 4, 36>}, {pipeline_mode = #tpu.pipeline_mode<synchronous>, transform_indices = @transform_5, window_bounds = array<i64: 4, 1>}, {pipeline_mode = #tpu.pipeline_mode<synchronous>, transform_indices = @transform_6, window_bounds = array<i64: 4, 36>}, {pipeline_mode = #tpu.pipeline_mode<synchronous>, transform_indices = @transform_7, window_bounds = array<i64: 4, 1>}, {transform_indices = @transform_8, window_bounds = array<i64: 1, 4, 256>}]} {
    %cst = arith.constant 0.000000e+00 : f32
    %0 = vector.broadcast %cst : f32 to vector<4x1032xf32>
    %c0 = arith.constant 0 : index
    %c0_0 = arith.constant 0 : index
    %1 = vector.load %arg10[%c0, %c0_0] : memref<4x1032xf32, #tpu.memory_space<vmem>>, vector<4x1032xf32>
    tpu.vector_store %arg10[%c0, %c0_0], %0 {strides = array<i32>} : memref<4x1032xf32, #tpu.memory_space<vmem>>, vector<4x1032xf32>,
    %c0_1 = arith.constant 0 : index
    %c0_2 = arith.constant 0 : index
    %c0_3 = arith.constant 0 : index
    %2 = vector.load %arg1[%c0_1, %c0_2, %c0_3] : memref<1x4x256xf32, #tpu.memory_space<vmem>>, vector<1x4x16xf32>
    %3 = vector.shape_cast %2 : vector<1x4x16xf32> to vector<4x16xf32>
    %c0_4 = arith.constant 0 : index
    %c264 = arith.constant 264 : index
    %4 = vector.load %arg10[%c0_4, %c264] : memref<4x1032xf32, #tpu.memory_space<vmem>>, vector<4x16xf32>
    tpu.vector_store %arg10[%c0_4, %c264], %3 {strides = array<i32>} : memref<4x1032xf32, #tpu.memory_space<vmem>>, vector<4x16xf32>,
    %c0_5 = arith.constant 0 : index
    %c0_6 = arith.constant 0 : index
    %c16 = arith.constant 16 : index
    %5 = vector.load %arg1[%c0_5, %c0_6, %c16] : memref<1x4x256xf32, #tpu.memory_space<vmem>>, vector<1x4x16xf32>
    %6 = vector.shape_cast %5 : vector<1x4x16xf32> to vector<4x16xf32>
    %c0_7 = arith.constant 0 : index
    %c296 = arith.constant 296 : index
    %7 = vector.load %arg10[%c0_7, %c296] : memref<4x1032xf32, #tpu.memory_space<vmem>>, vector<4x16xf32>
    tpu.vector_store %arg10[%c0_7, %c296], %6 {strides = array<i32>} : memref<4x1032xf32, #tpu.memory_space<vmem>>, vector<4x16xf32>,
    %c0_8 = arith.constant 0 : index
    %c0_9 = arith.constant 0 : index
    %c32 = arith.constant 32 : index
    %8 = vector.load %arg1[%c0_8, %c0_9, %c32] : memref<1x4x256xf32, #tpu.memory_space<vmem>>, vector<1x4x16xf32>
    %9 = vector.shape_cast %8 : vector<1x4x16xf32> to vector<4x16xf32>
    %c0_10 = arith.constant 0 : index
    %c328 = arith.constant 328 : index
    %10 = vector.load %arg10[%c0_10, %c328] : memref<4x1032xf32, #tpu.memory_space<vmem>>, vector<4x16xf32>
    tpu.vector_store %arg10[%c0_10, %c328], %9 {strides = array<i32>} : memref<4x1032xf32, #tpu.memory_space<vmem>>, vector<4x16xf32>,
    %c0_11 = arith.constant 0 : index
    %c0_12 = arith.constant 0 : index
    %c48 = arith.constant 48 : index
    %11 = vector.load %arg1[%c0_11, %c0_12, %c48] : memref<1x4x256xf32, #tpu.memory_space<vmem>>, vector<1x4x16xf32>
    %12 = vector.shape_cast %11 : vector<1x4x16xf32> to vector<4x16xf32>
    %c0_13 = arith.constant 0 : index
    %c360 = arith.constant 360 : index
    %13 = vector.load %arg10[%c0_13, %c360] : memref<4x1032xf32, #tpu.memory_space<vmem>>, vector<4x16xf32>
    tpu.vector_store %arg10[%c0_13, %c360], %12 {strides = array<i32>} : memref<4x1032xf32, #tpu.memory_space<vmem>>, vector<4x16xf32>,
    %c0_14 = arith.constant 0 : index
    %c0_15 = arith.constant 0 : index
    %c64 = arith.constant 64 : index
    %14 = vector.load %arg1[%c0_14, %c0_15, %c64] : memref<1x4x256xf32, #tpu.memory_space<vmem>>, vector<1x4x16xf32>
    %15 = vector.shape_cast %14 : vector<1x4x16xf32> to vector<4x16xf32>
    %c0_16 = arith.constant 0 : index
    %c392 = arith.constant 392 : index
    %16 = vector.load %arg10[%c0_16, %c392] : memref<4x1032xf32, #tpu.memory_space<vmem>>, vector<4x16xf32>
    tpu.vector_store %arg10[%c0_16, %c392], %15 {strides = array<i32>} : memref<4x1032xf32, #tpu.memory_space<vmem>>, vector<4x16xf32>,
    %c0_17 = arith.constant 0 : index
    %c0_18 = arith.constant 0 : index
    %c80 = arith.constant 80 : index
    %17 = vector.load %arg1[%c0_17, %c0_18, %c80] : memref<1x4x256xf32, #tpu.memory_space<vmem>>, vector<1x4x16xf32>
    %18 = vector.shape_cast %17 : vector<1x4x16xf32> to vector<4x16xf32>
    %c0_19 = arith.constant 0 : index
    %c424 = arith.constant 424 : index
    %19 = vector.load %arg10[%c0_19, %c424] : memref<4x1032xf32, #tpu.memory_space<vmem>>, vector<4x16xf32>
    tpu.vector_store %arg10[%c0_19, %c424], %18 {strides = array<i32>} : memref<4x1032xf32, #tpu.memory_space<vmem>>, vector<4x16xf32>,
    %c0_20 = arith.constant 0 : index
    %c0_21 = arith.constant 0 : index
    %c96 = arith.constant 96 : index
    %20 = vector.load %arg1[%c0_20, %c0_21, %c96] : memref<1x4x256xf32, #tpu.memory_space<vmem>>, vector<1x4x16xf32>
    %21 = vector.shape_cast %20 : vector<1x4x16xf32> to vector<4x16xf32>
    %c0_22 = arith.constant 0 : index
    %c456 = arith.constant 456 : index
    %22 = vector.load %arg10[%c0_22, %c456] : memref<4x1032xf32, #tpu.memory_space<vmem>>, vector<4x16xf32>
    tpu.vector_store %arg10[%c0_22, %c456], %21 {strides = array<i32>} : memref<4x1032xf32, #tpu.memory_space<vmem>>, vector<4x16xf32>,
    %c0_23 = arith.constant 0 : index
    %c0_24 = arith.constant 0 : index
    %c112 = arith.constant 112 : index
    %23 = vector.load %arg1[%c0_23, %c0_24, %c112] : memref<1x4x256xf32, #tpu.memory_space<vmem>>, vector<1x4x16xf32>
    %24 = vector.shape_cast %23 : vector<1x4x16xf32> to vector<4x16xf32>
    %c0_25 = arith.constant 0 : index
    %c488 = arith.constant 488 : index
    %25 = vector.load %arg10[%c0_25, %c488] : memref<4x1032xf32, #tpu.memory_space<vmem>>, vector<4x16xf32>
    tpu.vector_store %arg10[%c0_25, %c488], %24 {strides = array<i32>} : memref<4x1032xf32, #tpu.memory_space<vmem>>, vector<4x16xf32>,
    %c0_26 = arith.constant 0 : index
    %c0_27 = arith.constant 0 : index
    %c128 = arith.constant 128 : index
    %26 = vector.load %arg1[%c0_26, %c0_27, %c128] : memref<1x4x256xf32, #tpu.memory_space<vmem>>, vector<1x4x16xf32>
    %27 = vector.shape_cast %26 : vector<1x4x16xf32> to vector<4x16xf32>
    %c0_28 = arith.constant 0 : index
    %c520 = arith.constant 520 : index
    %28 = vector.load %arg10[%c0_28, %c520] : memref<4x1032xf32, #tpu.memory_space<vmem>>, vector<4x16xf32>
    tpu.vector_store %arg10[%c0_28, %c520], %27 {strides = array<i32>} : memref<4x1032xf32, #tpu.memory_space<vmem>>, vector<4x16xf32>,
    %c0_29 = arith.constant 0 : index
    %c0_30 = arith.constant 0 : index
    %c144 = arith.constant 144 : index
    %29 = vector.load %arg1[%c0_29, %c0_30, %c144] : memref<1x4x256xf32, #tpu.memory_space<vmem>>, vector<1x4x16xf32>
    %30 = vector.shape_cast %29 : vector<1x4x16xf32> to vector<4x16xf32>
    %c0_31 = arith.constant 0 : index
    %c552 = arith.constant 552 : index
    %31 = vector.load %arg10[%c0_31, %c552] : memref<4x1032xf32, #tpu.memory_space<vmem>>, vector<4x16xf32>
    tpu.vector_store %arg10[%c0_31, %c552], %30 {strides = array<i32>} : memref<4x1032xf32, #tpu.memory_space<vmem>>, vector<4x16xf32>,
    %c0_32 = arith.constant 0 : index
    %c0_33 = arith.constant 0 : index
    %c160 = arith.constant 160 : index
    %32 = vector.load %arg1[%c0_32, %c0_33, %c160] : memref<1x4x256xf32, #tpu.memory_space<vmem>>, vector<1x4x16xf32>
    %33 = vector.shape_cast %32 : vector<1x4x16xf32> to vector<4x16xf32>
    %c0_34 = arith.constant 0 : index
    %c584 = arith.constant 584 : index
    %34 = vector.load %arg10[%c0_34, %c584] : memref<4x1032xf32, #tpu.memory_space<vmem>>, vector<4x16xf32>
    tpu.vector_store %arg10[%c0_34, %c584], %33 {strides = array<i32>} : memref<4x1032xf32, #tpu.memory_space<vmem>>, vector<4x16xf32>,
    %c0_35 = arith.constant 0 : index
    %c0_36 = arith.constant 0 : index
    %c176 = arith.constant 176 : index
    %35 = vector.load %arg1[%c0_35, %c0_36, %c176] : memref<1x4x256xf32, #tpu.memory_space<vmem>>, vector<1x4x16xf32>
    %36 = vector.shape_cast %35 : vector<1x4x16xf32> to vector<4x16xf32>
    %c0_37 = arith.constant 0 : index
    %c616 = arith.constant 616 : index
    %37 = vector.load %arg10[%c0_37, %c616] : memref<4x1032xf32, #tpu.memory_space<vmem>>, vector<4x16xf32>
    tpu.vector_store %arg10[%c0_37, %c616], %36 {strides = array<i32>} : memref<4x1032xf32, #tpu.memory_space<vmem>>, vector<4x16xf32>,
    %c0_38 = arith.constant 0 : index
    %c0_39 = arith.constant 0 : index
    %c192 = arith.constant 192 : index
    %38 = vector.load %arg1[%c0_38, %c0_39, %c192] : memref<1x4x256xf32, #tpu.memory_space<vmem>>, vector<1x4x16xf32>
    %39 = vector.shape_cast %38 : vector<1x4x16xf32> to vector<4x16xf32>
    %c0_40 = arith.constant 0 : index
    %c648 = arith.constant 648 : index
    %40 = vector.load %arg10[%c0_40, %c648] : memref<4x1032xf32, #tpu.memory_space<vmem>>, vector<4x16xf32>
    tpu.vector_store %arg10[%c0_40, %c648], %39 {strides = array<i32>} : memref<4x1032xf32, #tpu.memory_space<vmem>>, vector<4x16xf32>,
    %c0_41 = arith.constant 0 : index
    %c0_42 = arith.constant 0 : index
    %c208 = arith.constant 208 : index
    %41 = vector.load %arg1[%c0_41, %c0_42, %c208] : memref<1x4x256xf32, #tpu.memory_space<vmem>>, vector<1x4x16xf32>
    %42 = vector.shape_cast %41 : vector<1x4x16xf32> to vector<4x16xf32>
    %c0_43 = arith.constant 0 : index
    %c680 = arith.constant 680 : index
    %43 = vector.load %arg10[%c0_43, %c680] : memref<4x1032xf32, #tpu.memory_space<vmem>>, vector<4x16xf32>
    tpu.vector_store %arg10[%c0_43, %c680], %42 {strides = array<i32>} : memref<4x1032xf32, #tpu.memory_space<vmem>>, vector<4x16xf32>,
    %c0_44 = arith.constant 0 : index
    %c0_45 = arith.constant 0 : index
    %c224 = arith.constant 224 : index
    %44 = vector.load %arg1[%c0_44, %c0_45, %c224] : memref<1x4x256xf32, #tpu.memory_space<vmem>>, vector<1x4x16xf32>
    %45 = vector.shape_cast %44 : vector<1x4x16xf32> to vector<4x16xf32>
    %c0_46 = arith.constant 0 : index
    %c712 = arith.constant 712 : index
    %46 = vector.load %arg10[%c0_46, %c712] : memref<4x1032xf32, #tpu.memory_space<vmem>>, vector<4x16xf32>
    tpu.vector_store %arg10[%c0_46, %c712], %45 {strides = array<i32>} : memref<4x1032xf32, #tpu.memory_space<vmem>>, vector<4x16xf32>,
    %c0_47 = arith.constant 0 : index
    %c0_48 = arith.constant 0 : index
    %c240 = arith.constant 240 : index
    %47 = vector.load %arg1[%c0_47, %c0_48, %c240] : memref<1x4x256xf32, #tpu.memory_space<vmem>>, vector<1x4x16xf32>
    %48 = vector.shape_cast %47 : vector<1x4x16xf32> to vector<4x16xf32>
    %c0_49 = arith.constant 0 : index
    %c744 = arith.constant 744 : index
    %49 = vector.load %arg10[%c0_49, %c744] : memref<4x1032xf32, #tpu.memory_space<vmem>>, vector<4x16xf32>
    tpu.vector_store %arg10[%c0_49, %c744], %48 {strides = array<i32>} : memref<4x1032xf32, #tpu.memory_space<vmem>>, vector<4x16xf32>,
    %c0_50 = arith.constant 0 : index
    %c0_51 = arith.constant 0 : index
    %50 = vector.load %arg2[%c0_50, %c0_51] : memref<1x768xf32, #tpu.memory_space<vmem>>, vector<1x768xf32>
    %c0_52 = arith.constant 0 : index
    %c99 = arith.constant 99 : index
    %51 = vector.load %arg10[%c0_52, %c99] : memref<4x1032xf32, #tpu.memory_space<vmem>>, vector<4x768xf32>
    %c0_53 = arith.constant 0 : index
    %c0_54 = arith.constant 0 : index
    %52 = vector.load %arg11[%c0_53, %c0_54] : memref<36x768xf32, #tpu.memory_space<vmem>>, vector<4x768xf32>
    tpu.vector_store %arg11[%c0_53, %c0_54], %51 {strides = array<i32>} : memref<36x768xf32, #tpu.memory_space<vmem>>, vector<4x768xf32>,
    %c0_55 = arith.constant 0 : index
    %c100 = arith.constant 100 : index
    %53 = vector.load %arg10[%c0_55, %c100] : memref<4x1032xf32, #tpu.memory_space<vmem>>, vector<4x768xf32>
    %c4 = arith.constant 4 : index
    %c0_56 = arith.constant 0 : index
    %54 = vector.load %arg11[%c4, %c0_56] : memref<36x768xf32, #tpu.memory_space<vmem>>, vector<4x768xf32>
    tpu.vector_store %arg11[%c4, %c0_56], %53 {strides = array<i32>} : memref<36x768xf32, #tpu.memory_space<vmem>>, vector<4x768xf32>,
    %c0_57 = arith.constant 0 : index
    %c101 = arith.constant 101 : index
    %55 = vector.load %arg10[%c0_57, %c101] : memref<4x1032xf32, #tpu.memory_space<vmem>>, vector<4x768xf32>
    %c8 = arith.constant 8 : index
    %c0_58 = arith.constant 0 : index
    %56 = vector.load %arg11[%c8, %c0_58] : memref<36x768xf32, #tpu.memory_space<vmem>>, vector<4x768xf32>
    tpu.vector_store %arg11[%c8, %c0_58], %55 {strides = array<i32>} : memref<36x768xf32, #tpu.memory_space<vmem>>, vector<4x768xf32>,
    %c0_59 = arith.constant 0 : index
    %c131 = arith.constant 131 : index
    %57 = vector.load %arg10[%c0_59, %c131] : memref<4x1032xf32, #tpu.memory_space<vmem>>, vector<4x768xf32>
    %c12 = arith.constant 12 : index
    %c0_60 = arith.constant 0 : index
    %58 = vector.load %arg11[%c12, %c0_60] : memref<36x768xf32, #tpu.memory_space<vmem>>, vector<4x768xf32>
    tpu.vector_store %arg11[%c12, %c0_60], %57 {strides = array<i32>} : memref<36x768xf32, #tpu.memory_space<vmem>>, vector<4x768xf32>,
    %c0_61 = arith.constant 0 : index
    %c132 = arith.constant 132 : index
    %59 = vector.load %arg10[%c0_61, %c132] : memref<4x1032xf32, #tpu.memory_space<vmem>>, vector<4x768xf32>
    %c16_62 = arith.constant 16 : index
    %c0_63 = arith.constant 0 : index
    %60 = vector.load %arg11[%c16_62, %c0_63] : memref<36x768xf32, #tpu.memory_space<vmem>>, vector<4x768xf32>
    tpu.vector_store %arg11[%c16_62, %c0_63], %59 {strides = array<i32>} : memref<36x768xf32, #tpu.memory_space<vmem>>, vector<4x768xf32>,
    %c0_64 = arith.constant 0 : index
    %c133 = arith.constant 133 : index
    %61 = vector.load %arg10[%c0_64, %c133] : memref<4x1032xf32, #tpu.memory_space<vmem>>, vector<4x768xf32>
    %c20 = arith.constant 20 : index
    %c0_65 = arith.constant 0 : index
    %62 = vector.load %arg11[%c20, %c0_65] : memref<36x768xf32, #tpu.memory_space<vmem>>, vector<4x768xf32>
    tpu.vector_store %arg11[%c20, %c0_65], %61 {strides = array<i32>} : memref<36x768xf32, #tpu.memory_space<vmem>>, vector<4x768xf32>,
    %c0_66 = arith.constant 0 : index
    %c163 = arith.constant 163 : index
    %63 = vector.load %arg10[%c0_66, %c163] : memref<4x1032xf32, #tpu.memory_space<vmem>>, vector<4x768xf32>
    %c24 = arith.constant 24 : index
    %c0_67 = arith.constant 0 : index
    %64 = vector.load %arg11[%c24, %c0_67] : memref<36x768xf32, #tpu.memory_space<vmem>>, vector<4x768xf32>
    tpu.vector_store %arg11[%c24, %c0_67], %63 {strides = array<i32>} : memref<36x768xf32, #tpu.memory_space<vmem>>, vector<4x768xf32>,
    %c0_68 = arith.constant 0 : index
    %c164 = arith.constant 164 : index
    %65 = vector.load %arg10[%c0_68, %c164] : memref<4x1032xf32, #tpu.memory_space<vmem>>, vector<4x768xf32>
    %c28 = arith.constant 28 : index
    %c0_69 = arith.constant 0 : index
    %66 = vector.load %arg11[%c28, %c0_69] : memref<36x768xf32, #tpu.memory_space<vmem>>, vector<4x768xf32>
    tpu.vector_store %arg11[%c28, %c0_69], %65 {strides = array<i32>} : memref<36x768xf32, #tpu.memory_space<vmem>>, vector<4x768xf32>,
    %c0_70 = arith.constant 0 : index
    %c165 = arith.constant 165 : index
    %67 = vector.load %arg10[%c0_70, %c165] : memref<4x1032xf32, #tpu.memory_space<vmem>>, vector<4x768xf32>
    %c32_71 = arith.constant 32 : index
    %c0_72 = arith.constant 0 : index
    %68 = vector.load %arg11[%c32_71, %c0_72] : memref<36x768xf32, #tpu.memory_space<vmem>>, vector<4x768xf32>
    tpu.vector_store %arg11[%c32_71, %c0_72], %67 {strides = array<i32>} : memref<36x768xf32, #tpu.memory_space<vmem>>, vector<4x768xf32>,
    %c0_73 = arith.constant 0 : index
    %c0_74 = arith.constant 0 : index
    %69 = vector.load %arg3[%c0_73, %c0_74] : memref<4x36xf32, #tpu.memory_space<vmem>>, vector<4x36xf32>
    %c0_75 = arith.constant 0 : index
    %c0_76 = arith.constant 0 : index
    %70 = vector.load %arg11[%c0_75, %c0_76] : memref<36x768xf32, #tpu.memory_space<vmem>>, vector<36x768xf32>
    %cst_77 = arith.constant dense<0.000000e+00> : vector<4x768xf32>
    %71 = tpu.matmul %69, %70, %cst_77 {dimension_numbers = #tpu.dot_dimension_numbers<[1], [0], [0], [1], [0, 0, 1, 1], [], []>} : vector<4x36xf32>, vector<36x768xf32>, vector<4x768xf32> -> vector<4x768xf32>
    %c0_78 = arith.constant 0 : index
    %c0_79 = arith.constant 0 : index
    %72 = vector.load %arg4[%c0_78, %c0_79] : memref<4x1xf32, #tpu.memory_space<vmem>>, vector<4x1xf32>
    %73 = vector.broadcast %72 : vector<4x1xf32> to vector<4x768xf32>
    %74 = arith.addf %71, %73 : vector<4x768xf32>
    %cst_80 = arith.constant 0.000000e+00 : f32
    %75 = vector.broadcast %cst_80 : f32 to vector<4x768xf32>
    %76 = arith.maximumf %74, %75 : vector<4x768xf32>
    %77 = vector.broadcast %50 : vector<1x768xf32> to vector<4x768xf32>
    %78 = arith.mulf %76, %77 : vector<4x768xf32>
    %c0_81 = arith.constant 0 : index
    %c132_82 = arith.constant 132 : index
    %79 = vector.load %arg10[%c0_81, %c132_82] : memref<4x1032xf32, #tpu.memory_space<vmem>>, vector<4x768xf32>
    tpu.vector_store %arg10[%c0_81, %c132_82], %78 {strides = array<i32>} : memref<4x1032xf32, #tpu.memory_space<vmem>>, vector<4x768xf32>,
    %c0_83 = arith.constant 0 : index
    %c66 = arith.constant 66 : index
    %80 = vector.load %arg10[%c0_83, %c66] : memref<4x1032xf32, #tpu.memory_space<vmem>>, vector<4x768xf32>
    %c0_84 = arith.constant 0 : index
    %c0_85 = arith.constant 0 : index
    %81 = vector.load %arg11[%c0_84, %c0_85] : memref<36x768xf32, #tpu.memory_space<vmem>>, vector<4x768xf32>
    tpu.vector_store %arg11[%c0_84, %c0_85], %80 {strides = array<i32>} : memref<36x768xf32, #tpu.memory_space<vmem>>, vector<4x768xf32>,
    %c0_86 = arith.constant 0 : index
    %c68 = arith.constant 68 : index
    %82 = vector.load %arg10[%c0_86, %c68] : memref<4x1032xf32, #tpu.memory_space<vmem>>, vector<4x768xf32>
    %c4_87 = arith.constant 4 : index
    %c0_88 = arith.constant 0 : index
    %83 = vector.load %arg11[%c4_87, %c0_88] : memref<36x768xf32, #tpu.memory_space<vmem>>, vector<4x768xf32>
    tpu.vector_store %arg11[%c4_87, %c0_88], %82 {strides = array<i32>} : memref<36x768xf32, #tpu.memory_space<vmem>>, vector<4x768xf32>,
    %c0_89 = arith.constant 0 : index
    %c70 = arith.constant 70 : index
    %84 = vector.load %arg10[%c0_89, %c70] : memref<4x1032xf32, #tpu.memory_space<vmem>>, vector<4x768xf32>
    %c8_90 = arith.constant 8 : index
    %c0_91 = arith.constant 0 : index
    %85 = vector.load %arg11[%c8_90, %c0_91] : memref<36x768xf32, #tpu.memory_space<vmem>>, vector<4x768xf32>
    tpu.vector_store %arg11[%c8_90, %c0_91], %84 {strides = array<i32>} : memref<36x768xf32, #tpu.memory_space<vmem>>, vector<4x768xf32>,
    %c0_92 = arith.constant 0 : index
    %c130 = arith.constant 130 : index
    %86 = vector.load %arg10[%c0_92, %c130] : memref<4x1032xf32, #tpu.memory_space<vmem>>, vector<4x768xf32>
    %c12_93 = arith.constant 12 : index
    %c0_94 = arith.constant 0 : index
    %87 = vector.load %arg11[%c12_93, %c0_94] : memref<36x768xf32, #tpu.memory_space<vmem>>, vector<4x768xf32>
    tpu.vector_store %arg11[%c12_93, %c0_94], %86 {strides = array<i32>} : memref<36x768xf32, #tpu.memory_space<vmem>>, vector<4x768xf32>,
    %c0_95 = arith.constant 0 : index
    %c132_96 = arith.constant 132 : index
    %88 = vector.load %arg10[%c0_95, %c132_96] : memref<4x1032xf32, #tpu.memory_space<vmem>>, vector<4x768xf32>
    %c16_97 = arith.constant 16 : index
    %c0_98 = arith.constant 0 : index
    %89 = vector.load %arg11[%c16_97, %c0_98] : memref<36x768xf32, #tpu.memory_space<vmem>>, vector<4x768xf32>
    tpu.vector_store %arg11[%c16_97, %c0_98], %88 {strides = array<i32>} : memref<36x768xf32, #tpu.memory_space<vmem>>, vector<4x768xf32>,
    %c0_99 = arith.constant 0 : index
    %c134 = arith.constant 134 : index
    %90 = vector.load %arg10[%c0_99, %c134] : memref<4x1032xf32, #tpu.memory_space<vmem>>, vector<4x768xf32>
    %c20_100 = arith.constant 20 : index
    %c0_101 = arith.constant 0 : index
    %91 = vector.load %arg11[%c20_100, %c0_101] : memref<36x768xf32, #tpu.memory_space<vmem>>, vector<4x768xf32>
    tpu.vector_store %arg11[%c20_100, %c0_101], %90 {strides = array<i32>} : memref<36x768xf32, #tpu.memory_space<vmem>>, vector<4x768xf32>,
    %c0_102 = arith.constant 0 : index
    %c194 = arith.constant 194 : index
    %92 = vector.load %arg10[%c0_102, %c194] : memref<4x1032xf32, #tpu.memory_space<vmem>>, vector<4x768xf32>
    %c24_103 = arith.constant 24 : index
    %c0_104 = arith.constant 0 : index
    %93 = vector.load %arg11[%c24_103, %c0_104] : memref<36x768xf32, #tpu.memory_space<vmem>>, vector<4x768xf32>
    tpu.vector_store %arg11[%c24_103, %c0_104], %92 {strides = array<i32>} : memref<36x768xf32, #tpu.memory_space<vmem>>, vector<4x768xf32>,
    %c0_105 = arith.constant 0 : index
    %c196 = arith.constant 196 : index
    %94 = vector.load %arg10[%c0_105, %c196] : memref<4x1032xf32, #tpu.memory_space<vmem>>, vector<4x768xf32>
    %c28_106 = arith.constant 28 : index
    %c0_107 = arith.constant 0 : index
    %95 = vector.load %arg11[%c28_106, %c0_107] : memref<36x768xf32, #tpu.memory_space<vmem>>, vector<4x768xf32>
    tpu.vector_store %arg11[%c28_106, %c0_107], %94 {strides = array<i32>} : memref<36x768xf32, #tpu.memory_space<vmem>>, vector<4x768xf32>,
    %c0_108 = arith.constant 0 : index
    %c198 = arith.constant 198 : index
    %96 = vector.load %arg10[%c0_108, %c198] : memref<4x1032xf32, #tpu.memory_space<vmem>>, vector<4x768xf32>
    %c32_109 = arith.constant 32 : index
    %c0_110 = arith.constant 0 : index
    %97 = vector.load %arg11[%c32_109, %c0_110] : memref<36x768xf32, #tpu.memory_space<vmem>>, vector<4x768xf32>
    tpu.vector_store %arg11[%c32_109, %c0_110], %96 {strides = array<i32>} : memref<36x768xf32, #tpu.memory_space<vmem>>, vector<4x768xf32>,
    %c0_111 = arith.constant 0 : index
    %c0_112 = arith.constant 0 : index
    %98 = vector.load %arg5[%c0_111, %c0_112] : memref<4x36xf32, #tpu.memory_space<vmem>>, vector<4x36xf32>
    %c0_113 = arith.constant 0 : index
    %c0_114 = arith.constant 0 : index
    %99 = vector.load %arg11[%c0_113, %c0_114] : memref<36x768xf32, #tpu.memory_space<vmem>>, vector<36x768xf32>
    %cst_115 = arith.constant dense<0.000000e+00> : vector<4x768xf32>
    %100 = tpu.matmul %98, %99, %cst_115 {dimension_numbers = #tpu.dot_dimension_numbers<[1], [0], [0], [1], [0, 0, 1, 1], [], []>} : vector<4x36xf32>, vector<36x768xf32>, vector<4x768xf32> -> vector<4x768xf32>
    %c0_116 = arith.constant 0 : index
    %c0_117 = arith.constant 0 : index
    %101 = vector.load %arg6[%c0_116, %c0_117] : memref<4x1xf32, #tpu.memory_space<vmem>>, vector<4x1xf32>
    %102 = vector.broadcast %101 : vector<4x1xf32> to vector<4x768xf32>
    %103 = arith.addf %100, %102 : vector<4x768xf32>
    %cst_118 = arith.constant 0.000000e+00 : f32
    %104 = vector.broadcast %cst_118 : f32 to vector<4x768xf32>
    %105 = arith.maximumf %103, %104 : vector<4x768xf32>
    %106 = vector.broadcast %50 : vector<1x768xf32> to vector<4x768xf32>
    %107 = arith.mulf %105, %106 : vector<4x768xf32>
    %c0_119 = arith.constant 0 : index
    %c132_120 = arith.constant 132 : index
    %108 = vector.load %arg10[%c0_119, %c132_120] : memref<4x1032xf32, #tpu.memory_space<vmem>>, vector<4x768xf32>
    tpu.vector_store %arg10[%c0_119, %c132_120], %107 {strides = array<i32>} : memref<4x1032xf32, #tpu.memory_space<vmem>>, vector<4x768xf32>,
    %109 = arith.addf %78, %107 : vector<4x768xf32>
    %c0_121 = arith.constant 0 : index
    %c0_122 = arith.constant 0 : index
    %110 = vector.load %arg10[%c0_121, %c0_122] : memref<4x1032xf32, #tpu.memory_space<vmem>>, vector<4x768xf32>
    %c0_123 = arith.constant 0 : index
    %c0_124 = arith.constant 0 : index
    %111 = vector.load %arg11[%c0_123, %c0_124] : memref<36x768xf32, #tpu.memory_space<vmem>>, vector<4x768xf32>
    tpu.vector_store %arg11[%c0_123, %c0_124], %110 {strides = array<i32>} : memref<36x768xf32, #tpu.memory_space<vmem>>, vector<4x768xf32>,
    %c0_125 = arith.constant 0 : index
    %c4_126 = arith.constant 4 : index
    %112 = vector.load %arg10[%c0_125, %c4_126] : memref<4x1032xf32, #tpu.memory_space<vmem>>, vector<4x768xf32>
    %c4_127 = arith.constant 4 : index
    %c0_128 = arith.constant 0 : index
    %113 = vector.load %arg11[%c4_127, %c0_128] : memref<36x768xf32, #tpu.memory_space<vmem>>, vector<4x768xf32>
    tpu.vector_store %arg11[%c4_127, %c0_128], %112 {strides = array<i32>} : memref<36x768xf32, #tpu.memory_space<vmem>>, vector<4x768xf32>,
    %c0_129 = arith.constant 0 : index
    %c8_130 = arith.constant 8 : index
    %114 = vector.load %arg10[%c0_129, %c8_130] : memref<4x1032xf32, #tpu.memory_space<vmem>>, vector<4x768xf32>
    %c8_131 = arith.constant 8 : index
    %c0_132 = arith.constant 0 : index
    %115 = vector.load %arg11[%c8_131, %c0_132] : memref<36x768xf32, #tpu.memory_space<vmem>>, vector<4x768xf32>
    tpu.vector_store %arg11[%c8_131, %c0_132], %114 {strides = array<i32>} : memref<36x768xf32, #tpu.memory_space<vmem>>, vector<4x768xf32>,
    %c0_133 = arith.constant 0 : index
    %c128_134 = arith.constant 128 : index
    %116 = vector.load %arg10[%c0_133, %c128_134] : memref<4x1032xf32, #tpu.memory_space<vmem>>, vector<4x768xf32>
    %c12_135 = arith.constant 12 : index
    %c0_136 = arith.constant 0 : index
    %117 = vector.load %arg11[%c12_135, %c0_136] : memref<36x768xf32, #tpu.memory_space<vmem>>, vector<4x768xf32>
    tpu.vector_store %arg11[%c12_135, %c0_136], %116 {strides = array<i32>} : memref<36x768xf32, #tpu.memory_space<vmem>>, vector<4x768xf32>,
    %c0_137 = arith.constant 0 : index
    %c132_138 = arith.constant 132 : index
    %118 = vector.load %arg10[%c0_137, %c132_138] : memref<4x1032xf32, #tpu.memory_space<vmem>>, vector<4x768xf32>
    %c16_139 = arith.constant 16 : index
    %c0_140 = arith.constant 0 : index
    %119 = vector.load %arg11[%c16_139, %c0_140] : memref<36x768xf32, #tpu.memory_space<vmem>>, vector<4x768xf32>
    tpu.vector_store %arg11[%c16_139, %c0_140], %118 {strides = array<i32>} : memref<36x768xf32, #tpu.memory_space<vmem>>, vector<4x768xf32>,
    %c0_141 = arith.constant 0 : index
    %c136 = arith.constant 136 : index
    %120 = vector.load %arg10[%c0_141, %c136] : memref<4x1032xf32, #tpu.memory_space<vmem>>, vector<4x768xf32>
    %c20_142 = arith.constant 20 : index
    %c0_143 = arith.constant 0 : index
    %121 = vector.load %arg11[%c20_142, %c0_143] : memref<36x768xf32, #tpu.memory_space<vmem>>, vector<4x768xf32>
    tpu.vector_store %arg11[%c20_142, %c0_143], %120 {strides = array<i32>} : memref<36x768xf32, #tpu.memory_space<vmem>>, vector<4x768xf32>,
    %c0_144 = arith.constant 0 : index
    %c256 = arith.constant 256 : index
    %122 = vector.load %arg10[%c0_144, %c256] : memref<4x1032xf32, #tpu.memory_space<vmem>>, vector<4x768xf32>
    %c24_145 = arith.constant 24 : index
    %c0_146 = arith.constant 0 : index
    %123 = vector.load %arg11[%c24_145, %c0_146] : memref<36x768xf32, #tpu.memory_space<vmem>>, vector<4x768xf32>
    tpu.vector_store %arg11[%c24_145, %c0_146], %122 {strides = array<i32>} : memref<36x768xf32, #tpu.memory_space<vmem>>, vector<4x768xf32>,
    %c0_147 = arith.constant 0 : index
    %c260 = arith.constant 260 : index
    %124 = vector.load %arg10[%c0_147, %c260] : memref<4x1032xf32, #tpu.memory_space<vmem>>, vector<4x768xf32>
    %c28_148 = arith.constant 28 : index
    %c0_149 = arith.constant 0 : index
    %125 = vector.load %arg11[%c28_148, %c0_149] : memref<36x768xf32, #tpu.memory_space<vmem>>, vector<4x768xf32>
    tpu.vector_store %arg11[%c28_148, %c0_149], %124 {strides = array<i32>} : memref<36x768xf32, #tpu.memory_space<vmem>>, vector<4x768xf32>,
    %c0_150 = arith.constant 0 : index
    %c264_151 = arith.constant 264 : index
    %126 = vector.load %arg10[%c0_150, %c264_151] : memref<4x1032xf32, #tpu.memory_space<vmem>>, vector<4x768xf32>
    %c32_152 = arith.constant 32 : index
    %c0_153 = arith.constant 0 : index
    %127 = vector.load %arg11[%c32_152, %c0_153] : memref<36x768xf32, #tpu.memory_space<vmem>>, vector<4x768xf32>
    tpu.vector_store %arg11[%c32_152, %c0_153], %126 {strides = array<i32>} : memref<36x768xf32, #tpu.memory_space<vmem>>, vector<4x768xf32>,
    %c0_154 = arith.constant 0 : index
    %c0_155 = arith.constant 0 : index
    %128 = vector.load %arg7[%c0_154, %c0_155] : memref<4x36xf32, #tpu.memory_space<vmem>>, vector<4x36xf32>
    %c0_156 = arith.constant 0 : index
    %c0_157 = arith.constant 0 : index
    %129 = vector.load %arg11[%c0_156, %c0_157] : memref<36x768xf32, #tpu.memory_space<vmem>>, vector<36x768xf32>
    %cst_158 = arith.constant dense<0.000000e+00> : vector<4x768xf32>
    %130 = tpu.matmul %128, %129, %cst_158 {dimension_numbers = #tpu.dot_dimension_numbers<[1], [0], [0], [1], [0, 0, 1, 1], [], []>} : vector<4x36xf32>, vector<36x768xf32>, vector<4x768xf32> -> vector<4x768xf32>
    %c0_159 = arith.constant 0 : index
    %c0_160 = arith.constant 0 : index
    %131 = vector.load %arg8[%c0_159, %c0_160] : memref<4x1xf32, #tpu.memory_space<vmem>>, vector<4x1xf32>
    %132 = vector.broadcast %131 : vector<4x1xf32> to vector<4x768xf32>
    %133 = arith.addf %130, %132 : vector<4x768xf32>
    %cst_161 = arith.constant 0.000000e+00 : f32
    %134 = vector.broadcast %cst_161 : f32 to vector<4x768xf32>
    %135 = arith.maximumf %133, %134 : vector<4x768xf32>
    %136 = arith.addf %109, %135 : vector<4x768xf32>
    %137 = vector.extract_strided_slice %136 {offsets = [0, 132], sizes = [4, 16], strides = [1, 1]} : vector<4x768xf32> to vector<4x16xf32>
    %c0_162 = arith.constant 0 : index
    %c0_163 = arith.constant 0 : index
    %c0_164 = arith.constant 0 : index
    %138 = vector.load %arg9[%c0_162, %c0_163, %c0_164] : memref<1x4x256xf32, #tpu.memory_space<vmem>>, vector<1x4x16xf32>
    %139 = vector.shape_cast %138 : vector<1x4x16xf32> to vector<4x16xf32>
    %140 = vector.shape_cast %137 : vector<4x16xf32> to vector<1x4x16xf32>
    tpu.vector_store %arg9[%c0_162, %c0_163, %c0_164], %140 {strides = array<i32>} : memref<1x4x256xf32, #tpu.memory_space<vmem>>, vector<1x4x16xf32>,
    %141 = vector.extract_strided_slice %136 {offsets = [0, 164], sizes = [4, 16], strides = [1, 1]} : vector<4x768xf32> to vector<4x16xf32>
    %c0_165 = arith.constant 0 : index
    %c0_166 = arith.constant 0 : index
    %c16_167 = arith.constant 16 : index
    %142 = vector.load %arg9[%c0_165, %c0_166, %c16_167] : memref<1x4x256xf32, #tpu.memory_space<vmem>>, vector<1x4x16xf32>
    %143 = vector.shape_cast %142 : vector<1x4x16xf32> to vector<4x16xf32>
    %144 = vector.shape_cast %141 : vector<4x16xf32> to vector<1x4x16xf32>
    tpu.vector_store %arg9[%c0_165, %c0_166, %c16_167], %144 {strides = array<i32>} : memref<1x4x256xf32, #tpu.memory_space<vmem>>, vector<1x4x16xf32>,
    %145 = vector.extract_strided_slice %136 {offsets = [0, 196], sizes = [4, 16], strides = [1, 1]} : vector<4x768xf32> to vector<4x16xf32>
    %c0_168 = arith.constant 0 : index
    %c0_169 = arith.constant 0 : index
    %c32_170 = arith.constant 32 : index
    %146 = vector.load %arg9[%c0_168, %c0_169, %c32_170] : memref<1x4x256xf32, #tpu.memory_space<vmem>>, vector<1x4x16xf32>
    %147 = vector.shape_cast %146 : vector<1x4x16xf32> to vector<4x16xf32>
    %148 = vector.shape_cast %145 : vector<4x16xf32> to vector<1x4x16xf32>
    tpu.vector_store %arg9[%c0_168, %c0_169, %c32_170], %148 {strides = array<i32>} : memref<1x4x256xf32, #tpu.memory_space<vmem>>, vector<1x4x16xf32>,
    %149 = vector.extract_strided_slice %136 {offsets = [0, 228], sizes = [4, 16], strides = [1, 1]} : vector<4x768xf32> to vector<4x16xf32>
    %c0_171 = arith.constant 0 : index
    %c0_172 = arith.constant 0 : index
    %c48_173 = arith.constant 48 : index
    %150 = vector.load %arg9[%c0_171, %c0_172, %c48_173] : memref<1x4x256xf32, #tpu.memory_space<vmem>>, vector<1x4x16xf32>
    %151 = vector.shape_cast %150 : vector<1x4x16xf32> to vector<4x16xf32>
    %152 = vector.shape_cast %149 : vector<4x16xf32> to vector<1x4x16xf32>
    tpu.vector_store %arg9[%c0_171, %c0_172, %c48_173], %152 {strides = array<i32>} : memref<1x4x256xf32, #tpu.memory_space<vmem>>, vector<1x4x16xf32>,
    %153 = vector.extract_strided_slice %136 {offsets = [0, 260], sizes = [4, 16], strides = [1, 1]} : vector<4x768xf32> to vector<4x16xf32>
    %c0_174 = arith.constant 0 : index
    %c0_175 = arith.constant 0 : index
    %c64_176 = arith.constant 64 : index
    %154 = vector.load %arg9[%c0_174, %c0_175, %c64_176] : memref<1x4x256xf32, #tpu.memory_space<vmem>>, vector<1x4x16xf32>
    %155 = vector.shape_cast %154 : vector<1x4x16xf32> to vector<4x16xf32>
    %156 = vector.shape_cast %153 : vector<4x16xf32> to vector<1x4x16xf32>
    tpu.vector_store %arg9[%c0_174, %c0_175, %c64_176], %156 {strides = array<i32>} : memref<1x4x256xf32, #tpu.memory_space<vmem>>, vector<1x4x16xf32>,
    %157 = vector.extract_strided_slice %136 {offsets = [0, 292], sizes = [4, 16], strides = [1, 1]} : vector<4x768xf32> to vector<4x16xf32>
    %c0_177 = arith.constant 0 : index
    %c0_178 = arith.constant 0 : index
    %c80_179 = arith.constant 80 : index
    %158 = vector.load %arg9[%c0_177, %c0_178, %c80_179] : memref<1x4x256xf32, #tpu.memory_space<vmem>>, vector<1x4x16xf32>
    %159 = vector.shape_cast %158 : vector<1x4x16xf32> to vector<4x16xf32>
    %160 = vector.shape_cast %157 : vector<4x16xf32> to vector<1x4x16xf32>
    tpu.vector_store %arg9[%c0_177, %c0_178, %c80_179], %160 {strides = array<i32>} : memref<1x4x256xf32, #tpu.memory_space<vmem>>, vector<1x4x16xf32>,
    %161 = vector.extract_strided_slice %136 {offsets = [0, 324], sizes = [4, 16], strides = [1, 1]} : vector<4x768xf32> to vector<4x16xf32>
    %c0_180 = arith.constant 0 : index
    %c0_181 = arith.constant 0 : index
    %c96_182 = arith.constant 96 : index
    %162 = vector.load %arg9[%c0_180, %c0_181, %c96_182] : memref<1x4x256xf32, #tpu.memory_space<vmem>>, vector<1x4x16xf32>
    %163 = vector.shape_cast %162 : vector<1x4x16xf32> to vector<4x16xf32>
    %164 = vector.shape_cast %161 : vector<4x16xf32> to vector<1x4x16xf32>
    tpu.vector_store %arg9[%c0_180, %c0_181, %c96_182], %164 {strides = array<i32>} : memref<1x4x256xf32, #tpu.memory_space<vmem>>, vector<1x4x16xf32>,
    %165 = vector.extract_strided_slice %136 {offsets = [0, 356], sizes = [4, 16], strides = [1, 1]} : vector<4x768xf32> to vector<4x16xf32>
    %c0_183 = arith.constant 0 : index
    %c0_184 = arith.constant 0 : index
    %c112_185 = arith.constant 112 : index
    %166 = vector.load %arg9[%c0_183, %c0_184, %c112_185] : memref<1x4x256xf32, #tpu.memory_space<vmem>>, vector<1x4x16xf32>
    %167 = vector.shape_cast %166 : vector<1x4x16xf32> to vector<4x16xf32>
    %168 = vector.shape_cast %165 : vector<4x16xf32> to vector<1x4x16xf32>
    tpu.vector_store %arg9[%c0_183, %c0_184, %c112_185], %168 {strides = array<i32>} : memref<1x4x256xf32, #tpu.memory_space<vmem>>, vector<1x4x16xf32>,
    %169 = vector.extract_strided_slice %136 {offsets = [0, 388], sizes = [4, 16], strides = [1, 1]} : vector<4x768xf32> to vector<4x16xf32>
    %c0_186 = arith.constant 0 : index
    %c0_187 = arith.constant 0 : index
    %c128_188 = arith.constant 128 : index
    %170 = vector.load %arg9[%c0_186, %c0_187, %c128_188] : memref<1x4x256xf32, #tpu.memory_space<vmem>>, vector<1x4x16xf32>
    %171 = vector.shape_cast %170 : vector<1x4x16xf32> to vector<4x16xf32>
    %172 = vector.shape_cast %169 : vector<4x16xf32> to vector<1x4x16xf32>
    tpu.vector_store %arg9[%c0_186, %c0_187, %c128_188], %172 {strides = array<i32>} : memref<1x4x256xf32, #tpu.memory_space<vmem>>, vector<1x4x16xf32>,
    %173 = vector.extract_strided_slice %136 {offsets = [0, 420], sizes = [4, 16], strides = [1, 1]} : vector<4x768xf32> to vector<4x16xf32>
    %c0_189 = arith.constant 0 : index
    %c0_190 = arith.constant 0 : index
    %c144_191 = arith.constant 144 : index
    %174 = vector.load %arg9[%c0_189, %c0_190, %c144_191] : memref<1x4x256xf32, #tpu.memory_space<vmem>>, vector<1x4x16xf32>
    %175 = vector.shape_cast %174 : vector<1x4x16xf32> to vector<4x16xf32>
    %176 = vector.shape_cast %173 : vector<4x16xf32> to vector<1x4x16xf32>
    tpu.vector_store %arg9[%c0_189, %c0_190, %c144_191], %176 {strides = array<i32>} : memref<1x4x256xf32, #tpu.memory_space<vmem>>, vector<1x4x16xf32>,
    %177 = vector.extract_strided_slice %136 {offsets = [0, 452], sizes = [4, 16], strides = [1, 1]} : vector<4x768xf32> to vector<4x16xf32>
    %c0_192 = arith.constant 0 : index
    %c0_193 = arith.constant 0 : index
    %c160_194 = arith.constant 160 : index
    %178 = vector.load %arg9[%c0_192, %c0_193, %c160_194] : memref<1x4x256xf32, #tpu.memory_space<vmem>>, vector<1x4x16xf32>
    %179 = vector.shape_cast %178 : vector<1x4x16xf32> to vector<4x16xf32>
    %180 = vector.shape_cast %177 : vector<4x16xf32> to vector<1x4x16xf32>
    tpu.vector_store %arg9[%c0_192, %c0_193, %c160_194], %180 {strides = array<i32>} : memref<1x4x256xf32, #tpu.memory_space<vmem>>, vector<1x4x16xf32>,
    %181 = vector.extract_strided_slice %136 {offsets = [0, 484], sizes = [4, 16], strides = [1, 1]} : vector<4x768xf32> to vector<4x16xf32>
    %c0_195 = arith.constant 0 : index
    %c0_196 = arith.constant 0 : index
    %c176_197 = arith.constant 176 : index
    %182 = vector.load %arg9[%c0_195, %c0_196, %c176_197] : memref<1x4x256xf32, #tpu.memory_space<vmem>>, vector<1x4x16xf32>
    %183 = vector.shape_cast %182 : vector<1x4x16xf32> to vector<4x16xf32>
    %184 = vector.shape_cast %181 : vector<4x16xf32> to vector<1x4x16xf32>
    tpu.vector_store %arg9[%c0_195, %c0_196, %c176_197], %184 {strides = array<i32>} : memref<1x4x256xf32, #tpu.memory_space<vmem>>, vector<1x4x16xf32>,
    %185 = vector.extract_strided_slice %136 {offsets = [0, 516], sizes = [4, 16], strides = [1, 1]} : vector<4x768xf32> to vector<4x16xf32>
    %c0_198 = arith.constant 0 : index
    %c0_199 = arith.constant 0 : index
    %c192_200 = arith.constant 192 : index
    %186 = vector.load %arg9[%c0_198, %c0_199, %c192_200] : memref<1x4x256xf32, #tpu.memory_space<vmem>>, vector<1x4x16xf32>
    %187 = vector.shape_cast %186 : vector<1x4x16xf32> to vector<4x16xf32>
    %188 = vector.shape_cast %185 : vector<4x16xf32> to vector<1x4x16xf32>
    tpu.vector_store %arg9[%c0_198, %c0_199, %c192_200], %188 {strides = array<i32>} : memref<1x4x256xf32, #tpu.memory_space<vmem>>, vector<1x4x16xf32>,
    %189 = vector.extract_strided_slice %136 {offsets = [0, 548], sizes = [4, 16], strides = [1, 1]} : vector<4x768xf32> to vector<4x16xf32>
    %c0_201 = arith.constant 0 : index
    %c0_202 = arith.constant 0 : index
    %c208_203 = arith.constant 208 : index
    %190 = vector.load %arg9[%c0_201, %c0_202, %c208_203] : memref<1x4x256xf32, #tpu.memory_space<vmem>>, vector<1x4x16xf32>
    %191 = vector.shape_cast %190 : vector<1x4x16xf32> to vector<4x16xf32>
    %192 = vector.shape_cast %189 : vector<4x16xf32> to vector<1x4x16xf32>
    tpu.vector_store %arg9[%c0_201, %c0_202, %c208_203], %192 {strides = array<i32>} : memref<1x4x256xf32, #tpu.memory_space<vmem>>, vector<1x4x16xf32>,
    %193 = vector.extract_strided_slice %136 {offsets = [0, 580], sizes = [4, 16], strides = [1, 1]} : vector<4x768xf32> to vector<4x16xf32>
    %c0_204 = arith.constant 0 : index
    %c0_205 = arith.constant 0 : index
    %c224_206 = arith.constant 224 : index
    %194 = vector.load %arg9[%c0_204, %c0_205, %c224_206] : memref<1x4x256xf32, #tpu.memory_space<vmem>>, vector<1x4x16xf32>
    %195 = vector.shape_cast %194 : vector<1x4x16xf32> to vector<4x16xf32>
    %196 = vector.shape_cast %193 : vector<4x16xf32> to vector<1x4x16xf32>
    tpu.vector_store %arg9[%c0_204, %c0_205, %c224_206], %196 {strides = array<i32>} : memref<1x4x256xf32, #tpu.memory_space<vmem>>, vector<1x4x16xf32>,
    %197 = vector.extract_strided_slice %136 {offsets = [0, 612], sizes = [4, 16], strides = [1, 1]} : vector<4x768xf32> to vector<4x16xf32>
    %c0_207 = arith.constant 0 : index
    %c0_208 = arith.constant 0 : index
    %c240_209 = arith.constant 240 : index
    %198 = vector.load %arg9[%c0_207, %c0_208, %c240_209] : memref<1x4x256xf32, #tpu.memory_space<vmem>>, vector<1x4x16xf32>
    %199 = vector.shape_cast %198 : vector<1x4x16xf32> to vector<4x16xf32>
    %200 = vector.shape_cast %197 : vector<4x16xf32> to vector<1x4x16xf32>
    tpu.vector_store %arg9[%c0_207, %c0_208, %c240_209], %200 {strides = array<i32>} : memref<1x4x256xf32, #tpu.memory_space<vmem>>, vector<1x4x16xf32>,
    return
  }
  func.func @transform_0(%arg0: i32) -> (i32, i32, i32) {
    %c0_i32 = arith.constant 0 : i32
    %c0_i32_0 = arith.constant 0 : i32
    %c0_i32_1 = arith.constant 0 : i32
    return %arg0, %c0_i32, %c0_i32_0 : i32, i32, i32
  }
  func.func @transform_1(%arg0: i32) -> (i32, i32) {
    %c0_i32 = arith.constant 0 : i32
    %c0_i32_0 = arith.constant 0 : i32
    %c0_i32_1 = arith.constant 0 : i32
    return %c0_i32, %c0_i32_0 : i32, i32
  }
  func.func @transform_2(%arg0: i32) -> (i32, i32) {
    %c0_i32 = arith.constant 0 : i32
    %c0_i32_0 = arith.constant 0 : i32
    %c0_i32_1 = arith.constant 0 : i32
    return %c0_i32, %c0_i32_0 : i32, i32
  }
  func.func @transform_3(%arg0: i32) -> (i32, i32) {
    %c0_i32 = arith.constant 0 : i32
    %c0_i32_0 = arith.constant 0 : i32
    %c0_i32_1 = arith.constant 0 : i32
    return %c0_i32, %c0_i32_0 : i32, i32
  }
  func.func @transform_4(%arg0: i32) -> (i32, i32) {
    %c0_i32 = arith.constant 0 : i32
    %c0_i32_0 = arith.constant 0 : i32
    %c0_i32_1 = arith.constant 0 : i32
    return %c0_i32, %c0_i32_0 : i32, i32
  }
  func.func @transform_5(%arg0: i32) -> (i32, i32) {
    %c0_i32 = arith.constant 0 : i32
    %c0_i32_0 = arith.constant 0 : i32
    %c0_i32_1 = arith.constant 0 : i32
    return %c0_i32, %c0_i32_0 : i32, i32
  }
  func.func @transform_6(%arg0: i32) -> (i32, i32) {
    %c0_i32 = arith.constant 0 : i32
    %c0_i32_0 = arith.constant 0 : i32
    %c0_i32_1 = arith.constant 0 : i32
    return %c0_i32, %c0_i32_0 : i32, i32
  }
  func.func @transform_7(%arg0: i32) -> (i32, i32) {
    %c0_i32 = arith.constant 0 : i32
    %c0_i32_0 = arith.constant 0 : i32
    %c0_i32_1 = arith.constant 0 : i32
    return %c0_i32, %c0_i32_0 : i32, i32
  }
  func.func @transform_8(%arg0: i32) -> (i32, i32, i32) {
    %c0_i32 = arith.constant 0 : i32
    %c0_i32_0 = arith.constant 0 : i32
    %c0_i32_1 = arith.constant 0 : i32
    return %arg0, %c0_i32, %c0_i32_0 : i32, i32, i32
  }
}

</mosaic_0001>

<llo_original>
// kernel: dblock_forward.1
$region0: #{dblock_forward.1}
  #allocation0 [shape = 'u32[]', space=smem, size = 0x4, offset = 0x4, fixed_abs, tag = 'smem constant byte address 0x4 - core index']
  #allocation1 [shape = 'u32[144,128]{1,0:T(1,128)}', space=vmem, size = 0x12000, scoped, tag = 'internal scratch']
  #allocation2 [shape = 'f32[4,1032]{1,0:T(4,128)}', space=vmem, size = 0x4800, scoped, tag = 'scratch operand']
  #allocation3 [shape = 'f32[36,768]{1,0:T(8,128)}', space=vmem, size = 0x1e000, scoped, tag = 'scratch operand']
  %s0 = inlined_call_operand.vmem [shape: f32[2,4,256], index: 0, kind: input, shape index: {}]
  %s1 = inlined_call_operand.vmem [shape: f32[1,768], index: 1, kind: input, shape index: {}]
  %s2 = inlined_call_operand.vmem [shape: f32[4,36], index: 2, kind: input, shape index: {}]
  %s3 = inlined_call_operand.vmem [shape: f32[4,1], index: 3, kind: input, shape index: {}]
  %s4 = inlined_call_operand.vmem [shape: f32[4,36], index: 4, kind: input, shape index: {}]
  %s5 = inlined_call_operand.vmem [shape: f32[4,1], index: 5, kind: input, shape index: {}]
  %s6 = inlined_call_operand.vmem [shape: f32[4,36], index: 6, kind: input, shape index: {}]
  %s7 = inlined_call_operand.vmem [shape: f32[4,1], index: 7, kind: input, shape index: {}]
  %s8 = inlined_call_operand.vmem [shape: f32[2,4,256], index: 8, kind: output, shape index: {}]
  %s9 = sld [smem:[#allocation0]]
  $region65: #{dblock_forward.1} parent=0
    _
  %s11 = ssub.s32 1, %s9
  %s12 = scalar_select 0, %s11, %s9
  loop: start=0, step=1, limit=4
  $region2: #{dblock_forward.1} parent=0 // loop_pre_header
    _
  $region3: #{dblock_forward.1} parent=0 // loop_header
    %s14 = sphi 0, %s18
    %p15 = scmp.ge.s32.totalorder %s14, 4
    %s24 = sphi 0, %s26
    %s27 = sphi 0, %s24
    %s28 = sphi 0, %s27
    %s44 = sphi 0, %s28
    %s48 = sphi 0, %s48
    %s50 = sphi 0, %s48
    %s51 = sphi 0, %s50
    %s65 = sphi 0, %s51
    %s69 = sphi 0, %s69
    %s71 = sphi 0, %s69
    %s72 = sphi 0, %s71
    %s86 = sphi 0, %s72
    %s90 = sphi 0, %s90
    %s92 = sphi 0, %s90
    %s93 = sphi 0, %s92
    %s107 = sphi 0, %s93
    %s111 = sphi 0, %s111
    %s113 = sphi 0, %s111
    %s114 = sphi 0, %s113
    %s128 = sphi 0, %s114
    %s132 = sphi 0, %s132
    %s134 = sphi 0, %s132
    %s135 = sphi 0, %s134
    %s149 = sphi 0, %s135
    %s153 = sphi 0, %s153
    %s155 = sphi 0, %s153
    %s156 = sphi 0, %s155
    %s170 = sphi 0, %s156
    %s174 = sphi 0, %s174
    %s176 = sphi 0, %s174
    %s177 = sphi 0, %s176
    %s191 = sphi 0, %s177
    %s197 = sphi 0, %s199
    %s200 = sphi 0, %s197
    %s201 = sphi 0, %s200
    %s217 = sphi 0, %s201
  $region4: #{dblock_forward.1} parent=0 // loop_header_branch
    %17 = sbr.rel (%p15) target = $region8
  $region5: #{dblock_forward.1} parent=0 // loop_body
    %s19 = ssub.s32 %s14, 1
    %s20 = ssub.s32 %s14, 2
    %s21 = sadd.s32 %s14, 1
    %s22 = ssub.s32 %s14, %s21
    %p23 = scmp.eq.s32.totalorder %s22, 0
    %s25 = sadd.s32 %s24, 1
    %s26 = scalar_select %p23, %s24, %s25
    %p29 = pneg %p23
    %p30 = scmp.eq.s32.totalorder %s14, 1
    %p31 = por %p29, %p30
    %p32 = scmp.ne.s32.totalorder %s24, %s27
    %p33 = scmp.eq.s32.totalorder %s14, 0
    %p34 = por %p32, %p33
    %p35 = scmp.ne.s32.totalorder %s24, %s27
    %p36 = scmp.eq.s32.totalorder %s19, 1
    %p37 = por %p35, %p36
    %p38 = scmp.ne.s32.totalorder %s27, %s28
    %p39 = scmp.eq.s32.totalorder %s19, 0
    %p40 = por %p38, %p39
    %p41 = scmp.ne.s32.totalorder %s27, %s28
    %p42 = scmp.eq.s32.totalorder %s20, 1
    %p43 = por %p41, %p42
    %p45 = scmp.ne.s32.totalorder %s28, %s44
    %p46 = scmp.eq.s32.totalorder %s20, 0
    %p47 = por %p45, %p46
    %s49 = sadd.s32 %s48, 1
    %p52 = scmp.eq.s32.totalorder %s14, 1
    %p53 = scmp.ne.s32.totalorder %s48, %s50
    %p54 = scmp.eq.s32.totalorder %s14, 0
    %p55 = por %p53, %p54
    %p56 = scmp.ne.s32.totalorder %s48, %s50
    %p57 = scmp.eq.s32.totalorder %s19, 1
    %p58 = por %p56, %p57
    %p59 = scmp.ne.s32.totalorder %s50, %s51
    %p60 = scmp.eq.s32.totalorder %s19, 0
    %p61 = por %p59, %p60
    %p62 = scmp.ne.s32.totalorder %s50, %s51
    %p63 = scmp.eq.s32.totalorder %s20, 1
    %p64 = por %p62, %p63
    %p66 = scmp.ne.s32.totalorder %s51, %s65
    %p67 = scmp.eq.s32.totalorder %s20, 0
    %p68 = por %p66, %p67
    %s70 = sadd.s32 %s69, 1
    %p73 = scmp.eq.s32.totalorder %s14, 1
    %p74 = scmp.ne.s32.totalorder %s69, %s71
    %p75 = scmp.eq.s32.totalorder %s14, 0
    %p76 = por %p74, %p75
    %p77 = scmp.ne.s32.totalorder %s69, %s71
    %p78 = scmp.eq.s32.totalorder %s19, 1
    %p79 = por %p77, %p78
    %p80 = scmp.ne.s32.totalorder %s71, %s72
    %p81 = scmp.eq.s32.totalorder %s19, 0
    %p82 = por %p80, %p81
    %p83 = scmp.ne.s32.totalorder %s71, %s72
    %p84 = scmp.eq.s32.totalorder %s20, 1
    %p85 = por %p83, %p84
    %p87 = scmp.ne.s32.totalorder %s72, %s86
    %p88 = scmp.eq.s32.totalorder %s20, 0
    %p89 = por %p87, %p88
    %s91 = sadd.s32 %s90, 1
    %p94 = scmp.eq.s32.totalorder %s14, 1
    %p95 = scmp.ne.s32.totalorder %s90, %s92
    %p96 = scmp.eq.s32.totalorder %s14, 0
    %p97 = por %p95, %p96
    %p98 = scmp.ne.s32.totalorder %s90, %s92
    %p99 = scmp.eq.s32.totalorder %s19, 1
    %p100 = por %p98, %p99
    %p101 = scmp.ne.s32.totalorder %s92, %s93
    %p102 = scmp.eq.s32.totalorder %s19, 0
    %p103 = por %p101, %p102
    %p104 = scmp.ne.s32.totalorder %s92, %s93
    %p105 = scmp.eq.s32.totalorder %s20, 1
    %p106 = por %p104, %p105
    %p108 = scmp.ne.s32.totalorder %s93, %s107
    %p109 = scmp.eq.s32.totalorder %s20, 0
    %p110 = por %p108, %p109
    %s112 = sadd.s32 %s111, 1
    %p115 = scmp.eq.s32.totalorder %s14, 1
    %p116 = scmp.ne.s32.totalorder %s111, %s113
    %p117 = scmp.eq.s32.totalorder %s14, 0
    %p118 = por %p116, %p117
    %p119 = scmp.ne.s32.totalorder %s111, %s113
    %p120 = scmp.eq.s32.totalorder %s19, 1
    %p121 = por %p119, %p120
    %p122 = scmp.ne.s32.totalorder %s113, %s114
    %p123 = scmp.eq.s32.totalorder %s19, 0
    %p124 = por %p122, %p123
    %p125 = scmp.ne.s32.totalorder %s113, %s114
    %p126 = scmp.eq.s32.totalorder %s20, 1
    %p127 = por %p125, %p126
    %p129 = scmp.ne.s32.totalorder %s114, %s128
    %p130 = scmp.eq.s32.totalorder %s20, 0
    %p131 = por %p129, %p130
    %s133 = sadd.s32 %s132, 1
    %p136 = scmp.eq.s32.totalorder %s14, 1
    %p137 = scmp.ne.s32.totalorder %s132, %s134
    %p138 = scmp.eq.s32.totalorder %s14, 0
    %p139 = por %p137, %p138
    %p140 = scmp.ne.s32.totalorder %s132, %s134
    %p141 = scmp.eq.s32.totalorder %s19, 1
    %p142 = por %p140, %p141
    %p143 = scmp.ne.s32.totalorder %s134, %s135
    %p144 = scmp.eq.s32.totalorder %s19, 0
    %p145 = por %p143, %p144
    %p146 = scmp.ne.s32.totalorder %s134, %s135
    %p147 = scmp.eq.s32.totalorder %s20, 1
    %p148 = por %p146, %p147
    %p150 = scmp.ne.s32.totalorder %s135, %s149
    %p151 = scmp.eq.s32.totalorder %s20, 0
    %p152 = por %p150, %p151
    %s154 = sadd.s32 %s153, 1
    %p157 = scmp.eq.s32.totalorder %s14, 1
    %p158 = scmp.ne.s32.totalorder %s153, %s155
    %p159 = scmp.eq.s32.totalorder %s14, 0
    %p160 = por %p158, %p159
    %p161 = scmp.ne.s32.totalorder %s153, %s155
    %p162 = scmp.eq.s32.totalorder %s19, 1
    %p163 = por %p161, %p162
    %p164 = scmp.ne.s32.totalorder %s155, %s156
    %p165 = scmp.eq.s32.totalorder %s19, 0
    %p166 = por %p164, %p165
    %p167 = scmp.ne.s32.totalorder %s155, %s156
    %p168 = scmp.eq.s32.totalorder %s20, 1
    %p169 = por %p167, %p168
    %p171 = scmp.ne.s32.totalorder %s156, %s170
    %p172 = scmp.eq.s32.totalorder %s20, 0
    %p173 = por %p171, %p172
    %s175 = sadd.s32 %s174, 1
    %p178 = scmp.eq.s32.totalorder %s14, 1
    %p179 = scmp.ne.s32.totalorder %s174, %s176
    %p180 = scmp.eq.s32.totalorder %s14, 0
    %p181 = por %p179, %p180
    %p182 = scmp.ne.s32.totalorder %s174, %s176
    %p183 = scmp.eq.s32.totalorder %s19, 1
    %p184 = por %p182, %p183
    %p185 = scmp.ne.s32.totalorder %s176, %s177
    %p186 = scmp.eq.s32.totalorder %s19, 0
    %p187 = por %p185, %p186
    %p188 = scmp.ne.s32.totalorder %s176, %s177
    %p189 = scmp.eq.s32.totalorder %s20, 1
    %p190 = por %p188, %p189
    %p192 = scmp.ne.s32.totalorder %s177, %s191
    %p193 = scmp.eq.s32.totalorder %s20, 0
    %p194 = por %p192, %p193
    %s195 = ssub.s32 %s14, %s21
    %p196 = scmp.eq.s32.totalorder %s195, 0
    %s198 = sadd.s32 %s197, 1
    %s199 = scalar_select %p196, %s197, %s198
    %p202 = pneg %p196
    %p203 = scmp.eq.s32.totalorder %s14, 1
    %p204 = por %p202, %p203
    %p205 = scmp.ne.s32.totalorder %s197, %s200
    %p206 = scmp.eq.s32.totalorder %s14, 0
    %p207 = por %p205, %p206
    %p208 = scmp.ne.s32.totalorder %s197, %s200
    %p209 = scmp.eq.s32.totalorder %s19, 1
    %p210 = por %p208, %p209
    %p211 = scmp.ne.s32.totalorder %s200, %s201
    %p212 = scmp.eq.s32.totalorder %s19, 0
    %p213 = por %p211, %p212
    %p214 = scmp.ne.s32.totalorder %s200, %s201
    %p215 = scmp.eq.s32.totalorder %s20, 1
    %p216 = por %p214, %p215
    %p218 = scmp.ne.s32.totalorder %s201, %s217
    %p219 = scmp.eq.s32.totalorder %s20, 0
    %p220 = por %p218, %p219
    %p221 = scmp.le.s32.totalorder 1, %s14
    %p222 = scmp.lt.s32.totalorder %s14, 3
    %p223 = pnand %p221, %p222
    %p224 = pneg %p223
    // Predicated region
    $region9: #{dblock_forward.1} parent=5 // pred_check
      _
    $region10: #{dblock_forward.1} parent=5 // pred_check_branch
      %226 = sbr.rel (%p223) target = $region12
    $region11: #{dblock_forward.1} parent=5 // pred_region
      %s227 = ssub.s32 %s14, 1
      // Predicated region
      $region13: #{dblock_forward.1} parent=11 // pred_check
        %p228 = pneg %p61
      $region14: #{dblock_forward.1} parent=11 // pred_check_branch
        %230 = sbr.rel (%p228) target = $region16
      $region15: #{dblock_forward.1} parent=11 // pred_region
        _
      $region16: #{dblock_forward.1} parent=11 // pred_fallthru
        _
      // Predicated region
      $region17: #{dblock_forward.1} parent=11 // pred_check
        %p231 = pneg %p82
      $region18: #{dblock_forward.1} parent=11 // pred_check_branch
        %233 = sbr.rel (%p231) target = $region20
      $region19: #{dblock_forward.1} parent=11 // pred_region
        _
      $region20: #{dblock_forward.1} parent=11 // pred_fallthru
        _
      // Predicated region
      $region21: #{dblock_forward.1} parent=11 // pred_check
        %p234 = pneg %p103
      $region22: #{dblock_forward.1} parent=11 // pred_check_branch
        %236 = sbr.rel (%p234) target = $region24
      $region23: #{dblock_forward.1} parent=11 // pred_region
        _
      $region24: #{dblock_forward.1} parent=11 // pred_fallthru
        _
      // Predicated region
      $region25: #{dblock_forward.1} parent=11 // pred_check
        %p237 = pneg %p124
      $region26: #{dblock_forward.1} parent=11 // pred_check_branch
        %239 = sbr.rel (%p237) target = $region28
      $region27: #{dblock_forward.1} parent=11 // pred_region
        _
      $region28: #{dblock_forward.1} parent=11 // pred_fallthru
        _
      // Predicated region
      $region29: #{dblock_forward.1} parent=11 // pred_check
        %p240 = pneg %p145
      $region30: #{dblock_forward.1} parent=11 // pred_check_branch
        %242 = sbr.rel (%p240) target = $region32
      $region31: #{dblock_forward.1} parent=11 // pred_region
        _
      $region32: #{dblock_forward.1} parent=11 // pred_fallthru
        _
      // Predicated region
      $region33: #{dblock_forward.1} parent=11 // pred_check
        %p243 = pneg %p166
      $region34: #{dblock_forward.1} parent=11 // pred_check_branch
        %245 = sbr.rel (%p243) target = $region36
      $region35: #{dblock_forward.1} parent=11 // pred_region
        _
      $region36: #{dblock_forward.1} parent=11 // pred_fallthru
        _
      // Predicated region
      $region37: #{dblock_forward.1} parent=11 // pred_check
        %p246 = pneg %p187
      $region38: #{dblock_forward.1} parent=11 // pred_check_branch
        %248 = sbr.rel (%p246) target = $region40
      $region39: #{dblock_forward.1} parent=11 // pred_region
        _
      $region40: #{dblock_forward.1} parent=11 // pred_fallthru
        _
    $region12: #{dblock_forward.1} parent=5 // pred_fallthru
      _
    %p249 = scmp.lt.s32.totalorder %s14, 2
    // Predicated region
    $region41: #{dblock_forward.1} parent=5 // pred_check
      %p250 = pneg %p249
    $region42: #{dblock_forward.1} parent=5 // pred_check_branch
      %252 = sbr.rel (%p250) target = $region44
    $region43: #{dblock_forward.1} parent=5 // pred_region
      // Predicated region
      $region45: #{dblock_forward.1} parent=43 // pred_check
        %p253 = pneg %p34
      $region46: #{dblock_forward.1} parent=43 // pred_check_branch
        %255 = sbr.rel (%p253) target = $region48
      $region47: #{dblock_forward.1} parent=43 // pred_region
        %p256 = scmp.lt.s32.totalorder %s14, 1
        %s257 = scalar_select %p256, %s14, 1
        %s258 = smul.addr %s257, 2
        %s259 = smul.addr %s258, 4
        %s260 = scalar_lea.vmem %s0, %s259
      $region48: #{dblock_forward.1} parent=43 // pred_fallthru
        _
    $region44: #{dblock_forward.1} parent=5 // pred_fallthru
      _
    %p261 = scmp.le.s32.totalorder 1, %s14
    %p262 = scmp.lt.s32.totalorder %s14, 3
    %p263 = pnand %p261, %p262
    %p264 = pneg %p263
    // Predicated region
    $region49: #{dblock_forward.1} parent=5 // pred_check
      _
    $region50: #{dblock_forward.1} parent=5 // pred_check_branch
      %266 = sbr.rel (%p263) target = $region52
    $region51: #{dblock_forward.1} parent=5 // pred_region
      %s267 = ssub.s32 %s14, 1
      %p268 = scmp.lt.s32.totalorder %s19, 1
      %s269 = scalar_select %p268, %s19, 1
      %s270 = smul.addr %s269, 2
      %s271 = smul.addr %s270, 4
      %s272 = scalar_lea.vmem %s0, %s271
      %p273 = pneg %p40
      %p274 = pneg %p37
      %p275 = pneg %p61
      %p276 = pneg %p58
      %p277 = pneg %p82
      %p278 = pneg %p79
      %p279 = pneg %p103
      %p280 = pneg %p100
      %p281 = pneg %p124
      %p282 = pneg %p121
      %p283 = pneg %p145
      %p284 = pneg %p142
      %p285 = pneg %p166
      %p286 = pneg %p163
      %p287 = pneg %p187
      %p288 = pneg %p184
      %p289 = pneg %p213
      %p290 = pneg %p210
      %p291 = scmp.lt.s32.totalorder %s19, 1
      %s292 = scalar_select %p291, %s19, 1
      %s293 = smul.addr %s292, 2
      %s294 = smul.addr %s293, 4
      %s295 = scalar_lea.vmem %s8, %s294
      %p296 = scmp.lt.s32.totalorder %s19, 1
      %s297 = scalar_select %p296, %s19, 1
      %s298 = smul.addr %s297, 2
      %s299 = smul.addr %s298, 4
      %s300 = scalar_lea.vmem %s0, %s299
      %p301 = scmp.lt.s32.totalorder %s19, 1
      %s302 = scalar_select %p301, %s19, 1
      %s303 = smul.addr %s302, 2
      %s304 = smul.addr %s303, 4
      %s305 = scalar_lea.vmem %s8, %s304
      %306 = vst [vmem:[#allocation2] sm:$0xff] 0.0
      %307 = vst [vmem:[#allocation2 + $0x8] sm:$0xff] 0.0
      %308 = vst [vmem:[#allocation2 + $0x10] sm:$0xff] 0.0
      %309 = vst [vmem:[#allocation2 + $0x18] sm:$0xff] 0.0
      %vm310 = vcmask 60416
      %311 = vst.msk [vmem:[#allocation2 + $0x20] sm:$0xf] %vm310, 0.0
      %v312 = vld [vmem:[%s300] sm:$0xf]
      %314 = vrot.lane.b32.xlu0 %v312, 8
      %v315 = vpop.permute.xlu0 %314
      %vm317 = vcmask 191552
      %318 = vst.msk [vmem:[#allocation2 + $0x8] sm:$0xf] %vm317, %v315
      %v319 = vld [vmem:[%s300] sm:$0xf]
      %321 = vrot.lane.b32.xlu0 %v319, 24
      %v322 = vpop.permute.xlu0 %321
      %vm324 = vcmask 453952
      %325 = vst.msk [vmem:[#allocation2 + $0x8] sm:$0xf] %vm324, %v322
      %v326 = vld [vmem:[%s300] sm:$0xf]
      %328 = vrot.lane.b32.xlu0 %v326, 40
      %v329 = vpop.permute.xlu0 %328
      %vm331 = vcmask 716352
      %332 = vst.msk [vmem:[#allocation2 + $0x8] sm:$0xf] %vm331, %v329
      %v333 = vld [vmem:[%s300] sm:$0xf]
      %335 = vrot.lane.b32.xlu0 %v333, 56
      %v336 = vpop.permute.xlu0 %335
      %vm338 = vcmask 978752
      %339 = vst.msk [vmem:[#allocation2 + $0x8] sm:$0xf] %vm338, %v336
      %v340 = vld [vmem:[%s300] sm:$0xf]
      %342 = vrot.lane.b32.xlu0 %v340, 72
      %v343 = vpop.permute.xlu0 %342
      %345 = vst.msk [vmem:[#allocation2 + $0xc] sm:$0xf] %vm317, %v343
      %v346 = vld [vmem:[%s300] sm:$0xf]
      %348 = vrot.lane.b32.xlu0 %v346, 88
      %v349 = vpop.permute.xlu0 %348
      %351 = vst.msk [vmem:[#allocation2 + $0xc] sm:$0xf] %vm324, %v349
      %v352 = vld [vmem:[%s300] sm:$0xf]
      %354 = vrot.lane.b32.xlu0 %v352, 104
      %v355 = vpop.permute.xlu0 %354
      %357 = vst.msk [vmem:[#allocation2 + $0xc] sm:$0xf] %vm331, %v355
      %v358 = vld [vmem:[%s300] sm:$0xf]
      %360 = vrot.lane.b32.xlu0 %v358, 120
      %v361 = vpop.permute.xlu0 %360
      %363 = vst.msk [vmem:[#allocation2 + $0xc] sm:$0xf] %vm338, %v361
      %v364 = vld [vmem:[%s300 + $0x4] sm:$0xf]
      %366 = vrot.lane.b32.xlu0 %v364, 8
      %v367 = vpop.permute.xlu0 %366
      %369 = vst.msk [vmem:[#allocation2 + $0x10] sm:$0xf] %vm317, %v367
      %v370 = vld [vmem:[%s300 + $0x4] sm:$0xf]
      %372 = vrot.lane.b32.xlu0 %v370, 24
      %v373 = vpop.permute.xlu0 %372
      %375 = vst.msk [vmem:[#allocation2 + $0x10] sm:$0xf] %vm324, %v373
      %v376 = vld [vmem:[%s300 + $0x4] sm:$0xf]
      %378 = vrot.lane.b32.xlu0 %v376, 40
      %v379 = vpop.permute.xlu0 %378
      %381 = vst.msk [vmem:[#allocation2 + $0x10] sm:$0xf] %vm331, %v379
      %v382 = vld [vmem:[%s300 + $0x4] sm:$0xf]
      %384 = vrot.lane.b32.xlu0 %v382, 56
      %v385 = vpop.permute.xlu0 %384
      %387 = vst.msk [vmem:[#allocation2 + $0x10] sm:$0xf] %vm338, %v385
      %v388 = vld [vmem:[%s300 + $0x4] sm:$0xf]
      %390 = vrot.lane.b32.xlu0 %v388, 72
      %v391 = vpop.permute.xlu0 %390
      %393 = vst.msk [vmem:[#allocation2 + $0x14] sm:$0xf] %vm317, %v391
      %v394 = vld [vmem:[%s300 + $0x4] sm:$0xf]
      %396 = vrot.lane.b32.xlu0 %v394, 88
      %v397 = vpop.permute.xlu0 %396
      %399 = vst.msk [vmem:[#allocation2 + $0x14] sm:$0xf] %vm324, %v397
      %v400 = vld [vmem:[%s300 + $0x4] sm:$0xf]
      %402 = vrot.lane.b32.xlu0 %v400, 104
      %v403 = vpop.permute.xlu0 %402
      %405 = vst.msk [vmem:[#allocation2 + $0x14] sm:$0xf] %vm331, %v403
      %v406 = vld [vmem:[%s300 + $0x4] sm:$0xf]
      %408 = vrot.lane.b32.xlu0 %v406, 120
      %v409 = vpop.permute.xlu0 %408
      %411 = vst.msk [vmem:[#allocation2 + $0x14] sm:$0xf] %vm338, %v409
      %v412 = vld [vmem:[%s1] sm:$0x3f]
      %v413 = vld [vmem:[#allocation2] sm:$0xff]
      %v414 = vld [vmem:[#allocation2 + $0x8] sm:$0xff]
      %v415 = vld [vmem:[#allocation2 + $0x10] sm:$0xff]
      %v416 = vld [vmem:[#allocation2 + $0x18] sm:$0xf]
      %v421 = vcombine.high %v413, %v413
      %v422 = vcombine.high %v414, %v414
      %v423 = vcombine.high %v415, %v415
      %424 = vrot.lane.b32.xlu0 %v413, 29
      %v425 = vpop.permute.xlu0 %424
      %426 = vrot.lane.b32.xlu0 %v421, 29
      %v427 = vpop.permute.xlu0 %426
      %428 = vrot.lane.b32.xlu0 %v414, 29
      %v429 = vpop.permute.xlu0 %428
      %430 = vrot.lane.b32.xlu0 %v422, 29
      %v431 = vpop.permute.xlu0 %430
      %432 = vrot.lane.b32.xlu0 %v415, 29
      %v433 = vpop.permute.xlu0 %432
      %434 = vrot.lane.b32.xlu0 %v423, 29
      %v435 = vpop.permute.xlu0 %434
      %436 = vrot.lane.b32.xlu0 %v416, 29
      %v437 = vpop.permute.xlu0 %436
      %vm438 = vcmask 236544
      %v439 = vsel %vm438, %v425, %v427
      %v440 = vsel %vm438, %v427, %v429
      %v441 = vsel %vm438, %v429, %v431
      %v442 = vsel %vm438, %v431, %v433
      %v443 = vsel %vm438, %v433, %v435
      %v444 = vsel %vm438, %v435, %v437
      %451 = vst [vmem:[#allocation3] sm:$0xf] %v439
      %452 = vst [vmem:[#allocation3 + $0x8] sm:$0xf] %v440
      %453 = vst [vmem:[#allocation3 + $0x10] sm:$0xf] %v441
      %454 = vst [vmem:[#allocation3 + $0x18] sm:$0xf] %v442
      %455 = vst [vmem:[#allocation3 + $0x20] sm:$0xf] %v443
      %456 = vst [vmem:[#allocation3 + $0x28] sm:$0xf] %v444
      %v457 = vld [vmem:[#allocation2] sm:$0xff]
      %v458 = vld [vmem:[#allocation2 + $0x8] sm:$0xff]
      %v459 = vld [vmem:[#allocation2 + $0x10] sm:$0xff]
      %v460 = vld [vmem:[#allocation2 + $0x18] sm:$0xf]
      %v465 = vcombine.low %v457, %v457
      %v466 = vcombine.low %v458, %v458
      %v467 = vcombine.low %v459, %v459
      %v468 = vcombine.low %v460, %v460
      %469 = vrot.lane.b32.xlu0 %v465, 28
      %v470 = vpop.permute.xlu0 %469
      %471 = vrot.lane.b32.xlu0 %v457, 28
      %v472 = vpop.permute.xlu0 %471
      %473 = vrot.lane.b32.xlu0 %v466, 28
      %v474 = vpop.permute.xlu0 %473
      %475 = vrot.lane.b32.xlu0 %v458, 28
      %v476 = vpop.permute.xlu0 %475
      %477 = vrot.lane.b32.xlu0 %v467, 28
      %v478 = vpop.permute.xlu0 %477
      %479 = vrot.lane.b32.xlu0 %v459, 28
      %v480 = vpop.permute.xlu0 %479
      %481 = vrot.lane.b32.xlu0 %v468, 28
      %v482 = vpop.permute.xlu0 %481
      %vm483 = vcmask 228352
      %v484 = vsel %vm483, %v470, %v472
      %v485 = vsel %vm483, %v472, %v474
      %v486 = vsel %vm483, %v474, %v476
      %v487 = vsel %vm483, %v476, %v478
      %v488 = vsel %vm483, %v478, %v480
      %v489 = vsel %vm483, %v480, %v482
      %496 = vst [vmem:[#allocation3] sm:$0xf0] %v484
      %497 = vst [vmem:[#allocation3 + $0x8] sm:$0xf0] %v485
      %498 = vst [vmem:[#allocation3 + $0x10] sm:$0xf0] %v486
      %499 = vst [vmem:[#allocation3 + $0x18] sm:$0xf0] %v487
      %500 = vst [vmem:[#allocation3 + $0x20] sm:$0xf0] %v488
      %501 = vst [vmem:[#allocation3 + $0x28] sm:$0xf0] %v489
      %v502 = vld [vmem:[#allocation2] sm:$0xff]
      %v503 = vld [vmem:[#allocation2 + $0x8] sm:$0xff]
      %v504 = vld [vmem:[#allocation2 + $0x10] sm:$0xff]
      %v505 = vld [vmem:[#allocation2 + $0x18] sm:$0xf]
      %v510 = vcombine.high %v502, %v502
      %v511 = vcombine.high %v503, %v503
      %v512 = vcombine.high %v504, %v504
      %513 = vrot.lane.b32.xlu0 %v502, 27
      %v514 = vpop.permute.xlu0 %513
      %515 = vrot.lane.b32.xlu0 %v510, 27
      %v516 = vpop.permute.xlu0 %515
      %517 = vrot.lane.b32.xlu0 %v503, 27
      %v518 = vpop.permute.xlu0 %517
      %519 = vrot.lane.b32.xlu0 %v511, 27
      %v520 = vpop.permute.xlu0 %519
      %521 = vrot.lane.b32.xlu0 %v504, 27
      %v522 = vpop.permute.xlu0 %521
      %523 = vrot.lane.b32.xlu0 %v512, 27
      %v524 = vpop.permute.xlu0 %523
      %525 = vrot.lane.b32.xlu0 %v505, 27
      %v526 = vpop.permute.xlu0 %525
      %vm527 = vcmask 220160
      %v528 = vsel %vm527, %v514, %v516
      %v529 = vsel %vm527, %v516, %v518
      %v530 = vsel %vm527, %v518, %v520
      %v531 = vsel %vm527, %v520, %v522
      %v532 = vsel %vm527, %v522, %v524
      %v533 = vsel %vm527, %v524, %v526
      %540 = vst [vmem:[#allocation3 + $0x30] sm:$0xf] %v528
      %541 = vst [vmem:[#allocation3 + $0x38] sm:$0xf] %v529
      %542 = vst [vmem:[#allocation3 + $0x40] sm:$0xf] %v530
      %543 = vst [vmem:[#allocation3 + $0x48] sm:$0xf] %v531
      %544 = vst [vmem:[#allocation3 + $0x50] sm:$0xf] %v532
      %545 = vst [vmem:[#allocation3 + $0x58] sm:$0xf] %v533
      %v546 = vld [vmem:[#allocation2 + $0x4] sm:$0xff]
      %v547 = vld [vmem:[#allocation2 + $0xc] sm:$0xff]
      %v548 = vld [vmem:[#allocation2 + $0x14] sm:$0xff]
      %v549 = vld [vmem:[#allocation2 + $0x1c] sm:$0xf]
      %v554 = vcombine.low %v546, %v546
      %v555 = vcombine.low %v547, %v547
      %v556 = vcombine.low %v548, %v548
      %v557 = vcombine.low %v549, %v549
      %558 = vrot.lane.b32.xlu0 %v554, 125
      %v559 = vpop.permute.xlu0 %558
      %560 = vrot.lane.b32.xlu0 %v546, 125
      %v561 = vpop.permute.xlu0 %560
      %562 = vrot.lane.b32.xlu0 %v555, 125
      %v563 = vpop.permute.xlu0 %562
      %564 = vrot.lane.b32.xlu0 %v547, 125
      %v565 = vpop.permute.xlu0 %564
      %566 = vrot.lane.b32.xlu0 %v556, 125
      %v567 = vpop.permute.xlu0 %566
      %568 = vrot.lane.b32.xlu0 %v548, 125
      %v569 = vpop.permute.xlu0 %568
      %570 = vrot.lane.b32.xlu0 %v557, 125
      %v571 = vpop.permute.xlu0 %570
      %vm572 = vcmask 1022976
      %v573 = vsel %vm572, %v559, %v561
      %v574 = vsel %vm572, %v561, %v563
      %v575 = vsel %vm572, %v563, %v565
      %v576 = vsel %vm572, %v565, %v567
      %v577 = vsel %vm572, %v567, %v569
      %v578 = vsel %vm572, %v569, %v571
      %585 = vst [vmem:[#allocation3 + $0x30] sm:$0xf0] %v573
      %586 = vst [vmem:[#allocation3 + $0x38] sm:$0xf0] %v574
      %587 = vst [vmem:[#allocation3 + $0x40] sm:$0xf0] %v575
      %588 = vst [vmem:[#allocation3 + $0x48] sm:$0xf0] %v576
      %589 = vst [vmem:[#allocation3 + $0x50] sm:$0xf0] %v577
      %590 = vst [vmem:[#allocation3 + $0x58] sm:$0xf0] %v578
      %v591 = vld [vmem:[#allocation2 + $0x4] sm:$0xff]
      %v592 = vld [vmem:[#allocation2 + $0xc] sm:$0xff]
      %v593 = vld [vmem:[#allocation2 + $0x14] sm:$0xff]
      %v594 = vld [vmem:[#allocation2 + $0x1c] sm:$0xf]
      %v599 = vcombine.high %v591, %v591
      %v600 = vcombine.high %v592, %v592
      %v601 = vcombine.high %v593, %v593
      %602 = vrot.lane.b32.xlu0 %v591, 124
      %v603 = vpop.permute.xlu0 %602
      %604 = vrot.lane.b32.xlu0 %v599, 124
      %v605 = vpop.permute.xlu0 %604
      %606 = vrot.lane.b32.xlu0 %v592, 124
      %v607 = vpop.permute.xlu0 %606
      %608 = vrot.lane.b32.xlu0 %v600, 124
      %v609 = vpop.permute.xlu0 %608
      %610 = vrot.lane.b32.xlu0 %v593, 124
      %v611 = vpop.permute.xlu0 %610
      %612 = vrot.lane.b32.xlu0 %v601, 124
      %v613 = vpop.permute.xlu0 %612
      %614 = vrot.lane.b32.xlu0 %v594, 124
      %v615 = vpop.permute.xlu0 %614
      %vm616 = vcmask 1014784
      %v617 = vsel %vm616, %v603, %v605
      %v618 = vsel %vm616, %v605, %v607
      %v619 = vsel %vm616, %v607, %v609
      %v620 = vsel %vm616, %v609, %v611
      %v621 = vsel %vm616, %v611, %v613
      %v622 = vsel %vm616, %v613, %v615
      %629 = vst [vmem:[#allocation3 + $0x60] sm:$0xf] %v617
      %630 = vst [vmem:[#allocation3 + $0x68] sm:$0xf] %v618
      %631 = vst [vmem:[#allocation3 + $0x70] sm:$0xf] %v619
      %632 = vst [vmem:[#allocation3 + $0x78] sm:$0xf] %v620
      %633 = vst [vmem:[#allocation3 + $0x80] sm:$0xf] %v621
      %634 = vst [vmem:[#allocation3 + $0x88] sm:$0xf] %v622
      %v635 = vld [vmem:[#allocation2 + $0x4] sm:$0xff]
      %v636 = vld [vmem:[#allocation2 + $0xc] sm:$0xff]
      %v637 = vld [vmem:[#allocation2 + $0x14] sm:$0xff]
      %v638 = vld [vmem:[#allocation2 + $0x1c] sm:$0xf]
      %v643 = vcombine.low %v635, %v635
      %v644 = vcombine.low %v636, %v636
      %v645 = vcombine.low %v637, %v637
      %v646 = vcombine.low %v638, %v638
      %647 = vrot.lane.b32.xlu0 %v643, 123
      %v648 = vpop.permute.xlu0 %647
      %649 = vrot.lane.b32.xlu0 %v635, 123
      %v650 = vpop.permute.xlu0 %649
      %651 = vrot.lane.b32.xlu0 %v644, 123
      %v652 = vpop.permute.xlu0 %651
      %653 = vrot.lane.b32.xlu0 %v636, 123
      %v654 = vpop.permute.xlu0 %653
      %655 = vrot.lane.b32.xlu0 %v645, 123
      %v656 = vpop.permute.xlu0 %655
      %657 = vrot.lane.b32.xlu0 %v637, 123
      %v658 = vpop.permute.xlu0 %657
      %659 = vrot.lane.b32.xlu0 %v646, 123
      %v660 = vpop.permute.xlu0 %659
      %vm661 = vcmask 1006592
      %v662 = vsel %vm661, %v648, %v650
      %v663 = vsel %vm661, %v650, %v652
      %v664 = vsel %vm661, %v652, %v654
      %v665 = vsel %vm661, %v654, %v656
      %v666 = vsel %vm661, %v656, %v658
      %v667 = vsel %vm661, %v658, %v660
      %674 = vst [vmem:[#allocation3 + $0x60] sm:$0xf0] %v662
      %675 = vst [vmem:[#allocation3 + $0x68] sm:$0xf0] %v663
      %676 = vst [vmem:[#allocation3 + $0x70] sm:$0xf0] %v664
      %677 = vst [vmem:[#allocation3 + $0x78] sm:$0xf0] %v665
      %678 = vst [vmem:[#allocation3 + $0x80] sm:$0xf0] %v666
      %679 = vst [vmem:[#allocation3 + $0x88] sm:$0xf0] %v667
      %v680 = vld [vmem:[#allocation2 + $0x4] sm:$0xff]
      %v681 = vld [vmem:[#allocation2 + $0xc] sm:$0xff]
      %v682 = vld [vmem:[#allocation2 + $0x14] sm:$0xff]
      %v683 = vld [vmem:[#allocation2 + $0x1c] sm:$0xf]
      %v688 = vcombine.high %v680, %v680
      %v689 = vcombine.high %v681, %v681
      %v690 = vcombine.high %v682, %v682
      %691 = vrot.lane.b32.xlu0 %v680, 93
      %v692 = vpop.permute.xlu0 %691
      %693 = vrot.lane.b32.xlu0 %v688, 93
      %v694 = vpop.permute.xlu0 %693
      %695 = vrot.lane.b32.xlu0 %v681, 93
      %v696 = vpop.permute.xlu0 %695
      %697 = vrot.lane.b32.xlu0 %v689, 93
      %v698 = vpop.permute.xlu0 %697
      %699 = vrot.lane.b32.xlu0 %v682, 93
      %v700 = vpop.permute.xlu0 %699
      %701 = vrot.lane.b32.xlu0 %v690, 93
      %v702 = vpop.permute.xlu0 %701
      %703 = vrot.lane.b32.xlu0 %v683, 93
      %v704 = vpop.permute.xlu0 %703
      %vm705 = vcmask 760832
      %v706 = vsel %vm705, %v692, %v694
      %v707 = vsel %vm705, %v694, %v696
      %v708 = vsel %vm705, %v696, %v698
      %v709 = vsel %vm705, %v698, %v700
      %v710 = vsel %vm705, %v700, %v702
      %v711 = vsel %vm705, %v702, %v704
      %718 = vst [vmem:[#allocation3 + $0x90] sm:$0xf] %v706
      %719 = vst [vmem:[#allocation3 + $0x98] sm:$0xf] %v707
      %720 = vst [vmem:[#allocation3 + $0xa0] sm:$0xf] %v708
      %721 = vst [vmem:[#allocation3 + $0xa8] sm:$0xf] %v709
      %722 = vst [vmem:[#allocation3 + $0xb0] sm:$0xf] %v710
      %723 = vst [vmem:[#allocation3 + $0xb8] sm:$0xf] %v711
      %v724 = vld [vmem:[#allocation2 + $0x4] sm:$0xff]
      %v725 = vld [vmem:[#allocation2 + $0xc] sm:$0xff]
      %v726 = vld [vmem:[#allocation2 + $0x14] sm:$0xff]
      %v727 = vld [vmem:[#allocation2 + $0x1c] sm:$0xf]
      %v732 = vcombine.low %v724, %v724
      %v733 = vcombine.low %v725, %v725
      %v734 = vcombine.low %v726, %v726
      %v735 = vcombine.low %v727, %v727
      %736 = vrot.lane.b32.xlu0 %v732, 92
      %v737 = vpop.permute.xlu0 %736
      %738 = vrot.lane.b32.xlu0 %v724, 92
      %v739 = vpop.permute.xlu0 %738
      %740 = vrot.lane.b32.xlu0 %v733, 92
      %v741 = vpop.permute.xlu0 %740
      %742 = vrot.lane.b32.xlu0 %v725, 92
      %v743 = vpop.permute.xlu0 %742
      %744 = vrot.lane.b32.xlu0 %v734, 92
      %v745 = vpop.permute.xlu0 %744
      %746 = vrot.lane.b32.xlu0 %v726, 92
      %v747 = vpop.permute.xlu0 %746
      %748 = vrot.lane.b32.xlu0 %v735, 92
      %v749 = vpop.permute.xlu0 %748
      %vm750 = vcmask 752640
      %v751 = vsel %vm750, %v737, %v739
      %v752 = vsel %vm750, %v739, %v741
      %v753 = vsel %vm750, %v741, %v743
      %v754 = vsel %vm750, %v743, %v745
      %v755 = vsel %vm750, %v745, %v747
      %v756 = vsel %vm750, %v747, %v749
      %763 = vst [vmem:[#allocation3 + $0x90] sm:$0xf0] %v751
      %764 = vst [vmem:[#allocation3 + $0x98] sm:$0xf0] %v752
      %765 = vst [vmem:[#allocation3 + $0xa0] sm:$0xf0] %v753
      %766 = vst [vmem:[#allocation3 + $0xa8] sm:$0xf0] %v754
      %767 = vst [vmem:[#allocation3 + $0xb0] sm:$0xf0] %v755
      %768 = vst [vmem:[#allocation3 + $0xb8] sm:$0xf0] %v756
      %v769 = vld [vmem:[#allocation2 + $0x4] sm:$0xff]
      %v770 = vld [vmem:[#allocation2 + $0xc] sm:$0xff]
      %v771 = vld [vmem:[#allocation2 + $0x14] sm:$0xff]
      %v772 = vld [vmem:[#allocation2 + $0x1c] sm:$0xf]
      %v777 = vcombine.high %v769, %v769
      %v778 = vcombine.high %v770, %v770
      %v779 = vcombine.high %v771, %v771
      %780 = vrot.lane.b32.xlu0 %v769, 91
      %v781 = vpop.permute.xlu0 %780
      %782 = vrot.lane.b32.xlu0 %v777, 91
      %v783 = vpop.permute.xlu0 %782
      %784 = vrot.lane.b32.xlu0 %v770, 91
      %v785 = vpop.permute.xlu0 %784
      %786 = vrot.lane.b32.xlu0 %v778, 91
      %v787 = vpop.permute.xlu0 %786
      %788 = vrot.lane.b32.xlu0 %v771, 91
      %v789 = vpop.permute.xlu0 %788
      %790 = vrot.lane.b32.xlu0 %v779, 91
      %v791 = vpop.permute.xlu0 %790
      %792 = vrot.lane.b32.xlu0 %v772, 91
      %v793 = vpop.permute.xlu0 %792
      %vm794 = vcmask 744448
      %v795 = vsel %vm794, %v781, %v783
      %v796 = vsel %vm794, %v783, %v785
      %v797 = vsel %vm794, %v785, %v787
      %v798 = vsel %vm794, %v787, %v789
      %v799 = vsel %vm794, %v789, %v791
      %v800 = vsel %vm794, %v791, %v793
      %807 = vst [vmem:[#allocation3 + $0xc0] sm:$0xf] %v795
      %808 = vst [vmem:[#allocation3 + $0xc8] sm:$0xf] %v796
      %809 = vst [vmem:[#allocation3 + $0xd0] sm:$0xf] %v797
      %810 = vst [vmem:[#allocation3 + $0xd8] sm:$0xf] %v798
      %811 = vst [vmem:[#allocation3 + $0xe0] sm:$0xf] %v799
      %812 = vst [vmem:[#allocation3 + $0xe8] sm:$0xf] %v800
      %v813 = vld [vmem:[%s2] sm:$0xf]
      %v814 = vld [vmem:[#allocation3] sm:$0xff]
      %v815 = vld [vmem:[#allocation3 + $0x8] sm:$0xff]
      %v816 = vld [vmem:[#allocation3 + $0x10] sm:$0xff]
      %v817 = vld [vmem:[#allocation3 + $0x18] sm:$0xff]
      %v818 = vld [vmem:[#allocation3 + $0x20] sm:$0xff]
      %v819 = vld [vmem:[#allocation3 + $0x28] sm:$0xff]
      %v820 = vld [vmem:[#allocation3 + $0x30] sm:$0xff]
      %v821 = vld [vmem:[#allocation3 + $0x38] sm:$0xff]
      %v822 = vld [vmem:[#allocation3 + $0x40] sm:$0xff]
      %v823 = vld [vmem:[#allocation3 + $0x48] sm:$0xff]
      %v824 = vld [vmem:[#allocation3 + $0x50] sm:$0xff]
      %v825 = vld [vmem:[#allocation3 + $0x58] sm:$0xff]
      %v826 = vld [vmem:[#allocation3 + $0x60] sm:$0xff]
      %v827 = vld [vmem:[#allocation3 + $0x68] sm:$0xff]
      %v828 = vld [vmem:[#allocation3 + $0x70] sm:$0xff]
      %v829 = vld [vmem:[#allocation3 + $0x78] sm:$0xff]
      %v830 = vld [vmem:[#allocation3 + $0x80] sm:$0xff]
      %v831 = vld [vmem:[#allocation3 + $0x88] sm:$0xff]
      %v832 = vld [vmem:[#allocation3 + $0x90] sm:$0xff]
      %v833 = vld [vmem:[#allocation3 + $0x98] sm:$0xff]
      %v834 = vld [vmem:[#allocation3 + $0xa0] sm:$0xff]
      %v835 = vld [vmem:[#allocation3 + $0xa8] sm:$0xff]
      %v836 = vld [vmem:[#allocation3 + $0xb0] sm:$0xff]
      %v837 = vld [vmem:[#allocation3 + $0xb8] sm:$0xff]
      %v838 = vld [vmem:[#allocation3 + $0xc0] sm:$0xf]
      %v839 = vld [vmem:[#allocation3 + $0xc8] sm:$0xf]
      %v840 = vld [vmem:[#allocation3 + $0xd0] sm:$0xf]
      %v841 = vld [vmem:[#allocation3 + $0xd8] sm:$0xf]
      %v842 = vld [vmem:[#allocation3 + $0xe0] sm:$0xf]
      %v843 = vld [vmem:[#allocation3 + $0xe8] sm:$0xf]
      %v844 = vld [vmem:[%s3] sm:$0xf]
      %846 = vset.pattern.permute.xlu0 0
      %847 = vperm.xlu0 %846, %v844
      %v848 = vpop.permute.xlu0 %847
      %vm850 = vcmask 293888
      %v852 = vsel %vm850, %v813, 0
      %vm854 = vcmask 1043456
      %v856 = vsel %vm854, %v838, 0
      %v859 = vsel %vm854, %v839, 0
      %v862 = vsel %vm854, %v840, 0
      %v865 = vsel %vm854, %v841, 0
      %v868 = vsel %vm854, %v842, 0
      %v871 = vsel %vm854, %v843, 0
      %873 = vmatprep.subr.mxu0 %v815
      %874 = vmatpush1.msra.mxu0 %v814
      %875 = vmatprep.subr.mxu0 %v821
      %876 = vmatpush1.msra.mxu0 %v820
      %877 = vmatprep.subr.mxu0 %v827
      %878 = vmatpush1.msra.mxu0 %v826
      %879 = vmatprep.subr.mxu0 %v833
      %880 = vmatpush1.msra.mxu0 %v832
      %881 = vmatprep.subr.mxu0 %v859
      %882 = vmatpush1.msra.mxu0 %v856
      %883 = vmatprep.subr.mxu0 0.0
      %884 = vmatpush1.msra.mxu0 0.0
      %885 = vmatprep.subr.mxu0 0.0
      %886 = vmatpush1.msra.mxu0 0.0
      %887 = vmatprep.subr.mxu0 0.0
      %888 = vmatpush1.msra.mxu0 0.0
      %889 = vmatprep.subr.mxu0 0.0
      %890 = vmatpush1.msra.mxu0 0.0
      %891 = vmatprep.subr.mxu0 0.0
      %892 = vmatpush1.msra.mxu0 0.0
      %893 = vmatprep.subr.mxu0 0.0
      %894 = vmatpush1.msra.mxu0 0.0
      %895 = vmatprep.subr.mxu0 0.0
      %896 = vmatpush1.msra.mxu0 0.0
      %897 = vmatprep.subr.mxu0 0.0
      %898 = vmatpush1.msra.mxu0 0.0
      %899 = vmatprep.subr.mxu0 0.0
      %900 = vmatpush1.msra.mxu0 0.0
      %901 = vmatprep.subr.mxu0 0.0
      %902 = vmatpush1.msra.mxu0 0.0
      %903 = vmatprep.subr.mxu0 0.0
      %904 = vmatpush1.msra.mxu0 0.0
      %905 = vmatprep.subr.mxu0 0.0
      %906 = vmatpush1.msra.mxu0 0.0
      %907 = vmatprep.subr.mxu0 0.0
      %908 = vmatpush1.msra.mxu0 0.0
      %909 = vmatprep.subr.mxu0 0.0
      %910 = vmatpush1.msra.mxu0 0.0
      %911 = vmatprep.subr.mxu0 0.0
      %912 = vmatpush1.msra.mxu0 0.0
      %913 = vmatprep.subr.mxu0 0.0
      %914 = vmatpush1.msra.mxu0 0.0
      %915 = vmatprep.subr.mxu0 0.0
      %916 = vmatpush1.msra.mxu0 0.0
      %917 = vmatprep.subr.mxu0 0.0
      %918 = vmatpush1.msra.mxu0 0.0
      %919 = vmatprep.subr.mxu0 0.0
      %920 = vmatpush1.msra.mxu0 0.0
      %921 = vmatprep.subr.mxu0 0.0
      %922 = vmatpush1.msra.mxu0 0.0
      %923 = vmatprep.subr.mxu0 0.0
      %924 = vmatpush1.msra.mxu0 0.0
      %925 = vmatprep.subr.mxu0 0.0
      %926 = vmatpush1.msra.mxu0 0.0
      %927 = vmatprep.subr.mxu0 0.0
      %928 = vmatpush1.msra.mxu0 0.0
      %929 = vmatprep.subr.mxu0 0.0
      %930 = vmatpush1.msra.mxu0 0.0
      %931 = vmatprep.subr.mxu0 0.0
      %932 = vmatpush1.msra.mxu0 0.0
      %933 = vmatprep.subr.mxu0 0.0
      %934 = vmatpush1.msra.mxu0 0.0
      %935 = vmatprep.subr.mxu0 0.0
      %936 = vmatpush1.msra.mxu0 0.0
      %937 = vmatprep.mubr.f32.mxu0 0.0
      %938 = vmatmul.mubr.f32.gmra.mrb[0].mxu0 %v852
      %v939 = vpop.f32.mrb[0].mxu0
      %v940 = vadd.f32 %v848, %v939
      %v941 = vpop.f32.mrb[0].mxu0
      %v942 = vadd.f32 %v848, %v941
      %943 = vdwg.mxu0
      %944 = vmatprep.subr.mxu0 %v817
      %945 = vmatpush1.msra.mxu0 %v816
      %946 = vmatprep.subr.mxu0 %v823
      %947 = vmatpush1.msra.mxu0 %v822
      %948 = vmatprep.subr.mxu0 %v829
      %949 = vmatpush1.msra.mxu0 %v828
      %950 = vmatprep.subr.mxu0 %v835
      %951 = vmatpush1.msra.mxu0 %v834
      %952 = vmatprep.subr.mxu0 %v865
      %953 = vmatpush1.msra.mxu0 %v862
      %954 = vmatprep.subr.mxu0 0.0
      %955 = vmatpush1.msra.mxu0 0.0
      %956 = vmatprep.subr.mxu0 0.0
      %957 = vmatpush1.msra.mxu0 0.0
      %958 = vmatprep.subr.mxu0 0.0
      %959 = vmatpush1.msra.mxu0 0.0
      %960 = vmatprep.subr.mxu0 0.0
      %961 = vmatpush1.msra.mxu0 0.0
      %962 = vmatprep.subr.mxu0 0.0
      %963 = vmatpush1.msra.mxu0 0.0
      %964 = vmatprep.subr.mxu0 0.0
      %965 = vmatpush1.msra.mxu0 0.0
      %966 = vmatprep.subr.mxu0 0.0
      %967 = vmatpush1.msra.mxu0 0.0
      %968 = vmatprep.subr.mxu0 0.0
      %969 = vmatpush1.msra.mxu0 0.0
      %970 = vmatprep.subr.mxu0 0.0
      %971 = vmatpush1.msra.mxu0 0.0
      %972 = vmatprep.subr.mxu0 0.0
      %973 = vmatpush1.msra.mxu0 0.0
      %974 = vmatprep.subr.mxu0 0.0
      %975 = vmatpush1.msra.mxu0 0.0
      %976 = vmatprep.subr.mxu0 0.0
      %977 = vmatpush1.msra.mxu0 0.0
      %978 = vmatprep.subr.mxu0 0.0
      %979 = vmatpush1.msra.mxu0 0.0
      %980 = vmatprep.subr.mxu0 0.0
      %981 = vmatpush1.msra.mxu0 0.0
      %982 = vmatprep.subr.mxu0 0.0
      %983 = vmatpush1.msra.mxu0 0.0
      %984 = vmatprep.subr.mxu0 0.0
      %985 = vmatpush1.msra.mxu0 0.0
      %986 = vmatprep.subr.mxu0 0.0
      %987 = vmatpush1.msra.mxu0 0.0
      %988 = vmatprep.subr.mxu0 0.0
      %989 = vmatpush1.msra.mxu0 0.0
      %990 = vmatprep.subr.mxu0 0.0
      %991 = vmatpush1.msra.mxu0 0.0
      %992 = vmatprep.subr.mxu0 0.0
      %993 = vmatpush1.msra.mxu0 0.0
      %994 = vmatprep.subr.mxu0 0.0
      %995 = vmatpush1.msra.mxu0 0.0
      %996 = vmatprep.subr.mxu0 0.0
      %997 = vmatpush1.msra.mxu0 0.0
      %998 = vmatprep.subr.mxu0 0.0
      %999 = vmatpush1.msra.mxu0 0.0
      %1000 = vmatprep.subr.mxu0 0.0
      %1001 = vmatpush1.msra.mxu0 0.0
      %1002 = vmatprep.subr.mxu0 0.0
      %1003 = vmatpush1.msra.mxu0 0.0
      %1004 = vmatprep.subr.mxu0 0.0
      %1005 = vmatpush1.msra.mxu0 0.0
      %1006 = vmatprep.subr.mxu0 0.0
      %1007 = vmatpush1.msra.mxu0 0.0
      %1008 = vmatprep.mubr.f32.mxu0 0.0
      %1009 = vmatmul.mubr.f32.gmra.mrb[0].mxu0 %v852
      %v1010 = vpop.f32.mrb[0].mxu0
      %v1011 = vadd.f32 %v848, %v1010
      %v1012 = vpop.f32.mrb[0].mxu0
      %v1013 = vadd.f32 %v848, %v1012
      %1014 = vdwg.mxu0
      %1015 = vmatprep.subr.mxu0 %v819
      %1016 = vmatpush1.msra.mxu0 %v818
      %1017 = vmatprep.subr.mxu0 %v825
      %1018 = vmatpush1.msra.mxu0 %v824
      %1019 = vmatprep.subr.mxu0 %v831
      %1020 = vmatpush1.msra.mxu0 %v830
      %1021 = vmatprep.subr.mxu0 %v837
      %1022 = vmatpush1.msra.mxu0 %v836
      %1023 = vmatprep.subr.mxu0 %v871
      %1024 = vmatpush1.msra.mxu0 %v868
      %1025 = vmatprep.subr.mxu0 0.0
      %1026 = vmatpush1.msra.mxu0 0.0
      %1027 = vmatprep.subr.mxu0 0.0
      %1028 = vmatpush1.msra.mxu0 0.0
      %1029 = vmatprep.subr.mxu0 0.0
      %1030 = vmatpush1.msra.mxu0 0.0
      %1031 = vmatprep.subr.mxu0 0.0
      %1032 = vmatpush1.msra.mxu0 0.0
      %1033 = vmatprep.subr.mxu0 0.0
      %1034 = vmatpush1.msra.mxu0 0.0
      %1035 = vmatprep.subr.mxu0 0.0
      %1036 = vmatpush1.msra.mxu0 0.0
      %1037 = vmatprep.subr.mxu0 0.0
      %1038 = vmatpush1.msra.mxu0 0.0
      %1039 = vmatprep.subr.mxu0 0.0
      %1040 = vmatpush1.msra.mxu0 0.0
      %1041 = vmatprep.subr.mxu0 0.0
      %1042 = vmatpush1.msra.mxu0 0.0
      %1043 = vmatprep.subr.mxu0 0.0
      %1044 = vmatpush1.msra.mxu0 0.0
      %1045 = vmatprep.subr.mxu0 0.0
      %1046 = vmatpush1.msra.mxu0 0.0
      %1047 = vmatprep.subr.mxu0 0.0
      %1048 = vmatpush1.msra.mxu0 0.0
      %1049 = vmatprep.subr.mxu0 0.0
      %1050 = vmatpush1.msra.mxu0 0.0
      %1051 = vmatprep.subr.mxu0 0.0
      %1052 = vmatpush1.msra.mxu0 0.0
      %1053 = vmatprep.subr.mxu0 0.0
      %1054 = vmatpush1.msra.mxu0 0.0
      %1055 = vmatprep.subr.mxu0 0.0
      %1056 = vmatpush1.msra.mxu0 0.0
      %1057 = vmatprep.subr.mxu0 0.0
      %1058 = vmatpush1.msra.mxu0 0.0
      %1059 = vmatprep.subr.mxu0 0.0
      %1060 = vmatpush1.msra.mxu0 0.0
      %1061 = vmatprep.subr.mxu0 0.0
      %1062 = vmatpush1.msra.mxu0 0.0
      %1063 = vmatprep.subr.mxu0 0.0
      %1064 = vmatpush1.msra.mxu0 0.0
      %1065 = vmatprep.subr.mxu0 0.0
      %1066 = vmatpush1.msra.mxu0 0.0
      %1067 = vmatprep.subr.mxu0 0.0
      %1068 = vmatpush1.msra.mxu0 0.0
      %1069 = vmatprep.subr.mxu0 0.0
      %1070 = vmatpush1.msra.mxu0 0.0
      %1071 = vmatprep.subr.mxu0 0.0
      %1072 = vmatpush1.msra.mxu0 0.0
      %1073 = vmatprep.subr.mxu0 0.0
      %1074 = vmatpush1.msra.mxu0 0.0
      %1075 = vmatprep.subr.mxu0 0.0
      %1076 = vmatpush1.msra.mxu0 0.0
      %1077 = vmatprep.subr.mxu0 0.0
      %1078 = vmatpush1.msra.mxu0 0.0
      %1079 = vmatprep.mubr.f32.mxu0 0.0
      %1080 = vmatmul.mubr.f32.gmra.mrb[0].mxu0 %v852
      %v1081 = vpop.f32.mrb[0].mxu0
      %v1082 = vadd.f32 %v848, %v1081
      %v1083 = vpop.f32.mrb[0].mxu0
      %v1084 = vadd.f32 %v848, %v1083
      %1085 = vdwg.mxu0
      %v1086 = vmax.f32 %v940, 0.0
      %v1087 = vmax.f32 %v942, 0.0
      %v1088 = vmax.f32 %v1011, 0.0
      %v1089 = vmax.f32 %v1013, 0.0
      %v1090 = vmax.f32 %v1082, 0.0
      %v1091 = vmax.f32 %v1084, 0.0
      %v1093 = vlaneseq
      %v1094 = vshrl.u32 %v1093, 7
      %v1095 = vsub.s32 0, %v1094
      %v1096 = vrot.slane %v412, %v1095
      %v1097 = vlaneseq
      %v1098 = vshrl.u32 %v1097, 7
      %v1099 = vsub.s32 1, %v1098
      %v1100 = vrot.slane %v412, %v1099
      %v1101 = vlaneseq
      %v1102 = vshrl.u32 %v1101, 7
      %v1103 = vsub.s32 2, %v1102
      %v1104 = vrot.slane %v412, %v1103
      %v1105 = vlaneseq
      %v1106 = vshrl.u32 %v1105, 7
      %v1107 = vsub.s32 3, %v1106
      %v1108 = vrot.slane %v412, %v1107
      %v1109 = vlaneseq
      %v1110 = vshrl.u32 %v1109, 7
      %v1111 = vsub.s32 4, %v1110
      %v1112 = vrot.slane %v412, %v1111
      %v1113 = vlaneseq
      %v1114 = vshrl.u32 %v1113, 7
      %v1115 = vsub.s32 5, %v1114
      %v1116 = vrot.slane %v412, %v1115
      %v1123 = vmul.f32 %v1086, %v1096
      %v1124 = vmul.f32 %v1087, %v1100
      %v1125 = vmul.f32 %v1088, %v1104
      %v1126 = vmul.f32 %v1089, %v1108
      %v1127 = vmul.f32 %v1090, %v1112
      %v1128 = vmul.f32 %v1091, %v1116
      %v1135 = vcombine.low %v1123, %v1124
      %v1136 = vcombine.low %v1125, %v1126
      %v1137 = vcombine.low %v1127, %v1128
      %1138 = vrot.lane.b32.xlu0 %v1135, 4
      %v1139 = vpop.permute.xlu0 %1138
      %1140 = vrot.lane.b32.xlu0 %v1136, 4
      %v1141 = vpop.permute.xlu0 %1140
      %1142 = vrot.lane.b32.xlu0 %v1137, 4
      %v1143 = vpop.permute.xlu0 %1142
      %v1144 = vrot.slane %v1139, 4
      %v1145 = vrot.slane %v1141, 4
      %v1146 = vrot.slane %v1143, 4
      %vm1147 = vcmask 31744
      %v1148 = vsel %vm1147, %v1144, %v1139
      %v1149 = vsel %vm854, %v1144, %v1145
      %v1150 = vsel %vm1147, %v1149, %v1141
      %v1151 = vsel %vm854, %v1145, %v1146
      %v1152 = vsel %vm1147, %v1151, %v1143
      %vm1157 = vcmask 1043488
      %vm1158 = vcmask 1047556
      %vm1159 = vmor %vm1158, %vm1157
      %1160 = vst.msk [vmem:[#allocation2 + $0x4] sm:$0xff] %vm1159, %v1148
      %1161 = vst [vmem:[#allocation2 + $0xc] sm:$0xff] %v1150
      %1162 = vst [vmem:[#allocation2 + $0x14] sm:$0xff] %v1152
      %vm1163 = vcmask 27648
      %1164 = vst.msk [vmem:[#allocation2 + $0x1c] sm:$0xf] %vm1163, %v1146
      %v1165 = vld [vmem:[#allocation2] sm:$0xff]
      %v1166 = vld [vmem:[#allocation2 + $0x8] sm:$0xff]
      %v1167 = vld [vmem:[#allocation2 + $0x10] sm:$0xff]
      %v1168 = vld [vmem:[#allocation2 + $0x18] sm:$0xf]
      %v1173 = vcombine.high %v1165, %v1165
      %v1174 = vcombine.high %v1166, %v1166
      %v1175 = vcombine.high %v1167, %v1167
      %1176 = vrot.lane.b32.xlu0 %v1165, 62
      %v1177 = vpop.permute.xlu0 %1176
      %1178 = vrot.lane.b32.xlu0 %v1173, 62
      %v1179 = vpop.permute.xlu0 %1178
      %1180 = vrot.lane.b32.xlu0 %v1166, 62
      %v1181 = vpop.permute.xlu0 %1180
      %1182 = vrot.lane.b32.xlu0 %v1174, 62
      %v1183 = vpop.permute.xlu0 %1182
      %1184 = vrot.lane.b32.xlu0 %v1167, 62
      %v1185 = vpop.permute.xlu0 %1184
      %1186 = vrot.lane.b32.xlu0 %v1175, 62
      %v1187 = vpop.permute.xlu0 %1186
      %1188 = vrot.lane.b32.xlu0 %v1168, 62
      %v1189 = vpop.permute.xlu0 %1188
      %vm1190 = vcmask 506880
      %v1191 = vsel %vm1190, %v1177, %v1179
      %v1192 = vsel %vm1190, %v1179, %v1181
      %v1193 = vsel %vm1190, %v1181, %v1183
      %v1194 = vsel %vm1190, %v1183, %v1185
      %v1195 = vsel %vm1190, %v1185, %v1187
      %v1196 = vsel %vm1190, %v1187, %v1189
      %1203 = vst [vmem:[#allocation3] sm:$0xf] %v1191
      %1204 = vst [vmem:[#allocation3 + $0x8] sm:$0xf] %v1192
      %1205 = vst [vmem:[#allocation3 + $0x10] sm:$0xf] %v1193
      %1206 = vst [vmem:[#allocation3 + $0x18] sm:$0xf] %v1194
      %1207 = vst [vmem:[#allocation3 + $0x20] sm:$0xf] %v1195
      %1208 = vst [vmem:[#allocation3 + $0x28] sm:$0xf] %v1196
      %v1209 = vld [vmem:[#allocation2] sm:$0xff]
      %v1210 = vld [vmem:[#allocation2 + $0x8] sm:$0xff]
      %v1211 = vld [vmem:[#allocation2 + $0x10] sm:$0xff]
      %v1212 = vld [vmem:[#allocation2 + $0x18] sm:$0xf]
      %v1217 = vcombine.low %v1209, %v1209
      %v1218 = vcombine.low %v1210, %v1210
      %v1219 = vcombine.low %v1211, %v1211
      %v1220 = vcombine.low %v1212, %v1212
      %1221 = vrot.lane.b32.xlu0 %v1217, 60
      %v1222 = vpop.permute.xlu0 %1221
      %1223 = vrot.lane.b32.xlu0 %v1209, 60
      %v1224 = vpop.permute.xlu0 %1223
      %1225 = vrot.lane.b32.xlu0 %v1218, 60
      %v1226 = vpop.permute.xlu0 %1225
      %1227 = vrot.lane.b32.xlu0 %v1210, 60
      %v1228 = vpop.permute.xlu0 %1227
      %1229 = vrot.lane.b32.xlu0 %v1219, 60
      %v1230 = vpop.permute.xlu0 %1229
      %1231 = vrot.lane.b32.xlu0 %v1211, 60
      %v1232 = vpop.permute.xlu0 %1231
      %1233 = vrot.lane.b32.xlu0 %v1220, 60
      %v1234 = vpop.permute.xlu0 %1233
      %vm1235 = vcmask 490496
      %v1236 = vsel %vm1235, %v1222, %v1224
      %v1237 = vsel %vm1235, %v1224, %v1226
      %v1238 = vsel %vm1235, %v1226, %v1228
      %v1239 = vsel %vm1235, %v1228, %v1230
      %v1240 = vsel %vm1235, %v1230, %v1232
      %v1241 = vsel %vm1235, %v1232, %v1234
      %1248 = vst [vmem:[#allocation3] sm:$0xf0] %v1236
      %1249 = vst [vmem:[#allocation3 + $0x8] sm:$0xf0] %v1237
      %1250 = vst [vmem:[#allocation3 + $0x10] sm:$0xf0] %v1238
      %1251 = vst [vmem:[#allocation3 + $0x18] sm:$0xf0] %v1239
      %1252 = vst [vmem:[#allocation3 + $0x20] sm:$0xf0] %v1240
      %1253 = vst [vmem:[#allocation3 + $0x28] sm:$0xf0] %v1241
      %v1254 = vld [vmem:[#allocation2] sm:$0xff]
      %v1255 = vld [vmem:[#allocation2 + $0x8] sm:$0xff]
      %v1256 = vld [vmem:[#allocation2 + $0x10] sm:$0xff]
      %v1257 = vld [vmem:[#allocation2 + $0x18] sm:$0xf]
      %v1262 = vcombine.high %v1254, %v1254
      %v1263 = vcombine.high %v1255, %v1255
      %v1264 = vcombine.high %v1256, %v1256
      %1265 = vrot.lane.b32.xlu0 %v1254, 58
      %v1266 = vpop.permute.xlu0 %1265
      %1267 = vrot.lane.b32.xlu0 %v1262, 58
      %v1268 = vpop.permute.xlu0 %1267
      %1269 = vrot.lane.b32.xlu0 %v1255, 58
      %v1270 = vpop.permute.xlu0 %1269
      %1271 = vrot.lane.b32.xlu0 %v1263, 58
      %v1272 = vpop.permute.xlu0 %1271
      %1273 = vrot.lane.b32.xlu0 %v1256, 58
      %v1274 = vpop.permute.xlu0 %1273
      %1275 = vrot.lane.b32.xlu0 %v1264, 58
      %v1276 = vpop.permute.xlu0 %1275
      %1277 = vrot.lane.b32.xlu0 %v1257, 58
      %v1278 = vpop.permute.xlu0 %1277
      %vm1279 = vcmask 474112
      %v1280 = vsel %vm1279, %v1266, %v1268
      %v1281 = vsel %vm1279, %v1268, %v1270
      %v1282 = vsel %vm1279, %v1270, %v1272
      %v1283 = vsel %vm1279, %v1272, %v1274
      %v1284 = vsel %vm1279, %v1274, %v1276
      %v1285 = vsel %vm1279, %v1276, %v1278
      %1292 = vst [vmem:[#allocation3 + $0x30] sm:$0xf] %v1280
      %1293 = vst [vmem:[#allocation3 + $0x38] sm:$0xf] %v1281
      %1294 = vst [vmem:[#allocation3 + $0x40] sm:$0xf] %v1282
      %1295 = vst [vmem:[#allocation3 + $0x48] sm:$0xf] %v1283
      %1296 = vst [vmem:[#allocation3 + $0x50] sm:$0xf] %v1284
      %1297 = vst [vmem:[#allocation3 + $0x58] sm:$0xf] %v1285
      %v1298 = vld [vmem:[#allocation2 + $0x4] sm:$0xff]
      %v1299 = vld [vmem:[#allocation2 + $0xc] sm:$0xff]
      %v1300 = vld [vmem:[#allocation2 + $0x14] sm:$0xff]
      %v1301 = vld [vmem:[#allocation2 + $0x1c] sm:$0xf]
      %v1306 = vcombine.low %v1298, %v1298
      %v1307 = vcombine.low %v1299, %v1299
      %v1308 = vcombine.low %v1300, %v1300
      %v1309 = vcombine.low %v1301, %v1301
      %1310 = vrot.lane.b32.xlu0 %v1306, 126
      %v1311 = vpop.permute.xlu0 %1310
      %1312 = vrot.lane.b32.xlu0 %v1298, 126
      %v1313 = vpop.permute.xlu0 %1312
      %1314 = vrot.lane.b32.xlu0 %v1307, 126
      %v1315 = vpop.permute.xlu0 %1314
      %1316 = vrot.lane.b32.xlu0 %v1299, 126
      %v1317 = vpop.permute.xlu0 %1316
      %1318 = vrot.lane.b32.xlu0 %v1308, 126
      %v1319 = vpop.permute.xlu0 %1318
      %1320 = vrot.lane.b32.xlu0 %v1300, 126
      %v1321 = vpop.permute.xlu0 %1320
      %1322 = vrot.lane.b32.xlu0 %v1309, 126
      %v1323 = vpop.permute.xlu0 %1322
      %vm1324 = vcmask 1031168
      %v1325 = vsel %vm1324, %v1311, %v1313
      %v1326 = vsel %vm1324, %v1313, %v1315
      %v1327 = vsel %vm1324, %v1315, %v1317
      %v1328 = vsel %vm1324, %v1317, %v1319
      %v1329 = vsel %vm1324, %v1319, %v1321
      %v1330 = vsel %vm1324, %v1321, %v1323
      %1337 = vst [vmem:[#allocation3 + $0x30] sm:$0xf0] %v1325
      %1338 = vst [vmem:[#allocation3 + $0x38] sm:$0xf0] %v1326
      %1339 = vst [vmem:[#allocation3 + $0x40] sm:$0xf0] %v1327
      %1340 = vst [vmem:[#allocation3 + $0x48] sm:$0xf0] %v1328
      %1341 = vst [vmem:[#allocation3 + $0x50] sm:$0xf0] %v1329
      %1342 = vst [vmem:[#allocation3 + $0x58] sm:$0xf0] %v1330
      %v1343 = vld [vmem:[#allocation2 + $0x4] sm:$0xff]
      %v1344 = vld [vmem:[#allocation2 + $0xc] sm:$0xff]
      %v1345 = vld [vmem:[#allocation2 + $0x14] sm:$0xff]
      %v1346 = vld [vmem:[#allocation2 + $0x1c] sm:$0xf]
      %v1351 = vcombine.high %v1343, %v1343
      %v1352 = vcombine.high %v1344, %v1344
      %v1353 = vcombine.high %v1345, %v1345
      %1354 = vrot.lane.b32.xlu0 %v1343, 124
      %v1355 = vpop.permute.xlu0 %1354
      %1356 = vrot.lane.b32.xlu0 %v1351, 124
      %v1357 = vpop.permute.xlu0 %1356
      %1358 = vrot.lane.b32.xlu0 %v1344, 124
      %v1359 = vpop.permute.xlu0 %1358
      %1360 = vrot.lane.b32.xlu0 %v1352, 124
      %v1361 = vpop.permute.xlu0 %1360
      %1362 = vrot.lane.b32.xlu0 %v1345, 124
      %v1363 = vpop.permute.xlu0 %1362
      %1364 = vrot.lane.b32.xlu0 %v1353, 124
      %v1365 = vpop.permute.xlu0 %1364
      %1366 = vrot.lane.b32.xlu0 %v1346, 124
      %v1367 = vpop.permute.xlu0 %1366
      %v1368 = vsel %vm616, %v1355, %v1357
      %v1369 = vsel %vm616, %v1357, %v1359
      %v1370 = vsel %vm616, %v1359, %v1361
      %v1371 = vsel %vm616, %v1361, %v1363
      %v1372 = vsel %vm616, %v1363, %v1365
      %v1373 = vsel %vm616, %v1365, %v1367
      %1380 = vst [vmem:[#allocation3 + $0x60] sm:$0xf] %v1368
      %1381 = vst [vmem:[#allocation3 + $0x68] sm:$0xf] %v1369
      %1382 = vst [vmem:[#allocation3 + $0x70] sm:$0xf] %v1370
      %1383 = vst [vmem:[#allocation3 + $0x78] sm:$0xf] %v1371
      %1384 = vst [vmem:[#allocation3 + $0x80] sm:$0xf] %v1372
      %1385 = vst [vmem:[#allocation3 + $0x88] sm:$0xf] %v1373
      %v1386 = vld [vmem:[#allocation2 + $0x4] sm:$0xff]
      %v1387 = vld [vmem:[#allocation2 + $0xc] sm:$0xff]
      %v1388 = vld [vmem:[#allocation2 + $0x14] sm:$0xff]
      %v1389 = vld [vmem:[#allocation2 + $0x1c] sm:$0xf]
      %v1394 = vcombine.low %v1386, %v1386
      %v1395 = vcombine.low %v1387, %v1387
      %v1396 = vcombine.low %v1388, %v1388
      %v1397 = vcombine.low %v1389, %v1389
      %1398 = vrot.lane.b32.xlu0 %v1394, 122
      %v1399 = vpop.permute.xlu0 %1398
      %1400 = vrot.lane.b32.xlu0 %v1386, 122
      %v1401 = vpop.permute.xlu0 %1400
      %1402 = vrot.lane.b32.xlu0 %v1395, 122
      %v1403 = vpop.permute.xlu0 %1402
      %1404 = vrot.lane.b32.xlu0 %v1387, 122
      %v1405 = vpop.permute.xlu0 %1404
      %1406 = vrot.lane.b32.xlu0 %v1396, 122
      %v1407 = vpop.permute.xlu0 %1406
      %1408 = vrot.lane.b32.xlu0 %v1388, 122
      %v1409 = vpop.permute.xlu0 %1408
      %1410 = vrot.lane.b32.xlu0 %v1397, 122
      %v1411 = vpop.permute.xlu0 %1410
      %vm1412 = vcmask 998400
      %v1413 = vsel %vm1412, %v1399, %v1401
      %v1414 = vsel %vm1412, %v1401, %v1403
      %v1415 = vsel %vm1412, %v1403, %v1405
      %v1416 = vsel %vm1412, %v1405, %v1407
      %v1417 = vsel %vm1412, %v1407, %v1409
      %v1418 = vsel %vm1412, %v1409, %v1411
      %1425 = vst [vmem:[#allocation3 + $0x60] sm:$0xf0] %v1413
      %1426 = vst [vmem:[#allocation3 + $0x68] sm:$0xf0] %v1414
      %1427 = vst [vmem:[#allocation3 + $0x70] sm:$0xf0] %v1415
      %1428 = vst [vmem:[#allocation3 + $0x78] sm:$0xf0] %v1416
      %1429 = vst [vmem:[#allocation3 + $0x80] sm:$0xf0] %v1417
      %1430 = vst [vmem:[#allocation3 + $0x88] sm:$0xf0] %v1418
      %v1431 = vld [vmem:[#allocation2 + $0x4] sm:$0xff]
      %v1432 = vld [vmem:[#allocation2 + $0xc] sm:$0xff]
      %v1433 = vld [vmem:[#allocation2 + $0x14] sm:$0xff]
      %v1434 = vld [vmem:[#allocation2 + $0x1c] sm:$0xf]
      %v1439 = vcombine.high %v1431, %v1431
      %v1440 = vcombine.high %v1432, %v1432
      %v1441 = vcombine.high %v1433, %v1433
      %1442 = vrot.lane.b32.xlu0 %v1431, 62
      %v1443 = vpop.permute.xlu0 %1442
      %1444 = vrot.lane.b32.xlu0 %v1439, 62
      %v1445 = vpop.permute.xlu0 %1444
      %1446 = vrot.lane.b32.xlu0 %v1432, 62
      %v1447 = vpop.permute.xlu0 %1446
      %1448 = vrot.lane.b32.xlu0 %v1440, 62
      %v1449 = vpop.permute.xlu0 %1448
      %1450 = vrot.lane.b32.xlu0 %v1433, 62
      %v1451 = vpop.permute.xlu0 %1450
      %1452 = vrot.lane.b32.xlu0 %v1441, 62
      %v1453 = vpop.permute.xlu0 %1452
      %1454 = vrot.lane.b32.xlu0 %v1434, 62
      %v1455 = vpop.permute.xlu0 %1454
      %v1456 = vsel %vm1190, %v1443, %v1445
      %v1457 = vsel %vm1190, %v1445, %v1447
      %v1458 = vsel %vm1190, %v1447, %v1449
      %v1459 = vsel %vm1190, %v1449, %v1451
      %v1460 = vsel %vm1190, %v1451, %v1453
      %v1461 = vsel %vm1190, %v1453, %v1455
      %1468 = vst [vmem:[#allocation3 + $0x90] sm:$0xf] %v1456
      %1469 = vst [vmem:[#allocation3 + $0x98] sm:$0xf] %v1457
      %1470 = vst [vmem:[#allocation3 + $0xa0] sm:$0xf] %v1458
      %1471 = vst [vmem:[#allocation3 + $0xa8] sm:$0xf] %v1459
      %1472 = vst [vmem:[#allocation3 + $0xb0] sm:$0xf] %v1460
      %1473 = vst [vmem:[#allocation3 + $0xb8] sm:$0xf] %v1461
      %v1474 = vld [vmem:[#allocation2 + $0x4] sm:$0xff]
      %v1475 = vld [vmem:[#allocation2 + $0xc] sm:$0xff]
      %v1476 = vld [vmem:[#allocation2 + $0x14] sm:$0xff]
      %v1477 = vld [vmem:[#allocation2 + $0x1c] sm:$0xf]
      %v1482 = vcombine.low %v1474, %v1474
      %v1483 = vcombine.low %v1475, %v1475
      %v1484 = vcombine.low %v1476, %v1476
      %v1485 = vcombine.low %v1477, %v1477
      %1486 = vrot.lane.b32.xlu0 %v1482, 60
      %v1487 = vpop.permute.xlu0 %1486
      %1488 = vrot.lane.b32.xlu0 %v1474, 60
      %v1489 = vpop.permute.xlu0 %1488
      %1490 = vrot.lane.b32.xlu0 %v1483, 60
      %v1491 = vpop.permute.xlu0 %1490
      %1492 = vrot.lane.b32.xlu0 %v1475, 60
      %v1493 = vpop.permute.xlu0 %1492
      %1494 = vrot.lane.b32.xlu0 %v1484, 60
      %v1495 = vpop.permute.xlu0 %1494
      %1496 = vrot.lane.b32.xlu0 %v1476, 60
      %v1497 = vpop.permute.xlu0 %1496
      %1498 = vrot.lane.b32.xlu0 %v1485, 60
      %v1499 = vpop.permute.xlu0 %1498
      %v1500 = vsel %vm1235, %v1487, %v1489
      %v1501 = vsel %vm1235, %v1489, %v1491
      %v1502 = vsel %vm1235, %v1491, %v1493
      %v1503 = vsel %vm1235, %v1493, %v1495
      %v1504 = vsel %vm1235, %v1495, %v1497
      %v1505 = vsel %vm1235, %v1497, %v1499
      %1512 = vst [vmem:[#allocation3 + $0x90] sm:$0xf0] %v1500
      %1513 = vst [vmem:[#allocation3 + $0x98] sm:$0xf0] %v1501
      %1514 = vst [vmem:[#allocation3 + $0xa0] sm:$0xf0] %v1502
      %1515 = vst [vmem:[#allocation3 + $0xa8] sm:$0xf0] %v1503
      %1516 = vst [vmem:[#allocation3 + $0xb0] sm:$0xf0] %v1504
      %1517 = vst [vmem:[#allocation3 + $0xb8] sm:$0xf0] %v1505
      %v1518 = vld [vmem:[#allocation2 + $0x4] sm:$0xff]
      %v1519 = vld [vmem:[#allocation2 + $0xc] sm:$0xff]
      %v1520 = vld [vmem:[#allocation2 + $0x14] sm:$0xff]
      %v1521 = vld [vmem:[#allocation2 + $0x1c] sm:$0xf]
      %v1526 = vcombine.high %v1518, %v1518
      %v1527 = vcombine.high %v1519, %v1519
      %v1528 = vcombine.high %v1520, %v1520
      %1529 = vrot.lane.b32.xlu0 %v1518, 58
      %v1530 = vpop.permute.xlu0 %1529
      %1531 = vrot.lane.b32.xlu0 %v1526, 58
      %v1532 = vpop.permute.xlu0 %1531
      %1533 = vrot.lane.b32.xlu0 %v1519, 58
      %v1534 = vpop.permute.xlu0 %1533
      %1535 = vrot.lane.b32.xlu0 %v1527, 58
      %v1536 = vpop.permute.xlu0 %1535
      %1537 = vrot.lane.b32.xlu0 %v1520, 58
      %v1538 = vpop.permute.xlu0 %1537
      %1539 = vrot.lane.b32.xlu0 %v1528, 58
      %v1540 = vpop.permute.xlu0 %1539
      %1541 = vrot.lane.b32.xlu0 %v1521, 58
      %v1542 = vpop.permute.xlu0 %1541
      %v1543 = vsel %vm1279, %v1530, %v1532
      %v1544 = vsel %vm1279, %v1532, %v1534
      %v1545 = vsel %vm1279, %v1534, %v1536
      %v1546 = vsel %vm1279, %v1536, %v1538
      %v1547 = vsel %vm1279, %v1538, %v1540
      %v1548 = vsel %vm1279, %v1540, %v1542
      %1555 = vst [vmem:[#allocation3 + $0xc0] sm:$0xf] %v1543
      %1556 = vst [vmem:[#allocation3 + $0xc8] sm:$0xf] %v1544
      %1557 = vst [vmem:[#allocation3 + $0xd0] sm:$0xf] %v1545
      %1558 = vst [vmem:[#allocation3 + $0xd8] sm:$0xf] %v1546
      %1559 = vst [vmem:[#allocation3 + $0xe0] sm:$0xf] %v1547
      %1560 = vst [vmem:[#allocation3 + $0xe8] sm:$0xf] %v1548
      %v1561 = vld [vmem:[%s4] sm:$0xf]
      %v1562 = vld [vmem:[#allocation3] sm:$0xff]
      %v1563 = vld [vmem:[#allocation3 + $0x8] sm:$0xff]
      %v1564 = vld [vmem:[#allocation3 + $0x10] sm:$0xff]
      %v1565 = vld [vmem:[#allocation3 + $0x18] sm:$0xff]
      %v1566 = vld [vmem:[#allocation3 + $0x20] sm:$0xff]
      %v1567 = vld [vmem:[#allocation3 + $0x28] sm:$0xff]
      %v1568 = vld [vmem:[#allocation3 + $0x30] sm:$0xff]
      %v1569 = vld [vmem:[#allocation3 + $0x38] sm:$0xff]
      %v1570 = vld [vmem:[#allocation3 + $0x40] sm:$0xff]
      %v1571 = vld [vmem:[#allocation3 + $0x48] sm:$0xff]
      %v1572 = vld [vmem:[#allocation3 + $0x50] sm:$0xff]
      %v1573 = vld [vmem:[#allocation3 + $0x58] sm:$0xff]
      %v1574 = vld [vmem:[#allocation3 + $0x60] sm:$0xff]
      %v1575 = vld [vmem:[#allocation3 + $0x68] sm:$0xff]
      %v1576 = vld [vmem:[#allocation3 + $0x70] sm:$0xff]
      %v1577 = vld [vmem:[#allocation3 + $0x78] sm:$0xff]
      %v1578 = vld [vmem:[#allocation3 + $0x80] sm:$0xff]
      %v1579 = vld [vmem:[#allocation3 + $0x88] sm:$0xff]
      %v1580 = vld [vmem:[#allocation3 + $0x90] sm:$0xff]
      %v1581 = vld [vmem:[#allocation3 + $0x98] sm:$0xff]
      %v1582 = vld [vmem:[#allocation3 + $0xa0] sm:$0xff]
      %v1583 = vld [vmem:[#allocation3 + $0xa8] sm:$0xff]
      %v1584 = vld [vmem:[#allocation3 + $0xb0] sm:$0xff]
      %v1585 = vld [vmem:[#allocation3 + $0xb8] sm:$0xff]
      %v1586 = vld [vmem:[#allocation3 + $0xc0] sm:$0xf]
      %v1587 = vld [vmem:[#allocation3 + $0xc8] sm:$0xf]
      %v1588 = vld [vmem:[#allocation3 + $0xd0] sm:$0xf]
      %v1589 = vld [vmem:[#allocation3 + $0xd8] sm:$0xf]
      %v1590 = vld [vmem:[#allocation3 + $0xe0] sm:$0xf]
      %v1591 = vld [vmem:[#allocation3 + $0xe8] sm:$0xf]
      %v1592 = vld [vmem:[%s5] sm:$0xf]
      %1594 = vset.pattern.permute.xlu0 0
      %1595 = vperm.xlu0 %1594, %v1592
      %v1596 = vpop.permute.xlu0 %1595
      %v1599 = vsel %vm850, %v1561, 0
      %v1602 = vsel %vm854, %v1586, 0
      %v1605 = vsel %vm854, %v1587, 0
      %v1608 = vsel %vm854, %v1588, 0
      %v1611 = vsel %vm854, %v1589, 0
      %v1614 = vsel %vm854, %v1590, 0
      %v1617 = vsel %vm854, %v1591, 0
      %1619 = vmatprep.subr.mxu0 %v1563
      %1620 = vmatpush1.msra.mxu0 %v1562
      %1621 = vmatprep.subr.mxu0 %v1569
      %1622 = vmatpush1.msra.mxu0 %v1568
      %1623 = vmatprep.subr.mxu0 %v1575
      %1624 = vmatpush1.msra.mxu0 %v1574
      %1625 = vmatprep.subr.mxu0 %v1581
      %1626 = vmatpush1.msra.mxu0 %v1580
      %1627 = vmatprep.subr.mxu0 %v1605
      %1628 = vmatpush1.msra.mxu0 %v1602
      %1629 = vmatprep.subr.mxu0 0.0
      %1630 = vmatpush1.msra.mxu0 0.0
      %1631 = vmatprep.subr.mxu0 0.0
      %1632 = vmatpush1.msra.mxu0 0.0
      %1633 = vmatprep.subr.mxu0 0.0
      %1634 = vmatpush1.msra.mxu0 0.0
      %1635 = vmatprep.subr.mxu0 0.0
      %1636 = vmatpush1.msra.mxu0 0.0
      %1637 = vmatprep.subr.mxu0 0.0
      %1638 = vmatpush1.msra.mxu0 0.0
      %1639 = vmatprep.subr.mxu0 0.0
      %1640 = vmatpush1.msra.mxu0 0.0
      %1641 = vmatprep.subr.mxu0 0.0
      %1642 = vmatpush1.msra.mxu0 0.0
      %1643 = vmatprep.subr.mxu0 0.0
      %1644 = vmatpush1.msra.mxu0 0.0
      %1645 = vmatprep.subr.mxu0 0.0
      %1646 = vmatpush1.msra.mxu0 0.0
      %1647 = vmatprep.subr.mxu0 0.0
      %1648 = vmatpush1.msra.mxu0 0.0
      %1649 = vmatprep.subr.mxu0 0.0
      %1650 = vmatpush1.msra.mxu0 0.0
      %1651 = vmatprep.subr.mxu0 0.0
      %1652 = vmatpush1.msra.mxu0 0.0
      %1653 = vmatprep.subr.mxu0 0.0
      %1654 = vmatpush1.msra.mxu0 0.0
      %1655 = vmatprep.subr.mxu0 0.0
      %1656 = vmatpush1.msra.mxu0 0.0
      %1657 = vmatprep.subr.mxu0 0.0
      %1658 = vmatpush1.msra.mxu0 0.0
      %1659 = vmatprep.subr.mxu0 0.0
      %1660 = vmatpush1.msra.mxu0 0.0
      %1661 = vmatprep.subr.mxu0 0.0
      %1662 = vmatpush1.msra.mxu0 0.0
      %1663 = vmatprep.subr.mxu0 0.0
      %1664 = vmatpush1.msra.mxu0 0.0
      %1665 = vmatprep.subr.mxu0 0.0
      %1666 = vmatpush1.msra.mxu0 0.0
      %1667 = vmatprep.subr.mxu0 0.0
      %1668 = vmatpush1.msra.mxu0 0.0
      %1669 = vmatprep.subr.mxu0 0.0
      %1670 = vmatpush1.msra.mxu0 0.0
      %1671 = vmatprep.subr.mxu0 0.0
      %1672 = vmatpush1.msra.mxu0 0.0
      %1673 = vmatprep.subr.mxu0 0.0
      %1674 = vmatpush1.msra.mxu0 0.0
      %1675 = vmatprep.subr.mxu0 0.0
      %1676 = vmatpush1.msra.mxu0 0.0
      %1677 = vmatprep.subr.mxu0 0.0
      %1678 = vmatpush1.msra.mxu0 0.0
      %1679 = vmatprep.subr.mxu0 0.0
      %1680 = vmatpush1.msra.mxu0 0.0
      %1681 = vmatprep.subr.mxu0 0.0
      %1682 = vmatpush1.msra.mxu0 0.0
      %1683 = vmatprep.mubr.f32.mxu0 0.0
      %1684 = vmatmul.mubr.f32.gmra.mrb[0].mxu0 %v1599
      %v1685 = vpop.f32.mrb[0].mxu0
      %v1686 = vadd.f32 %v1596, %v1685
      %v1687 = vpop.f32.mrb[0].mxu0
      %v1688 = vadd.f32 %v1596, %v1687
      %1689 = vdwg.mxu0
      %1690 = vmatprep.subr.mxu0 %v1565
      %1691 = vmatpush1.msra.mxu0 %v1564
      %1692 = vmatprep.subr.mxu0 %v1571
      %1693 = vmatpush1.msra.mxu0 %v1570
      %1694 = vmatprep.subr.mxu0 %v1577
      %1695 = vmatpush1.msra.mxu0 %v1576
      %1696 = vmatprep.subr.mxu0 %v1583
      %1697 = vmatpush1.msra.mxu0 %v1582
      %1698 = vmatprep.subr.mxu0 %v1611
      %1699 = vmatpush1.msra.mxu0 %v1608
      %1700 = vmatprep.subr.mxu0 0.0
      %1701 = vmatpush1.msra.mxu0 0.0
      %1702 = vmatprep.subr.mxu0 0.0
      %1703 = vmatpush1.msra.mxu0 0.0
      %1704 = vmatprep.subr.mxu0 0.0
      %1705 = vmatpush1.msra.mxu0 0.0
      %1706 = vmatprep.subr.mxu0 0.0
      %1707 = vmatpush1.msra.mxu0 0.0
      %1708 = vmatprep.subr.mxu0 0.0
      %1709 = vmatpush1.msra.mxu0 0.0
      %1710 = vmatprep.subr.mxu0 0.0
      %1711 = vmatpush1.msra.mxu0 0.0
      %1712 = vmatprep.subr.mxu0 0.0
      %1713 = vmatpush1.msra.mxu0 0.0
      %1714 = vmatprep.subr.mxu0 0.0
      %1715 = vmatpush1.msra.mxu0 0.0
      %1716 = vmatprep.subr.mxu0 0.0
      %1717 = vmatpush1.msra.mxu0 0.0
      %1718 = vmatprep.subr.mxu0 0.0
      %1719 = vmatpush1.msra.mxu0 0.0
      %1720 = vmatprep.subr.mxu0 0.0
      %1721 = vmatpush1.msra.mxu0 0.0
      %1722 = vmatprep.subr.mxu0 0.0
      %1723 = vmatpush1.msra.mxu0 0.0
      %1724 = vmatprep.subr.mxu0 0.0
      %1725 = vmatpush1.msra.mxu0 0.0
      %1726 = vmatprep.subr.mxu0 0.0
      %1727 = vmatpush1.msra.mxu0 0.0
      %1728 = vmatprep.subr.mxu0 0.0
      %1729 = vmatpush1.msra.mxu0 0.0
      %1730 = vmatprep.subr.mxu0 0.0
      %1731 = vmatpush1.msra.mxu0 0.0
      %1732 = vmatprep.subr.mxu0 0.0
      %1733 = vmatpush1.msra.mxu0 0.0
      %1734 = vmatprep.subr.mxu0 0.0
      %1735 = vmatpush1.msra.mxu0 0.0
      %1736 = vmatprep.subr.mxu0 0.0
      %1737 = vmatpush1.msra.mxu0 0.0
      %1738 = vmatprep.subr.mxu0 0.0
      %1739 = vmatpush1.msra.mxu0 0.0
      %1740 = vmatprep.subr.mxu0 0.0
      %1741 = vmatpush1.msra.mxu0 0.0
      %1742 = vmatprep.subr.mxu0 0.0
      %1743 = vmatpush1.msra.mxu0 0.0
      %1744 = vmatprep.subr.mxu0 0.0
      %1745 = vmatpush1.msra.mxu0 0.0
      %1746 = vmatprep.subr.mxu0 0.0
      %1747 = vmatpush1.msra.mxu0 0.0
      %1748 = vmatprep.subr.mxu0 0.0
      %1749 = vmatpush1.msra.mxu0 0.0
      %1750 = vmatprep.subr.mxu0 0.0
      %1751 = vmatpush1.msra.mxu0 0.0
      %1752 = vmatprep.subr.mxu0 0.0
      %1753 = vmatpush1.msra.mxu0 0.0
      %1754 = vmatprep.mubr.f32.mxu0 0.0
      %1755 = vmatmul.mubr.f32.gmra.mrb[0].mxu0 %v1599
      %v1756 = vpop.f32.mrb[0].mxu0
      %v1757 = vadd.f32 %v1596, %v1756
      %v1758 = vpop.f32.mrb[0].mxu0
      %v1759 = vadd.f32 %v1596, %v1758
      %1760 = vdwg.mxu0
      %1761 = vmatprep.subr.mxu0 %v1567
      %1762 = vmatpush1.msra.mxu0 %v1566
      %1763 = vmatprep.subr.mxu0 %v1573
      %1764 = vmatpush1.msra.mxu0 %v1572
      %1765 = vmatprep.subr.mxu0 %v1579
      %1766 = vmatpush1.msra.mxu0 %v1578
      %1767 = vmatprep.subr.mxu0 %v1585
      %1768 = vmatpush1.msra.mxu0 %v1584
      %1769 = vmatprep.subr.mxu0 %v1617
      %1770 = vmatpush1.msra.mxu0 %v1614
      %1771 = vmatprep.subr.mxu0 0.0
      %1772 = vmatpush1.msra.mxu0 0.0
      %1773 = vmatprep.subr.mxu0 0.0
      %1774 = vmatpush1.msra.mxu0 0.0
      %1775 = vmatprep.subr.mxu0 0.0
      %1776 = vmatpush1.msra.mxu0 0.0
      %1777 = vmatprep.subr.mxu0 0.0
      %1778 = vmatpush1.msra.mxu0 0.0
      %1779 = vmatprep.subr.mxu0 0.0
      %1780 = vmatpush1.msra.mxu0 0.0
      %1781 = vmatprep.subr.mxu0 0.0
      %1782 = vmatpush1.msra.mxu0 0.0
      %1783 = vmatprep.subr.mxu0 0.0
      %1784 = vmatpush1.msra.mxu0 0.0
      %1785 = vmatprep.subr.mxu0 0.0
      %1786 = vmatpush1.msra.mxu0 0.0
      %1787 = vmatprep.subr.mxu0 0.0
      %1788 = vmatpush1.msra.mxu0 0.0
      %1789 = vmatprep.subr.mxu0 0.0
      %1790 = vmatpush1.msra.mxu0 0.0
      %1791 = vmatprep.subr.mxu0 0.0
      %1792 = vmatpush1.msra.mxu0 0.0
      %1793 = vmatprep.subr.mxu0 0.0
      %1794 = vmatpush1.msra.mxu0 0.0
      %1795 = vmatprep.subr.mxu0 0.0
      %1796 = vmatpush1.msra.mxu0 0.0
      %1797 = vmatprep.subr.mxu0 0.0
      %1798 = vmatpush1.msra.mxu0 0.0
      %1799 = vmatprep.subr.mxu0 0.0
      %1800 = vmatpush1.msra.mxu0 0.0
      %1801 = vmatprep.subr.mxu0 0.0
      %1802 = vmatpush1.msra.mxu0 0.0
      %1803 = vmatprep.subr.mxu0 0.0
      %1804 = vmatpush1.msra.mxu0 0.0
      %1805 = vmatprep.subr.mxu0 0.0
      %1806 = vmatpush1.msra.mxu0 0.0
      %1807 = vmatprep.subr.mxu0 0.0
      %1808 = vmatpush1.msra.mxu0 0.0
      %1809 = vmatprep.subr.mxu0 0.0
      %1810 = vmatpush1.msra.mxu0 0.0
      %1811 = vmatprep.subr.mxu0 0.0
      %1812 = vmatpush1.msra.mxu0 0.0
      %1813 = vmatprep.subr.mxu0 0.0
      %1814 = vmatpush1.msra.mxu0 0.0
      %1815 = vmatprep.subr.mxu0 0.0
      %1816 = vmatpush1.msra.mxu0 0.0
      %1817 = vmatprep.subr.mxu0 0.0
      %1818 = vmatpush1.msra.mxu0 0.0
      %1819 = vmatprep.subr.mxu0 0.0
      %1820 = vmatpush1.msra.mxu0 0.0
      %1821 = vmatprep.subr.mxu0 0.0
      %1822 = vmatpush1.msra.mxu0 0.0
      %1823 = vmatprep.subr.mxu0 0.0
      %1824 = vmatpush1.msra.mxu0 0.0
      %1825 = vmatprep.mubr.f32.mxu0 0.0
      %1826 = vmatmul.mubr.f32.gmra.mrb[0].mxu0 %v1599
      %v1827 = vpop.f32.mrb[0].mxu0
      %v1828 = vadd.f32 %v1596, %v1827
      %v1829 = vpop.f32.mrb[0].mxu0
      %v1830 = vadd.f32 %v1596, %v1829
      %1831 = vdwg.mxu0
      %v1832 = vmax.f32 %v1686, 0.0
      %v1833 = vmax.f32 %v1688, 0.0
      %v1834 = vmax.f32 %v1757, 0.0
      %v1835 = vmax.f32 %v1759, 0.0
      %v1836 = vmax.f32 %v1828, 0.0
      %v1837 = vmax.f32 %v1830, 0.0
      %v1838 = vmul.f32 %v1832, %v1096
      %v1839 = vmul.f32 %v1833, %v1100
      %v1840 = vmul.f32 %v1834, %v1104
      %v1841 = vmul.f32 %v1835, %v1108
      %v1842 = vmul.f32 %v1836, %v1112
      %v1843 = vmul.f32 %v1837, %v1116
      %v1850 = vcombine.low %v1838, %v1839
      %v1851 = vcombine.low %v1840, %v1841
      %v1852 = vcombine.low %v1842, %v1843
      %1853 = vrot.lane.b32.xlu0 %v1850, 4
      %v1854 = vpop.permute.xlu0 %1853
      %1855 = vrot.lane.b32.xlu0 %v1851, 4
      %v1856 = vpop.permute.xlu0 %1855
      %1857 = vrot.lane.b32.xlu0 %v1852, 4
      %v1858 = vpop.permute.xlu0 %1857
      %v1859 = vrot.slane %v1854, 4
      %v1860 = vrot.slane %v1856, 4
      %v1861 = vrot.slane %v1858, 4
      %v1862 = vsel %vm1147, %v1859, %v1854
      %v1863 = vsel %vm854, %v1859, %v1860
      %v1864 = vsel %vm1147, %v1863, %v1856
      %v1865 = vsel %vm854, %v1860, %v1861
      %v1866 = vsel %vm1147, %v1865, %v1858
      %1871 = vst.msk [vmem:[#allocation2 + $0x4] sm:$0xff] %vm1159, %v1862
      %1872 = vst [vmem:[#allocation2 + $0xc] sm:$0xff] %v1864
      %1873 = vst [vmem:[#allocation2 + $0x14] sm:$0xff] %v1866
      %1874 = vst.msk [vmem:[#allocation2 + $0x1c] sm:$0xf] %vm1163, %v1861
      %v1875 = vadd.f32 %v1124, %v1839
      %v1876 = vadd.f32 %v1125, %v1840
      %v1877 = vadd.f32 %v1126, %v1841
      %v1878 = vadd.f32 %v1127, %v1842
      %v1879 = vld [vmem:[#allocation2] sm:$0xff]
      %v1880 = vld [vmem:[#allocation2 + $0x8] sm:$0xff]
      %v1881 = vld [vmem:[#allocation2 + $0x10] sm:$0xff]
      %v1885 = vcombine.high %v1879, %v1879
      %v1886 = vcombine.high %v1880, %v1880
      %v1887 = vcombine.high %v1881, %v1881
      %1891 = vst [vmem:[#allocation3] sm:$0xf] %v1879
      %1892 = vst [vmem:[#allocation3 + $0x8] sm:$0xf] %v1885
      %1893 = vst [vmem:[#allocation3 + $0x10] sm:$0xf] %v1880
      %1894 = vst [vmem:[#allocation3 + $0x18] sm:$0xf] %v1886
      %1895 = vst [vmem:[#allocation3 + $0x20] sm:$0xf] %v1881
      %1896 = vst [vmem:[#allocation3 + $0x28] sm:$0xf] %v1887
      %v1897 = vld [vmem:[#allocation2] sm:$0xff]
      %v1898 = vld [vmem:[#allocation2 + $0x8] sm:$0xff]
      %v1899 = vld [vmem:[#allocation2 + $0x10] sm:$0xff]
      %v1900 = vld [vmem:[#allocation2 + $0x18] sm:$0xf]
      %v1905 = vcombine.low %v1897, %v1897
      %v1906 = vcombine.low %v1898, %v1898
      %v1907 = vcombine.low %v1899, %v1899
      %v1908 = vcombine.low %v1900, %v1900
      %1909 = vrot.lane.b32.xlu0 %v1905, 124
      %v1910 = vpop.permute.xlu0 %1909
      %1911 = vrot.lane.b32.xlu0 %v1897, 124
      %v1912 = vpop.permute.xlu0 %1911
      %1913 = vrot.lane.b32.xlu0 %v1906, 124
      %v1914 = vpop.permute.xlu0 %1913
      %1915 = vrot.lane.b32.xlu0 %v1898, 124
      %v1916 = vpop.permute.xlu0 %1915
      %1917 = vrot.lane.b32.xlu0 %v1907, 124
      %v1918 = vpop.permute.xlu0 %1917
      %1919 = vrot.lane.b32.xlu0 %v1899, 124
      %v1920 = vpop.permute.xlu0 %1919
      %1921 = vrot.lane.b32.xlu0 %v1908, 124
      %v1922 = vpop.permute.xlu0 %1921
      %v1923 = vsel %vm616, %v1910, %v1912
      %v1924 = vsel %vm616, %v1912, %v1914
      %v1925 = vsel %vm616, %v1914, %v1916
      %v1926 = vsel %vm616, %v1916, %v1918
      %v1927 = vsel %vm616, %v1918, %v1920
      %v1928 = vsel %vm616, %v1920, %v1922
      %1935 = vst [vmem:[#allocation3] sm:$0xf0] %v1923
      %1936 = vst [vmem:[#allocation3 + $0x8] sm:$0xf0] %v1924
      %1937 = vst [vmem:[#allocation3 + $0x10] sm:$0xf0] %v1925
      %1938 = vst [vmem:[#allocation3 + $0x18] sm:$0xf0] %v1926
      %1939 = vst [vmem:[#allocation3 + $0x20] sm:$0xf0] %v1927
      %1940 = vst [vmem:[#allocation3 + $0x28] sm:$0xf0] %v1928
      %v1941 = vld [vmem:[#allocation2] sm:$0xff]
      %v1942 = vld [vmem:[#allocation2 + $0x8] sm:$0xff]
      %v1943 = vld [vmem:[#allocation2 + $0x10] sm:$0xff]
      %v1944 = vld [vmem:[#allocation2 + $0x18] sm:$0xf]
      %v1949 = vcombine.high %v1941, %v1941
      %v1950 = vcombine.high %v1942, %v1942
      %v1951 = vcombine.high %v1943, %v1943
      %1952 = vrot.lane.b32.xlu0 %v1941, 120
      %v1953 = vpop.permute.xlu0 %1952
      %1954 = vrot.lane.b32.xlu0 %v1949, 120
      %v1955 = vpop.permute.xlu0 %1954
      %1956 = vrot.lane.b32.xlu0 %v1942, 120
      %v1957 = vpop.permute.xlu0 %1956
      %1958 = vrot.lane.b32.xlu0 %v1950, 120
      %v1959 = vpop.permute.xlu0 %1958
      %1960 = vrot.lane.b32.xlu0 %v1943, 120
      %v1961 = vpop.permute.xlu0 %1960
      %1962 = vrot.lane.b32.xlu0 %v1951, 120
      %v1963 = vpop.permute.xlu0 %1962
      %1964 = vrot.lane.b32.xlu0 %v1944, 120
      %v1965 = vpop.permute.xlu0 %1964
      %vm1966 = vcmask 982016
      %v1967 = vsel %vm1966, %v1953, %v1955
      %v1968 = vsel %vm1966, %v1955, %v1957
      %v1969 = vsel %vm1966, %v1957, %v1959
      %v1970 = vsel %vm1966, %v1959, %v1961
      %v1971 = vsel %vm1966, %v1961, %v1963
      %v1972 = vsel %vm1966, %v1963, %v1965
      %1979 = vst [vmem:[#allocation3 + $0x30] sm:$0xf] %v1967
      %1980 = vst [vmem:[#allocation3 + $0x38] sm:$0xf] %v1968
      %1981 = vst [vmem:[#allocation3 + $0x40] sm:$0xf] %v1969
      %1982 = vst [vmem:[#allocation3 + $0x48] sm:$0xf] %v1970
      %1983 = vst [vmem:[#allocation3 + $0x50] sm:$0xf] %v1971
      %1984 = vst [vmem:[#allocation3 + $0x58] sm:$0xf] %v1972
      %v1985 = vld [vmem:[#allocation2 + $0x4] sm:$0xff]
      %v1986 = vld [vmem:[#allocation2 + $0xc] sm:$0xff]
      %v1987 = vld [vmem:[#allocation2 + $0x14] sm:$0xff]
      %v1991 = vcombine.low %v1985, %v1985
      %v1992 = vcombine.low %v1986, %v1986
      %v1993 = vcombine.low %v1987, %v1987
      %1997 = vst [vmem:[#allocation3 + $0x30] sm:$0xf0] %v1991
      %1998 = vst [vmem:[#allocation3 + $0x38] sm:$0xf0] %v1985
      %1999 = vst [vmem:[#allocation3 + $0x40] sm:$0xf0] %v1992
      %2000 = vst [vmem:[#allocation3 + $0x48] sm:$0xf0] %v1986
      %2001 = vst [vmem:[#allocation3 + $0x50] sm:$0xf0] %v1993
      %2002 = vst [vmem:[#allocation3 + $0x58] sm:$0xf0] %v1987
      %v2003 = vld [vmem:[#allocation2 + $0x4] sm:$0xff]
      %v2004 = vld [vmem:[#allocation2 + $0xc] sm:$0xff]
      %v2005 = vld [vmem:[#allocation2 + $0x14] sm:$0xff]
      %v2006 = vld [vmem:[#allocation2 + $0x1c] sm:$0xf]
      %v2011 = vcombine.high %v2003, %v2003
      %v2012 = vcombine.high %v2004, %v2004
      %v2013 = vcombine.high %v2005, %v2005
      %2014 = vrot.lane.b32.xlu0 %v2003, 124
      %v2015 = vpop.permute.xlu0 %2014
      %2016 = vrot.lane.b32.xlu0 %v2011, 124
      %v2017 = vpop.permute.xlu0 %2016
      %2018 = vrot.lane.b32.xlu0 %v2004, 124
      %v2019 = vpop.permute.xlu0 %2018
      %2020 = vrot.lane.b32.xlu0 %v2012, 124
      %v2021 = vpop.permute.xlu0 %2020
      %2022 = vrot.lane.b32.xlu0 %v2005, 124
      %v2023 = vpop.permute.xlu0 %2022
      %2024 = vrot.lane.b32.xlu0 %v2013, 124
      %v2025 = vpop.permute.xlu0 %2024
      %2026 = vrot.lane.b32.xlu0 %v2006, 124
      %v2027 = vpop.permute.xlu0 %2026
      %v2028 = vsel %vm616, %v2015, %v2017
      %v2029 = vsel %vm616, %v2017, %v2019
      %v2030 = vsel %vm616, %v2019, %v2021
      %v2031 = vsel %vm616, %v2021, %v2023
      %v2032 = vsel %vm616, %v2023, %v2025
      %v2033 = vsel %vm616, %v2025, %v2027
      %2040 = vst [vmem:[#allocation3 + $0x60] sm:$0xf] %v2028
      %2041 = vst [vmem:[#allocation3 + $0x68] sm:$0xf] %v2029
      %2042 = vst [vmem:[#allocation3 + $0x70] sm:$0xf] %v2030
      %2043 = vst [vmem:[#allocation3 + $0x78] sm:$0xf] %v2031
      %2044 = vst [vmem:[#allocation3 + $0x80] sm:$0xf] %v2032
      %2045 = vst [vmem:[#allocation3 + $0x88] sm:$0xf] %v2033
      %v2046 = vld [vmem:[#allocation2 + $0x4] sm:$0xff]
      %v2047 = vld [vmem:[#allocation2 + $0xc] sm:$0xff]
      %v2048 = vld [vmem:[#allocation2 + $0x14] sm:$0xff]
      %v2049 = vld [vmem:[#allocation2 + $0x1c] sm:$0xf]
      %v2054 = vcombine.low %v2046, %v2046
      %v2055 = vcombine.low %v2047, %v2047
      %v2056 = vcombine.low %v2048, %v2048
      %v2057 = vcombine.low %v2049, %v2049
      %2058 = vrot.lane.b32.xlu0 %v2054, 120
      %v2059 = vpop.permute.xlu0 %2058
      %2060 = vrot.lane.b32.xlu0 %v2046, 120
      %v2061 = vpop.permute.xlu0 %2060
      %2062 = vrot.lane.b32.xlu0 %v2055, 120
      %v2063 = vpop.permute.xlu0 %2062
      %2064 = vrot.lane.b32.xlu0 %v2047, 120
      %v2065 = vpop.permute.xlu0 %2064
      %2066 = vrot.lane.b32.xlu0 %v2056, 120
      %v2067 = vpop.permute.xlu0 %2066
      %2068 = vrot.lane.b32.xlu0 %v2048, 120
      %v2069 = vpop.permute.xlu0 %2068
      %2070 = vrot.lane.b32.xlu0 %v2057, 120
      %v2071 = vpop.permute.xlu0 %2070
      %v2072 = vsel %vm1966, %v2059, %v2061
      %v2073 = vsel %vm1966, %v2061, %v2063
      %v2074 = vsel %vm1966, %v2063, %v2065
      %v2075 = vsel %vm1966, %v2065, %v2067
      %v2076 = vsel %vm1966, %v2067, %v2069
      %v2077 = vsel %vm1966, %v2069, %v2071
      %2084 = vst [vmem:[#allocation3 + $0x60] sm:$0xf0] %v2072
      %2085 = vst [vmem:[#allocation3 + $0x68] sm:$0xf0] %v2073
      %2086 = vst [vmem:[#allocation3 + $0x70] sm:$0xf0] %v2074
      %2087 = vst [vmem:[#allocation3 + $0x78] sm:$0xf0] %v2075
      %2088 = vst [vmem:[#allocation3 + $0x80] sm:$0xf0] %v2076
      %2089 = vst [vmem:[#allocation3 + $0x88] sm:$0xf0] %v2077
      %v2090 = vld [vmem:[#allocation2 + $0x8] sm:$0xff]
      %v2091 = vld [vmem:[#allocation2 + $0x10] sm:$0xff]
      %v2092 = vld [vmem:[#allocation2 + $0x18] sm:$0xff]
      %v2096 = vcombine.high %v2090, %v2090
      %v2097 = vcombine.high %v2091, %v2091
      %v2098 = vcombine.high %v2092, %v2092
      %2102 = vst [vmem:[#allocation3 + $0x90] sm:$0xf] %v2090
      %2103 = vst [vmem:[#allocation3 + $0x98] sm:$0xf] %v2096
      %2104 = vst [vmem:[#allocation3 + $0xa0] sm:$0xf] %v2091
      %2105 = vst [vmem:[#allocation3 + $0xa8] sm:$0xf] %v2097
      %2106 = vst [vmem:[#allocation3 + $0xb0] sm:$0xf] %v2092
      %2107 = vst [vmem:[#allocation3 + $0xb8] sm:$0xf] %v2098
      %v2108 = vld [vmem:[#allocation2 + $0x8] sm:$0xff]
      %v2109 = vld [vmem:[#allocation2 + $0x10] sm:$0xff]
      %v2110 = vld [vmem:[#allocation2 + $0x18] sm:$0xff]
      %v2111 = vld [vmem:[#allocation2 + $0x20] sm:$0xf]
      %v2116 = vcombine.low %v2108, %v2108
      %v2117 = vcombine.low %v2109, %v2109
      %v2118 = vcombine.low %v2110, %v2110
      %v2119 = vcombine.low %v2111, %v2111
      %2120 = vrot.lane.b32.xlu0 %v2116, 124
      %v2121 = vpop.permute.xlu0 %2120
      %2122 = vrot.lane.b32.xlu0 %v2108, 124
      %v2123 = vpop.permute.xlu0 %2122
      %2124 = vrot.lane.b32.xlu0 %v2117, 124
      %v2125 = vpop.permute.xlu0 %2124
      %2126 = vrot.lane.b32.xlu0 %v2109, 124
      %v2127 = vpop.permute.xlu0 %2126
      %2128 = vrot.lane.b32.xlu0 %v2118, 124
      %v2129 = vpop.permute.xlu0 %2128
      %2130 = vrot.lane.b32.xlu0 %v2110, 124
      %v2131 = vpop.permute.xlu0 %2130
      %2132 = vrot.lane.b32.xlu0 %v2119, 124
      %v2133 = vpop.permute.xlu0 %2132
      %v2134 = vsel %vm616, %v2121, %v2123
      %v2135 = vsel %vm616, %v2123, %v2125
      %v2136 = vsel %vm616, %v2125, %v2127
      %v2137 = vsel %vm616, %v2127, %v2129
      %v2138 = vsel %vm616, %v2129, %v2131
      %v2139 = vsel %vm616, %v2131, %v2133
      %2146 = vst [vmem:[#allocation3 + $0x90] sm:$0xf0] %v2134
      %2147 = vst [vmem:[#allocation3 + $0x98] sm:$0xf0] %v2135
      %2148 = vst [vmem:[#allocation3 + $0xa0] sm:$0xf0] %v2136
      %2149 = vst [vmem:[#allocation3 + $0xa8] sm:$0xf0] %v2137
      %2150 = vst [vmem:[#allocation3 + $0xb0] sm:$0xf0] %v2138
      %2151 = vst [vmem:[#allocation3 + $0xb8] sm:$0xf0] %v2139
      %v2152 = vld [vmem:[#allocation2 + $0x8] sm:$0xff]
      %v2153 = vld [vmem:[#allocation2 + $0x10] sm:$0xff]
      %v2154 = vld [vmem:[#allocation2 + $0x18] sm:$0xff]
      %v2155 = vld [vmem:[#allocation2 + $0x20] sm:$0xf]
      %v2160 = vcombine.high %v2152, %v2152
      %v2161 = vcombine.high %v2153, %v2153
      %v2162 = vcombine.high %v2154, %v2154
      %2163 = vrot.lane.b32.xlu0 %v2152, 120
      %v2164 = vpop.permute.xlu0 %2163
      %2165 = vrot.lane.b32.xlu0 %v2160, 120
      %v2166 = vpop.permute.xlu0 %2165
      %2167 = vrot.lane.b32.xlu0 %v2153, 120
      %v2168 = vpop.permute.xlu0 %2167
      %2169 = vrot.lane.b32.xlu0 %v2161, 120
      %v2170 = vpop.permute.xlu0 %2169
      %2171 = vrot.lane.b32.xlu0 %v2154, 120
      %v2172 = vpop.permute.xlu0 %2171
      %2173 = vrot.lane.b32.xlu0 %v2162, 120
      %v2174 = vpop.permute.xlu0 %2173
      %2175 = vrot.lane.b32.xlu0 %v2155, 120
      %v2176 = vpop.permute.xlu0 %2175
      %v2177 = vsel %vm1966, %v2164, %v2166
      %v2178 = vsel %vm1966, %v2166, %v2168
      %v2179 = vsel %vm1966, %v2168, %v2170
      %v2180 = vsel %vm1966, %v2170, %v2172
      %v2181 = vsel %vm1966, %v2172, %v2174
      %v2182 = vsel %vm1966, %v2174, %v2176
      %2189 = vst [vmem:[#allocation3 + $0xc0] sm:$0xf] %v2177
      %2190 = vst [vmem:[#allocation3 + $0xc8] sm:$0xf] %v2178
      %2191 = vst [vmem:[#allocation3 + $0xd0] sm:$0xf] %v2179
      %2192 = vst [vmem:[#allocation3 + $0xd8] sm:$0xf] %v2180
      %2193 = vst [vmem:[#allocation3 + $0xe0] sm:$0xf] %v2181
      %2194 = vst [vmem:[#allocation3 + $0xe8] sm:$0xf] %v2182
      %v2195 = vld [vmem:[%s6] sm:$0xf]
      %v2196 = vld [vmem:[#allocation3] sm:$0xff]
      %v2197 = vld [vmem:[#allocation3 + $0x8] sm:$0xff]
      %v2198 = vld [vmem:[#allocation3 + $0x10] sm:$0xff]
      %v2199 = vld [vmem:[#allocation3 + $0x18] sm:$0xff]
      %v2200 = vld [vmem:[#allocation3 + $0x20] sm:$0xff]
      %v2201 = vld [vmem:[#allocation3 + $0x28] sm:$0xff]
      %v2202 = vld [vmem:[#allocation3 + $0x30] sm:$0xff]
      %v2203 = vld [vmem:[#allocation3 + $0x38] sm:$0xff]
      %v2204 = vld [vmem:[#allocation3 + $0x40] sm:$0xff]
      %v2205 = vld [vmem:[#allocation3 + $0x48] sm:$0xff]
      %v2206 = vld [vmem:[#allocation3 + $0x50] sm:$0xff]
      %v2207 = vld [vmem:[#allocation3 + $0x58] sm:$0xff]
      %v2208 = vld [vmem:[#allocation3 + $0x60] sm:$0xff]
      %v2209 = vld [vmem:[#allocation3 + $0x68] sm:$0xff]
      %v2210 = vld [vmem:[#allocation3 + $0x70] sm:$0xff]
      %v2211 = vld [vmem:[#allocation3 + $0x78] sm:$0xff]
      %v2212 = vld [vmem:[#allocation3 + $0x80] sm:$0xff]
      %v2213 = vld [vmem:[#allocation3 + $0x88] sm:$0xff]
      %v2214 = vld [vmem:[#allocation3 + $0x90] sm:$0xff]
      %v2215 = vld [vmem:[#allocation3 + $0x98] sm:$0xff]
      %v2216 = vld [vmem:[#allocation3 + $0xa0] sm:$0xff]
      %v2217 = vld [vmem:[#allocation3 + $0xa8] sm:$0xff]
      %v2218 = vld [vmem:[#allocation3 + $0xb0] sm:$0xff]
      %v2219 = vld [vmem:[#allocation3 + $0xb8] sm:$0xff]
      %v2220 = vld [vmem:[#allocation3 + $0xc0] sm:$0xf]
      %v2221 = vld [vmem:[#allocation3 + $0xc8] sm:$0xf]
      %v2222 = vld [vmem:[#allocation3 + $0xd0] sm:$0xf]
      %v2223 = vld [vmem:[#allocation3 + $0xd8] sm:$0xf]
      %v2224 = vld [vmem:[#allocation3 + $0xe0] sm:$0xf]
      %v2225 = vld [vmem:[#allocation3 + $0xe8] sm:$0xf]
      %v2226 = vld [vmem:[%s7] sm:$0xf]
      %2228 = vset.pattern.permute.xlu0 0
      %2229 = vperm.xlu0 %2228, %v2226
      %v2230 = vpop.permute.xlu0 %2229
      %v2233 = vsel %vm850, %v2195, 0
      %v2236 = vsel %vm854, %v2220, 0
      %v2239 = vsel %vm854, %v2221, 0
      %v2242 = vsel %vm854, %v2222, 0
      %v2245 = vsel %vm854, %v2223, 0
      %v2248 = vsel %vm854, %v2224, 0
      %v2251 = vsel %vm854, %v2225, 0
      %2253 = vmatprep.subr.mxu0 %v2197
      %2254 = vmatpush1.msra.mxu0 %v2196
      %2255 = vmatprep.subr.mxu0 %v2203
      %2256 = vmatpush1.msra.mxu0 %v2202
      %2257 = vmatprep.subr.mxu0 %v2209
      %2258 = vmatpush1.msra.mxu0 %v2208
      %2259 = vmatprep.subr.mxu0 %v2215
      %2260 = vmatpush1.msra.mxu0 %v2214
      %2261 = vmatprep.subr.mxu0 %v2239
      %2262 = vmatpush1.msra.mxu0 %v2236
      %2263 = vmatprep.subr.mxu0 0.0
      %2264 = vmatpush1.msra.mxu0 0.0
      %2265 = vmatprep.subr.mxu0 0.0
      %2266 = vmatpush1.msra.mxu0 0.0
      %2267 = vmatprep.subr.mxu0 0.0
      %2268 = vmatpush1.msra.mxu0 0.0
      %2269 = vmatprep.subr.mxu0 0.0
      %2270 = vmatpush1.msra.mxu0 0.0
      %2271 = vmatprep.subr.mxu0 0.0
      %2272 = vmatpush1.msra.mxu0 0.0
      %2273 = vmatprep.subr.mxu0 0.0
      %2274 = vmatpush1.msra.mxu0 0.0
      %2275 = vmatprep.subr.mxu0 0.0
      %2276 = vmatpush1.msra.mxu0 0.0
      %2277 = vmatprep.subr.mxu0 0.0
      %2278 = vmatpush1.msra.mxu0 0.0
      %2279 = vmatprep.subr.mxu0 0.0
      %2280 = vmatpush1.msra.mxu0 0.0
      %2281 = vmatprep.subr.mxu0 0.0
      %2282 = vmatpush1.msra.mxu0 0.0
      %2283 = vmatprep.subr.mxu0 0.0
      %2284 = vmatpush1.msra.mxu0 0.0
      %2285 = vmatprep.subr.mxu0 0.0
      %2286 = vmatpush1.msra.mxu0 0.0
      %2287 = vmatprep.subr.mxu0 0.0
      %2288 = vmatpush1.msra.mxu0 0.0
      %2289 = vmatprep.subr.mxu0 0.0
      %2290 = vmatpush1.msra.mxu0 0.0
      %2291 = vmatprep.subr.mxu0 0.0
      %2292 = vmatpush1.msra.mxu0 0.0
      %2293 = vmatprep.subr.mxu0 0.0
      %2294 = vmatpush1.msra.mxu0 0.0
      %2295 = vmatprep.subr.mxu0 0.0
      %2296 = vmatpush1.msra.mxu0 0.0
      %2297 = vmatprep.subr.mxu0 0.0
      %2298 = vmatpush1.msra.mxu0 0.0
      %2299 = vmatprep.subr.mxu0 0.0
      %2300 = vmatpush1.msra.mxu0 0.0
      %2301 = vmatprep.subr.mxu0 0.0
      %2302 = vmatpush1.msra.mxu0 0.0
      %2303 = vmatprep.subr.mxu0 0.0
      %2304 = vmatpush1.msra.mxu0 0.0
      %2305 = vmatprep.subr.mxu0 0.0
      %2306 = vmatpush1.msra.mxu0 0.0
      %2307 = vmatprep.subr.mxu0 0.0
      %2308 = vmatpush1.msra.mxu0 0.0
      %2309 = vmatprep.subr.mxu0 0.0
      %2310 = vmatpush1.msra.mxu0 0.0
      %2311 = vmatprep.subr.mxu0 0.0
      %2312 = vmatpush1.msra.mxu0 0.0
      %2313 = vmatprep.subr.mxu0 0.0
      %2314 = vmatpush1.msra.mxu0 0.0
      %2315 = vmatprep.subr.mxu0 0.0
      %2316 = vmatpush1.msra.mxu0 0.0
      %2317 = vmatprep.mubr.f32.mxu0 0.0
      %2318 = vmatmul.mubr.f32.gmra.mrb[0].mxu0 %v2233
      %v2319 = vpop.f32.mrb[0].mxu0
      %v2320 = vpop.f32.mrb[0].mxu0
      %v2321 = vadd.f32 %v2230, %v2320
      %2322 = vdwg.mxu0
      %2323 = vmatprep.subr.mxu0 %v2199
      %2324 = vmatpush1.msra.mxu0 %v2198
      %2325 = vmatprep.subr.mxu0 %v2205
      %2326 = vmatpush1.msra.mxu0 %v2204
      %2327 = vmatprep.subr.mxu0 %v2211
      %2328 = vmatpush1.msra.mxu0 %v2210
      %2329 = vmatprep.subr.mxu0 %v2217
      %2330 = vmatpush1.msra.mxu0 %v2216
      %2331 = vmatprep.subr.mxu0 %v2245
      %2332 = vmatpush1.msra.mxu0 %v2242
      %2333 = vmatprep.subr.mxu0 0.0
      %2334 = vmatpush1.msra.mxu0 0.0
      %2335 = vmatprep.subr.mxu0 0.0
      %2336 = vmatpush1.msra.mxu0 0.0
      %2337 = vmatprep.subr.mxu0 0.0
      %2338 = vmatpush1.msra.mxu0 0.0
      %2339 = vmatprep.subr.mxu0 0.0
      %2340 = vmatpush1.msra.mxu0 0.0
      %2341 = vmatprep.subr.mxu0 0.0
      %2342 = vmatpush1.msra.mxu0 0.0
      %2343 = vmatprep.subr.mxu0 0.0
      %2344 = vmatpush1.msra.mxu0 0.0
      %2345 = vmatprep.subr.mxu0 0.0
      %2346 = vmatpush1.msra.mxu0 0.0
      %2347 = vmatprep.subr.mxu0 0.0
      %2348 = vmatpush1.msra.mxu0 0.0
      %2349 = vmatprep.subr.mxu0 0.0
      %2350 = vmatpush1.msra.mxu0 0.0
      %2351 = vmatprep.subr.mxu0 0.0
      %2352 = vmatpush1.msra.mxu0 0.0
      %2353 = vmatprep.subr.mxu0 0.0
      %2354 = vmatpush1.msra.mxu0 0.0
      %2355 = vmatprep.subr.mxu0 0.0
      %2356 = vmatpush1.msra.mxu0 0.0
      %2357 = vmatprep.subr.mxu0 0.0
      %2358 = vmatpush1.msra.mxu0 0.0
      %2359 = vmatprep.subr.mxu0 0.0
      %2360 = vmatpush1.msra.mxu0 0.0
      %2361 = vmatprep.subr.mxu0 0.0
      %2362 = vmatpush1.msra.mxu0 0.0
      %2363 = vmatprep.subr.mxu0 0.0
      %2364 = vmatpush1.msra.mxu0 0.0
      %2365 = vmatprep.subr.mxu0 0.0
      %2366 = vmatpush1.msra.mxu0 0.0
      %2367 = vmatprep.subr.mxu0 0.0
      %2368 = vmatpush1.msra.mxu0 0.0
      %2369 = vmatprep.subr.mxu0 0.0
      %2370 = vmatpush1.msra.mxu0 0.0
      %2371 = vmatprep.subr.mxu0 0.0
      %2372 = vmatpush1.msra.mxu0 0.0
      %2373 = vmatprep.subr.mxu0 0.0
      %2374 = vmatpush1.msra.mxu0 0.0
      %2375 = vmatprep.subr.mxu0 0.0
      %2376 = vmatpush1.msra.mxu0 0.0
      %2377 = vmatprep.subr.mxu0 0.0
      %2378 = vmatpush1.msra.mxu0 0.0
      %2379 = vmatprep.subr.mxu0 0.0
      %2380 = vmatpush1.msra.mxu0 0.0
      %2381 = vmatprep.subr.mxu0 0.0
      %2382 = vmatpush1.msra.mxu0 0.0
      %2383 = vmatprep.subr.mxu0 0.0
      %2384 = vmatpush1.msra.mxu0 0.0
      %2385 = vmatprep.subr.mxu0 0.0
      %2386 = vmatpush1.msra.mxu0 0.0
      %2387 = vmatprep.mubr.f32.mxu0 0.0
      %2388 = vmatmul.mubr.f32.gmra.mrb[0].mxu0 %v2233
      %v2389 = vpop.f32.mrb[0].mxu0
      %v2390 = vadd.f32 %v2230, %v2389
      %v2391 = vpop.f32.mrb[0].mxu0
      %v2392 = vadd.f32 %v2230, %v2391
      %2393 = vdwg.mxu0
      %2394 = vmatprep.subr.mxu0 %v2201
      %2395 = vmatpush1.msra.mxu0 %v2200
      %2396 = vmatprep.subr.mxu0 %v2207
      %2397 = vmatpush1.msra.mxu0 %v2206
      %2398 = vmatprep.subr.mxu0 %v2213
      %2399 = vmatpush1.msra.mxu0 %v2212
      %2400 = vmatprep.subr.mxu0 %v2219
      %2401 = vmatpush1.msra.mxu0 %v2218
      %2402 = vmatprep.subr.mxu0 %v2251
      %2403 = vmatpush1.msra.mxu0 %v2248
      %2404 = vmatprep.subr.mxu0 0.0
      %2405 = vmatpush1.msra.mxu0 0.0
      %2406 = vmatprep.subr.mxu0 0.0
      %2407 = vmatpush1.msra.mxu0 0.0
      %2408 = vmatprep.subr.mxu0 0.0
      %2409 = vmatpush1.msra.mxu0 0.0
      %2410 = vmatprep.subr.mxu0 0.0
      %2411 = vmatpush1.msra.mxu0 0.0
      %2412 = vmatprep.subr.mxu0 0.0
      %2413 = vmatpush1.msra.mxu0 0.0
      %2414 = vmatprep.subr.mxu0 0.0
      %2415 = vmatpush1.msra.mxu0 0.0
      %2416 = vmatprep.subr.mxu0 0.0
      %2417 = vmatpush1.msra.mxu0 0.0
      %2418 = vmatprep.subr.mxu0 0.0
      %2419 = vmatpush1.msra.mxu0 0.0
      %2420 = vmatprep.subr.mxu0 0.0
      %2421 = vmatpush1.msra.mxu0 0.0
      %2422 = vmatprep.subr.mxu0 0.0
      %2423 = vmatpush1.msra.mxu0 0.0
      %2424 = vmatprep.subr.mxu0 0.0
      %2425 = vmatpush1.msra.mxu0 0.0
      %2426 = vmatprep.subr.mxu0 0.0
      %2427 = vmatpush1.msra.mxu0 0.0
      %2428 = vmatprep.subr.mxu0 0.0
      %2429 = vmatpush1.msra.mxu0 0.0
      %2430 = vmatprep.subr.mxu0 0.0
      %2431 = vmatpush1.msra.mxu0 0.0
      %2432 = vmatprep.subr.mxu0 0.0
      %2433 = vmatpush1.msra.mxu0 0.0
      %2434 = vmatprep.subr.mxu0 0.0
      %2435 = vmatpush1.msra.mxu0 0.0
      %2436 = vmatprep.subr.mxu0 0.0
      %2437 = vmatpush1.msra.mxu0 0.0
      %2438 = vmatprep.subr.mxu0 0.0
      %2439 = vmatpush1.msra.mxu0 0.0
      %2440 = vmatprep.subr.mxu0 0.0
      %2441 = vmatpush1.msra.mxu0 0.0
      %2442 = vmatprep.subr.mxu0 0.0
      %2443 = vmatpush1.msra.mxu0 0.0
      %2444 = vmatprep.subr.mxu0 0.0
      %2445 = vmatpush1.msra.mxu0 0.0
      %2446 = vmatprep.subr.mxu0 0.0
      %2447 = vmatpush1.msra.mxu0 0.0
      %2448 = vmatprep.subr.mxu0 0.0
      %2449 = vmatpush1.msra.mxu0 0.0
      %2450 = vmatprep.subr.mxu0 0.0
      %2451 = vmatpush1.msra.mxu0 0.0
      %2452 = vmatprep.subr.mxu0 0.0
      %2453 = vmatpush1.msra.mxu0 0.0
      %2454 = vmatprep.subr.mxu0 0.0
      %2455 = vmatpush1.msra.mxu0 0.0
      %2456 = vmatprep.subr.mxu0 0.0
      %2457 = vmatpush1.msra.mxu0 0.0
      %2458 = vmatprep.mubr.f32.mxu0 0.0
      %2459 = vmatmul.mubr.f32.gmra.mrb[0].mxu0 %v2233
      %v2460 = vpop.f32.mrb[0].mxu0
      %v2461 = vadd.f32 %v2230, %v2460
      %v2462 = vpop.f32.mrb[0].mxu0
      %2463 = vdwg.mxu0
      %v2464 = vmax.f32 %v2321, 0.0
      %v2465 = vmax.f32 %v2390, 0.0
      %v2466 = vmax.f32 %v2392, 0.0
      %v2467 = vmax.f32 %v2461, 0.0
      %v2468 = vadd.f32 %v1875, %v2464
      %v2469 = vadd.f32 %v1876, %v2465
      %v2470 = vadd.f32 %v1877, %v2466
      %v2471 = vadd.f32 %v1878, %v2467
      %2473 = vrot.lane.b32.xlu0 %v2468, 124
      %v2474 = vpop.permute.xlu0 %2473
      %vm2476 = vcmask 125952
      %2477 = vst.msk [vmem:[%s305] sm:$0xf] %vm2476, %v2474
      %2478 = vrot.lane.b32.xlu0 %v2468, 108
      %v2479 = vpop.permute.xlu0 %2478
      %vm2481 = vcmask 257152
      %2482 = vst.msk [vmem:[%s305] sm:$0xf] %vm2481, %v2479
      %2483 = vrot.lane.b32.xlu0 %v2468, 92
      %v2484 = vpop.permute.xlu0 %2483
      %vm2486 = vcmask 388352
      %2487 = vst.msk [vmem:[%s305] sm:$0xf] %vm2486, %v2484
      %2488 = vrot.lane.b32.xlu0 %v2468, 76
      %v2489 = vpop.permute.xlu0 %2488
      %vm2491 = vcmask 519552
      %2492 = vst.msk [vmem:[%s305] sm:$0xf] %vm2491, %v2489
      %2494 = vrot.lane.b32.xlu0 %v2469, 60
      %v2495 = vpop.permute.xlu0 %2494
      %vm2497 = vcmask 650752
      %2498 = vst.msk [vmem:[%s305] sm:$0xf] %vm2497, %v2495
      %2499 = vrot.lane.b32.xlu0 %v2469, 44
      %v2500 = vpop.permute.xlu0 %2499
      %vm2502 = vcmask 781952
      %2503 = vst.msk [vmem:[%s305] sm:$0xf] %vm2502, %v2500
      %2504 = vrot.lane.b32.xlu0 %v2469, 28
      %v2505 = vpop.permute.xlu0 %2504
      %vm2507 = vcmask 913152
      %2508 = vst.msk [vmem:[%s305] sm:$0xf] %vm2507, %v2505
      %2509 = vrot.lane.b32.xlu0 %v2469, 12
      %v2510 = vpop.permute.xlu0 %2509
      %vm2512 = vcmask 1044352
      %2513 = vst.msk [vmem:[%s305] sm:$0xf] %vm2512, %v2510
      %2515 = vrot.lane.b32.xlu0 %v2470, 124
      %v2516 = vpop.permute.xlu0 %2515
      %2518 = vst.msk [vmem:[%s305 + $0x4] sm:$0xf] %vm2476, %v2516
      %2519 = vrot.lane.b32.xlu0 %v2470, 108
      %v2520 = vpop.permute.xlu0 %2519
      %2522 = vst.msk [vmem:[%s305 + $0x4] sm:$0xf] %vm2481, %v2520
      %2523 = vrot.lane.b32.xlu0 %v2470, 92
      %v2524 = vpop.permute.xlu0 %2523
      %2526 = vst.msk [vmem:[%s305 + $0x4] sm:$0xf] %vm2486, %v2524
      %2527 = vrot.lane.b32.xlu0 %v2470, 76
      %v2528 = vpop.permute.xlu0 %2527
      %2530 = vst.msk [vmem:[%s305 + $0x4] sm:$0xf] %vm2491, %v2528
      %2532 = vrot.lane.b32.xlu0 %v2471, 60
      %v2533 = vpop.permute.xlu0 %2532
      %2535 = vst.msk [vmem:[%s305 + $0x4] sm:$0xf] %vm2497, %v2533
      %2536 = vrot.lane.b32.xlu0 %v2471, 44
      %v2537 = vpop.permute.xlu0 %2536
      %2539 = vst.msk [vmem:[%s305 + $0x4] sm:$0xf] %vm2502, %v2537
      %2540 = vrot.lane.b32.xlu0 %v2471, 28
      %v2541 = vpop.permute.xlu0 %2540
      %2543 = vst.msk [vmem:[%s305 + $0x4] sm:$0xf] %vm2507, %v2541
      %2544 = vrot.lane.b32.xlu0 %v2471, 12
      %v2545 = vpop.permute.xlu0 %2544
      %2547 = vst.msk [vmem:[%s305 + $0x4] sm:$0xf] %vm2512, %v2545
      %p2548 = scmp.lt.s32.totalorder %s19, 1
      %s2549 = scalar_select %p2548, %s19, 1
      %s2550 = smul.addr %s2549, 2
      %s2551 = smul.addr %s2550, 4
      %s2552 = scalar_lea.vmem %s8, %s2551
      // Predicated region
      $region53: #{dblock_forward.1} parent=51 // pred_check
        %p2553 = pneg %p210
      $region54: #{dblock_forward.1} parent=51 // pred_check_branch
        %2555 = sbr.rel (%p2553) target = $region56
      $region55: #{dblock_forward.1} parent=51 // pred_region
        _
      $region56: #{dblock_forward.1} parent=51 // pred_fallthru
        _
    $region52: #{dblock_forward.1} parent=5 // pred_fallthru
      _
    %p2556 = scmp.le.s32.totalorder 2, %s14
    // Predicated region
    $region57: #{dblock_forward.1} parent=5 // pred_check
      %p2557 = pneg %p2556
    $region58: #{dblock_forward.1} parent=5 // pred_check_branch
      %2559 = sbr.rel (%p2557) target = $region60
    $region59: #{dblock_forward.1} parent=5 // pred_region
      %s2560 = ssub.s32 %s14, 2
      // Predicated region
      $region61: #{dblock_forward.1} parent=59 // pred_check
        %p2561 = pneg %p216
      $region62: #{dblock_forward.1} parent=59 // pred_check_branch
        %2563 = sbr.rel (%p2561) target = $region64
      $region63: #{dblock_forward.1} parent=59 // pred_region
        %p2564 = scmp.lt.s32.totalorder %s20, 1
        %s2565 = scalar_select %p2564, %s20, 1
        %s2566 = smul.addr %s2565, 2
        %s2567 = smul.addr %s2566, 4
        %s2568 = scalar_lea.vmem %s8, %s2567
      $region64: #{dblock_forward.1} parent=59 // pred_fallthru
        _
    $region60: #{dblock_forward.1} parent=5 // pred_fallthru
      _
  $region6: #{dblock_forward.1} parent=0 // loop_footer
    %s18 = sadd.s32 1, %s14
  $region7: #{dblock_forward.1} parent=0 // loop_footer_branch
    %13 = sbr.rel target = $region3
  $region8: #{dblock_forward.1} parent=0 // loop_exit
    _

</llo_original>
